<compile_context>
chip_gen: v7x
topology: tpu7x:2x2x1
jax: 0.10.0
libtpu: 0.0.40
codegen_flags: <defaults>
</compile_context>

<pallas_src>
import functools

import jax
import jax.numpy as jnp
from jax.experimental import pallas as pl
from jax.experimental.pallas import tpu as pltpu

# --- xrv.datasets.default_pathologies (defines the 'Lung Opacity' index) ---------------------
DEFAULT_PATHOLOGIES = [
    "Atelectasis", "Consolidation", "Infiltration", "Pneumothorax", "Edema",
    "Emphysema", "Fibrosis", "Effusion", "Pneumonia", "Pleural_Thickening",
    "Cardiomegaly", "Nodule", "Mass", "Hernia", "Lung Lesion", "Fracture",
    "Lung Opacity", "Enlarged Cardiomediastinum",
]
NUM_CLASSES = len(DEFAULT_PATHOLOGIES)                         # 18
LUNG_OPACITY_IDX = DEFAULT_PATHOLOGIES.index("Lung Opacity")   # 16

THETA_GE = (0.8705248236656189, 3.4137437)   # slope, bias (geographic extent)
THETA_OP = (0.5484423041343689, 2.5535977)   # slope, bias (opacity)

# --- scaled-down DenseNet config (DenseNet-121 structure, fewer layers/channels) --------------
IN_CH = 1
INIT_FEATURES = 16
GROWTH = 8
BN_SIZE = 4
BLOCK_CONFIG = (2, 2)
BN_EPS = 1e-5

VMEM_LIMIT = 32 * 1024 * 1024      # fits scoped VMEM on v5e/v6e/v7x
MATMUL_TILE_M = 256                # MXU-native M tile for v6e/v7x (use 128 on v5e)
POOL_TILE_M = 512


# ======================= Pallas kernels =======================

def _fused_mm_kernel(*refs, pre, post):
    """(tile_m, K) @ (K, N) with optional fused BN+ReLU prologue / epilogue.

    ref order: a, b, [pre_scale, pre_shift], [post_scale, post_shift], out.
    a/b are bf16 (MXU-native), BN math in f32, f32 accumulation, bf16 store.
    """
    a_ref, b_ref = refs[0], refs[1]
    o_ref = refs[-1]
    k = 2
    if pre:
        a = refs[k][...] * a_ref[...].astype(jnp.float32) + refs[k + 1][...]
        a = jnp.maximum(a, 0.0).astype(jnp.bfloat16)
        k += 2
    else:
        a = a_ref[...]
    y = jnp.dot(a, b_ref[...], preferred_element_type=jnp.float32)
    if post:
        y = jnp.maximum(y * refs[k][...] + refs[k + 1][...], 0.0)
        k += 2
    o_ref[...] = y.astype(o_ref.dtype)


def _pool_kernel(*refs, mode, inv):
    """Reduce k*k shifted window views (each (tile_m, C)) with a max / mean tree."""
    o_ref = refs[-1]
    ins = refs[:-1]
    acc = ins[0][...].astype(jnp.float32)
    if mode == "max":
        for r in ins[1:]:
            acc = jnp.maximum(acc, r[...].astype(jnp.float32))
    else:
        for r in ins[1:]:
            acc = acc + r[...].astype(jnp.float32)
        acc = acc * inv
    o_ref[...] = acc.astype(o_ref.dtype)


def _tail_kernel(x_ref, sc_ref, sh_ref, w_ref, b_ref, preds_ref, sev_ref):
    """norm5+ReLU -> global avg pool -> classifier -> severity head, in one kernel."""
    x = x_ref[...].astype(jnp.float32)                       # (N, HW, C)
    x = jnp.maximum(x * sc_ref[...] + sh_ref[...], 0.0)      # BN(norm5) + ReLU
    pooled = jnp.mean(x, axis=1)                             # adaptive_avg_pool2d((1,1)) + flatten
    preds = jnp.dot(pooled, w_ref[...],
                    preferred_element_type=jnp.float32) + b_ref[...]   # (N, 18)
    preds_ref[...] = preds
    # preds_all[0, LUNG_OPACITY_IDX] selected with a one-hot mask (no scalar VMEM extract).
    row = preds[0:1, :]
    idx = jax.lax.broadcasted_iota(jnp.int32, row.shape, 1)
    p = jnp.sum(jnp.where(idx == LUNG_OPACITY_IDX, row, 0.0), axis=1, keepdims=True)
    ge = jnp.clip(p * THETA_GE[0] + THETA_GE[1], 0.0, 8.0)
    op = jnp.clip(p * THETA_OP[0] + THETA_OP[1], 0.0, 6.0)
    sev_ref[...] = jnp.concatenate([ge, op], axis=1)         # (1, 2)


# ======================= wrappers =======================

def _bn_scale_shift(bn_params):
    gamma, beta, mean, var = bn_params
    scale = gamma * jax.lax.rsqrt(var + BN_EPS)
    shift = beta - mean * scale
    return scale, shift


def fused_matmul(a, b, pre=None, post=None, tile_m=MATMUL_TILE_M, out_dtype=jnp.bfloat16):
    """(M, K) @ (K, N) with optional fused BN+ReLU prologue/epilogue. Tiled over M."""
    M, K = a.shape
    _, N = b.shape
    if M <= tile_m:
        tile_m = M                              # block == full dim (always legal)
    grid = (pl.cdiv(M, tile_m),)

    in_specs = [pl.BlockSpec((tile_m, K), lambda i: (i, 0)),
                pl.BlockSpec((K, N), lambda i: (0, 0))]
    operands = [a.astype(jnp.bfloat16), b.astype(jnp.bfloat16)]
    if pre is not None:
        sc, sh = pre
        in_specs += [pl.BlockSpec((1, K), lambda i: (0, 0)),
                     pl.BlockSpec((1, K), lambda i: (0, 0))]
        operands += [sc.reshape(1, K).astype(jnp.float32),
                     sh.reshape(1, K).astype(jnp.float32)]
    if post is not None:
        sc, sh = post
        in_specs += [pl.BlockSpec((1, N), lambda i: (0, 0)),
                     pl.BlockSpec((1, N), lambda i: (0, 0))]
        operands += [sc.reshape(1, N).astype(jnp.float32),
                     sh.reshape(1, N).astype(jnp.float32)]

    kernel = functools.partial(_fused_mm_kernel, pre=pre is not None, post=post is not None)
    return pl.pallas_call(
        kernel,
        out_shape=jax.ShapeDtypeStruct((M, N), out_dtype),
        grid=grid,
        in_specs=in_specs,
        out_specs=pl.BlockSpec((tile_m, N), lambda i: (i, 0)),
        compiler_params=pltpu.CompilerParams(
            dimension_semantics=("parallel",), vmem_limit_bytes=VMEM_LIMIT),
    )(*operands)


def _extract_windows(x, kh, kw, stride, pad, pad_value):
    """Return list of kh*kw shifted views (N, OH, OW, C) — pure indexing glue."""
    n, h, w, c = x.shape
    xp = jnp.pad(x, ((0, 0), (pad, pad), (pad, pad), (0, 0)),
                 constant_values=pad_value) if pad > 0 else x
    oh = (h + 2 * pad - kh) // stride + 1
    ow = (w + 2 * pad - kw) // stride + 1
    wins = []
    for i in range(kh):
        for j in range(kw):
            wins.append(xp[:, i:i + stride * oh:stride, j:j + stride * ow:stride, :])
    return wins, oh, ow


def conv2d(x, w_mat, kh, kw, stride, pad, pre=None, post=None):
    """Conv (no bias, as in DenseNet) as (im2col +) Pallas matmul with fused BN+ReLU.

    pre  = (scale, shift): BN+ReLU applied to the INPUT inside the kernel (1x1 convs only,
           so zero padding cannot leak through the affine+ReLU).
    post = (scale, shift): BN+ReLU applied to the conv OUTPUT inside the kernel.
    w_mat: (kh*kw*Cin, Cout), rows ordered (kh, kw, cin) with cin fastest.
    # TODO(synk): real torchxrayvision weights are (cout, cin, kh, kw) and must be permuted
    # to this layout; the synthetic init here hides that requirement.
    """
    n, h, w, c = x.shape
    if kh == 1 and kw == 1 and stride == 1 and pad == 0:
        patches = x.reshape(n * h * w, c)          # no im2col for 1x1
        oh, ow = h, w
    else:
        assert pre is None, "BN prologue only fused into unpadded 1x1 convs"
        wins, oh, ow = _extract_windows(x, kh, kw, stride, pad, 0.0)
        patches = jnp.concatenate(wins, axis=-1).reshape(n * oh * ow, kh * kw * c)
    out = fused_matmul(patches, w_mat, pre=pre, post=post)
    return out.reshape(n, oh, ow, -1)


def _pool(x, k, stride, pad, mode):
    n, h, w, c = x.shape
    pad_value = (-jnp.inf) if mode == "max" else 0.0
    wins, oh, ow = _extract_windows(x, k, k, stride, pad, pad_value)
    views = [wi.reshape(n * oh * ow, c) for wi in wins]
    M = n * oh * ow
    tile_m = M if M <= POOL_TILE_M else POOL_TILE_M
    grid = (pl.cdiv(M, tile_m),)
    kernel = functools.partial(_pool_kernel, mode=mode, inv=1.0 / (k * k))
    out = pl.pallas_call(
        kernel,
        out_shape=jax.ShapeDtypeStruct((M, c), x.dtype),
        grid=grid,
        in_specs=[pl.BlockSpec((tile_m, c), lambda i: (i, 0)) for _ in views],
        out_specs=pl.BlockSpec((tile_m, c), lambda i: (i, 0)),
        compiler_params=pltpu.CompilerParams(
            dimension_semantics=("parallel",), vmem_limit_bytes=VMEM_LIMIT),
    )(*views)
    return out.reshape(n, oh, ow, c)


def max_pool(x, k, stride, pad):
    return _pool(x, k, stride, pad, "max")


def avg_pool(x, k, stride, pad):
    # count_include_pad semantics; only used with pad=0 here, matching the DenseNet transition.
    return _pool(x, k, stride, pad, "avg")


def classifier_and_head(feats, norm5, w, b):
    """Fused norm5+ReLU + global-avg-pool + classifier + severity head (one pallas_call)."""
    n, h, wdt, c = feats.shape
    hw = h * wdt
    x3 = feats.reshape(n, hw, c)
    scale, shift = _bn_scale_shift(norm5)
    preds, sev = pl.pallas_call(
        _tail_kernel,
        out_shape=(jax.ShapeDtypeStruct((n, NUM_CLASSES), jnp.float32),
                   jax.ShapeDtypeStruct((1, 2), jnp.float32)),
        grid=(1,),
        in_specs=[
            pl.BlockSpec((n, hw, c), lambda i: (0, 0, 0)),
            pl.BlockSpec((1, c), lambda i: (0, 0)),
            pl.BlockSpec((1, c), lambda i: (0, 0)),
            pl.BlockSpec((c, NUM_CLASSES), lambda i: (0, 0)),
            pl.BlockSpec((1, NUM_CLASSES), lambda i: (0, 0)),
        ],
        out_specs=(pl.BlockSpec((n, NUM_CLASSES), lambda i: (0, 0)),
                   pl.BlockSpec((1, 2), lambda i: (0, 0))),
        compiler_params=pltpu.CompilerParams(vmem_limit_bytes=VMEM_LIMIT),
    )(x3,
      scale.reshape(1, c).astype(jnp.float32),
      shift.reshape(1, c).astype(jnp.float32),
      w.astype(jnp.float32),
      b.reshape(1, NUM_CLASSES).astype(jnp.float32))
    return preds, sev


# ======================= parameters (deterministic synthetic init) =======================

def _bn_init(key, c):
    k1, k2, k3, k4 = jax.random.split(key, 4)
    gamma = 1.0 + 0.1 * jax.random.normal(k1, (c,), jnp.float32)
    beta = 0.1 * jax.random.normal(k2, (c,), jnp.float32)
    mean = 0.1 * jax.random.normal(k3, (c,), jnp.float32)
    var = 1.0 + 0.1 * jnp.abs(jax.random.normal(k4, (c,), jnp.float32))
    return (gamma, beta, mean, var)


def _conv_init(key, kh, kw, cin, cout):
    fan_in = kh * kw * cin
    return jax.random.normal(key, (kh * kw * cin, cout), jnp.float32) * (2.0 / fan_in) ** 0.5


def init_params(key):
    keys = iter(jax.random.split(key, 128))
    nk = lambda: next(keys)
    params = {
        "conv0": _conv_init(nk(), 7, 7, IN_CH, INIT_FEATURES),
        "norm0": _bn_init(nk(), INIT_FEATURES),
        "blocks": [],
        "transitions": [],
    }
    c = INIT_FEATURES
    for bi, n_layers in enumerate(BLOCK_CONFIG):
        layers = []
        for _ in range(n_layers):
            layers.append({
                "norm1": _bn_init(nk(), c),
                "conv1": _conv_init(nk(), 1, 1, c, BN_SIZE * GROWTH),
                "norm2": _bn_init(nk(), BN_SIZE * GROWTH),
                "conv2": _conv_init(nk(), 3, 3, BN_SIZE * GROWTH, GROWTH),
            })
            c += GROWTH
        params["blocks"].append(layers)
        if bi != len(BLOCK_CONFIG) - 1:
            params["transitions"].append({
                "norm": _bn_init(nk(), c),
                "conv": _conv_init(nk(), 1, 1, c, c // 2),
            })
            c = c // 2
    params["norm5"] = _bn_init(nk(), c)
    params["classifier_w"] = 0.05 * jax.random.normal(nk(), (c, NUM_CLASSES), jnp.float32)
    params["classifier_b"] = 0.05 * jax.random.normal(nk(), (NUM_CLASSES,), jnp.float32)
    return params


# ======================= forward (matches PneumoniaSeverityNet.forward) =======================

def densenet_features(params, x):
    # x: NHWC bf16
    # conv0 with fused norm0+relu0 epilogue
    x = conv2d(x, params["conv0"], 7, 7, stride=2, pad=3,
               post=_bn_scale_shift(params["norm0"]))
    x = max_pool(x, 3, 2, 1)                                      # pool0
    for bi, layers in enumerate(params["blocks"]):
        for layer in layers:                                      # _DenseLayer
            # norm1+relu fused as prologue, norm2+relu fused as epilogue of the 1x1 conv
            y = conv2d(x, layer["conv1"], 1, 1, 1, 0,
                       pre=_bn_scale_shift(layer["norm1"]),
                       post=_bn_scale_shift(layer["norm2"]))
            y = conv2d(y, layer["conv2"], 3, 3, 1, 1)             # raw conv output (concat)
            x = jnp.concatenate([x, y], axis=-1)
        if bi != len(params["blocks"]) - 1:                       # _Transition
            t = params["transitions"][bi]
            x = conv2d(x, t["conv"], 1, 1, 1, 0, pre=_bn_scale_shift(t["norm"]))
            x = avg_pool(x, 2, 2, 0)
    return x   # pre-norm5 features; norm5+relu fused into the tail kernel


def pneumonia_severity_net(params, x_nchw):
    # TODO(synk): xrv fix_resolution (bilinear resize to 224x224) and normalization-range
    # warning are skipped for this scaled-down synthetic model.
    x = jnp.transpose(x_nchw, (0, 2, 3, 1)).astype(jnp.bfloat16)   # NCHW -> NHWC, bf16 activations
    feats = densenet_features(params, x)
    preds_all, sev = classifier_and_head(feats, params["norm5"],
                                         params["classifier_w"], params["classifier_b"])
    return {
        "radiological_findings": preds_all,   # (N, 18), op_threshs=None (raw logits)
        "geographic_extent": sev[0, 0],       # clamp(p*0.8705 + 3.4137, 0, 8)
        "opacity": sev[0, 1],                 # clamp(p*0.5484 + 2.5536, 0, 6)
    }


if __name__ == "__main__":
    key = jax.random.PRNGKey(0)
    pkey, xkey = jax.random.split(key)
    params = init_params(pkey)
    x = jax.random.normal(xkey, (2, IN_CH, 32, 32), dtype=jnp.float32)  # small NCHW X-ray batch

    fwd = jax.jit(functools.partial(pneumonia_severity_net, params))
    out = fwd(x)
    out = jax.tree_util.tree_map(jax.block_until_ready, out)

    assert out["radiological_findings"].shape == (2, NUM_CLASSES)
    assert out["geographic_extent"].shape == ()
    assert out["opacity"].shape == ()
    print("KERNEL_OK")
</pallas_src>

<mosaic_0001>
module attributes {stable_mosaic.version = 11 : i64} {
  func.func @_fused_mm_kernel(%arg0: i32, %arg1: memref<256x49xbf16, #tpu.memory_space<vmem>>, %arg2: memref<49x16xbf16, #tpu.memory_space<vmem>>, %arg3: memref<1x16xf32, #tpu.memory_space<vmem>>, %arg4: memref<1x16xf32, #tpu.memory_space<vmem>>, %arg5: memref<256x16xbf16, #tpu.memory_space<vmem>>) attributes {dimension_semantics = [#tpu.dimension_semantics<parallel>], iteration_bounds = array<i64: 2>, scalar_prefetch = 0 : i64, scratch_operands = 0 : i64, tpu.core_type = #tpu.core_type<tc>, window_params = [{transform_indices = @transform_0, window_bounds = array<i64: 256, 49>}, {pipeline_mode = #tpu.pipeline_mode<synchronous>, transform_indices = @transform_1, window_bounds = array<i64: 49, 16>}, {pipeline_mode = #tpu.pipeline_mode<synchronous>, transform_indices = @transform_2, window_bounds = array<i64: 1, 16>}, {pipeline_mode = #tpu.pipeline_mode<synchronous>, transform_indices = @transform_3, window_bounds = array<i64: 1, 16>}, {transform_indices = @transform_4, window_bounds = array<i64: 256, 16>}]} {
    %c0 = arith.constant 0 : index
    %c0_0 = arith.constant 0 : index
    %0 = vector.load %arg1[%c0, %c0_0] : memref<256x49xbf16, #tpu.memory_space<vmem>>, vector<256x49xbf16>
    %c0_1 = arith.constant 0 : index
    %c0_2 = arith.constant 0 : index
    %1 = vector.load %arg2[%c0_1, %c0_2] : memref<49x16xbf16, #tpu.memory_space<vmem>>, vector<49x16xbf16>
    %cst = arith.constant dense<0.000000e+00> : vector<256x16xf32>
    %2 = tpu.matmul %0, %1, %cst {dimension_numbers = #tpu.dot_dimension_numbers<[1], [0], [0], [1], [0, 0, 1, 1], [], []>} : vector<256x49xbf16>, vector<49x16xbf16>, vector<256x16xf32> -> vector<256x16xf32>
    %c0_3 = arith.constant 0 : index
    %c0_4 = arith.constant 0 : index
    %3 = vector.load %arg3[%c0_3, %c0_4] : memref<1x16xf32, #tpu.memory_space<vmem>>, vector<1x16xf32>
    %4 = vector.broadcast %3 : vector<1x16xf32> to vector<256x16xf32>
    %5 = arith.mulf %2, %4 : vector<256x16xf32>
    %c0_5 = arith.constant 0 : index
    %c0_6 = arith.constant 0 : index
    %6 = vector.load %arg4[%c0_5, %c0_6] : memref<1x16xf32, #tpu.memory_space<vmem>>, vector<1x16xf32>
    %7 = vector.broadcast %6 : vector<1x16xf32> to vector<256x16xf32>
    %8 = arith.addf %5, %7 : vector<256x16xf32>
    %cst_7 = arith.constant 0.000000e+00 : f32
    %9 = vector.broadcast %cst_7 : f32 to vector<256x16xf32>
    %10 = arith.maximumf %8, %9 : vector<256x16xf32>
    %11 = arith.truncf %10 : vector<256x16xf32> to vector<256x16xbf16>
    %c0_8 = arith.constant 0 : index
    %c0_9 = arith.constant 0 : index
    %12 = vector.load %arg5[%c0_8, %c0_9] : memref<256x16xbf16, #tpu.memory_space<vmem>>, vector<256x16xbf16>
    tpu.vector_store %arg5[%c0_8, %c0_9], %11 {strides = array<i32>} : memref<256x16xbf16, #tpu.memory_space<vmem>>, vector<256x16xbf16>,
    return
  }
  func.func @transform_0(%arg0: i32) -> (i32, i32) {
    %c0_i32 = arith.constant 0 : i32
    %c0_i32_0 = arith.constant 0 : i32
    return %arg0, %c0_i32 : i32, i32
  }
  func.func @transform_1(%arg0: i32) -> (i32, i32) {
    %c0_i32 = arith.constant 0 : i32
    %c0_i32_0 = arith.constant 0 : i32
    %c0_i32_1 = arith.constant 0 : i32
    return %c0_i32, %c0_i32_0 : i32, i32
  }
  func.func @transform_2(%arg0: i32) -> (i32, i32) {
    %c0_i32 = arith.constant 0 : i32
    %c0_i32_0 = arith.constant 0 : i32
    %c0_i32_1 = arith.constant 0 : i32
    return %c0_i32, %c0_i32_0 : i32, i32
  }
  func.func @transform_3(%arg0: i32) -> (i32, i32) {
    %c0_i32 = arith.constant 0 : i32
    %c0_i32_0 = arith.constant 0 : i32
    %c0_i32_1 = arith.constant 0 : i32
    return %c0_i32, %c0_i32_0 : i32, i32
  }
  func.func @transform_4(%arg0: i32) -> (i32, i32) {
    %c0_i32 = arith.constant 0 : i32
    %c0_i32_0 = arith.constant 0 : i32
    return %arg0, %c0_i32 : i32, i32
  }
}

module attributes {stable_mosaic.version = 11 : i64} {
  func.func @_pool_kernel(%arg0: i32, %arg1: memref<128x16xbf16, #tpu.memory_space<vmem>>, %arg2: memref<128x16xbf16, #tpu.memory_space<vmem>>, %arg3: memref<128x16xbf16, #tpu.memory_space<vmem>>, %arg4: memref<128x16xbf16, #tpu.memory_space<vmem>>, %arg5: memref<128x16xbf16, #tpu.memory_space<vmem>>, %arg6: memref<128x16xbf16, #tpu.memory_space<vmem>>, %arg7: memref<128x16xbf16, #tpu.memory_space<vmem>>, %arg8: memref<128x16xbf16, #tpu.memory_space<vmem>>, %arg9: memref<128x16xbf16, #tpu.memory_space<vmem>>, %arg10: memref<128x16xbf16, #tpu.memory_space<vmem>>) attributes {dimension_semantics = [#tpu.dimension_semantics<parallel>], iteration_bounds = array<i64: 1>, scalar_prefetch = 0 : i64, scratch_operands = 0 : i64, tpu.core_type = #tpu.core_type<tc>, window_params = [{transform_indices = @transform_0, window_bounds = array<i64: 128, 16>}, {transform_indices = @transform_1, window_bounds = array<i64: 128, 16>}, {transform_indices = @transform_2, window_bounds = array<i64: 128, 16>}, {transform_indices = @transform_3, window_bounds = array<i64: 128, 16>}, {transform_indices = @transform_4, window_bounds = array<i64: 128, 16>}, {transform_indices = @transform_5, window_bounds = array<i64: 128, 16>}, {transform_indices = @transform_6, window_bounds = array<i64: 128, 16>}, {transform_indices = @transform_7, window_bounds = array<i64: 128, 16>}, {transform_indices = @transform_8, window_bounds = array<i64: 128, 16>}, {transform_indices = @transform_9, window_bounds = array<i64: 128, 16>}]} {
    %c0 = arith.constant 0 : index
    %c0_0 = arith.constant 0 : index
    %0 = vector.load %arg1[%c0, %c0_0] : memref<128x16xbf16, #tpu.memory_space<vmem>>, vector<128x16xbf16>
    %1 = arith.extf %0 : vector<128x16xbf16> to vector<128x16xf32>
    %c0_1 = arith.constant 0 : index
    %c0_2 = arith.constant 0 : index
    %2 = vector.load %arg2[%c0_1, %c0_2] : memref<128x16xbf16, #tpu.memory_space<vmem>>, vector<128x16xbf16>
    %3 = arith.extf %2 : vector<128x16xbf16> to vector<128x16xf32>
    %4 = arith.maximumf %1, %3 : vector<128x16xf32>
    %c0_3 = arith.constant 0 : index
    %c0_4 = arith.constant 0 : index
    %5 = vector.load %arg3[%c0_3, %c0_4] : memref<128x16xbf16, #tpu.memory_space<vmem>>, vector<128x16xbf16>
    %6 = arith.extf %5 : vector<128x16xbf16> to vector<128x16xf32>
    %7 = arith.maximumf %4, %6 : vector<128x16xf32>
    %c0_5 = arith.constant 0 : index
    %c0_6 = arith.constant 0 : index
    %8 = vector.load %arg4[%c0_5, %c0_6] : memref<128x16xbf16, #tpu.memory_space<vmem>>, vector<128x16xbf16>
    %9 = arith.extf %8 : vector<128x16xbf16> to vector<128x16xf32>
    %10 = arith.maximumf %7, %9 : vector<128x16xf32>
    %c0_7 = arith.constant 0 : index
    %c0_8 = arith.constant 0 : index
    %11 = vector.load %arg5[%c0_7, %c0_8] : memref<128x16xbf16, #tpu.memory_space<vmem>>, vector<128x16xbf16>
    %12 = arith.extf %11 : vector<128x16xbf16> to vector<128x16xf32>
    %13 = arith.maximumf %10, %12 : vector<128x16xf32>
    %c0_9 = arith.constant 0 : index
    %c0_10 = arith.constant 0 : index
    %14 = vector.load %arg6[%c0_9, %c0_10] : memref<128x16xbf16, #tpu.memory_space<vmem>>, vector<128x16xbf16>
    %15 = arith.extf %14 : vector<128x16xbf16> to vector<128x16xf32>
    %16 = arith.maximumf %13, %15 : vector<128x16xf32>
    %c0_11 = arith.constant 0 : index
    %c0_12 = arith.constant 0 : index
    %17 = vector.load %arg7[%c0_11, %c0_12] : memref<128x16xbf16, #tpu.memory_space<vmem>>, vector<128x16xbf16>
    %18 = arith.extf %17 : vector<128x16xbf16> to vector<128x16xf32>
    %19 = arith.maximumf %16, %18 : vector<128x16xf32>
    %c0_13 = arith.constant 0 : index
    %c0_14 = arith.constant 0 : index
    %20 = vector.load %arg8[%c0_13, %c0_14] : memref<128x16xbf16, #tpu.memory_space<vmem>>, vector<128x16xbf16>
    %21 = arith.extf %20 : vector<128x16xbf16> to vector<128x16xf32>
    %22 = arith.maximumf %19, %21 : vector<128x16xf32>
    %c0_15 = arith.constant 0 : index
    %c0_16 = arith.constant 0 : index
    %23 = vector.load %arg9[%c0_15, %c0_16] : memref<128x16xbf16, #tpu.memory_space<vmem>>, vector<128x16xbf16>
    %24 = arith.extf %23 : vector<128x16xbf16> to vector<128x16xf32>
    %25 = arith.maximumf %22, %24 : vector<128x16xf32>
    %26 = arith.truncf %25 : vector<128x16xf32> to vector<128x16xbf16>
    %c0_17 = arith.constant 0 : index
    %c0_18 = arith.constant 0 : index
    %27 = vector.load %arg10[%c0_17, %c0_18] : memref<128x16xbf16, #tpu.memory_space<vmem>>, vector<128x16xbf16>
    tpu.vector_store %arg10[%c0_17, %c0_18], %26 {strides = array<i32>} : memref<128x16xbf16, #tpu.memory_space<vmem>>, vector<128x16xbf16>,
    return
  }
  func.func @transform_0(%arg0: i32) -> (i32, i32) {
    %c0_i32 = arith.constant 0 : i32
    %c0_i32_0 = arith.constant 0 : i32
    return %arg0, %c0_i32 : i32, i32
  }
  func.func @transform_1(%arg0: i32) -> (i32, i32) {
    %c0_i32 = arith.constant 0 : i32
    %c0_i32_0 = arith.constant 0 : i32
    return %arg0, %c0_i32 : i32, i32
  }
  func.func @transform_2(%arg0: i32) -> (i32, i32) {
    %c0_i32 = arith.constant 0 : i32
    %c0_i32_0 = arith.constant 0 : i32
    return %arg0, %c0_i32 : i32, i32
  }
  func.func @transform_3(%arg0: i32) -> (i32, i32) {
    %c0_i32 = arith.constant 0 : i32
    %c0_i32_0 = arith.constant 0 : i32
    return %arg0, %c0_i32 : i32, i32
  }
  func.func @transform_4(%arg0: i32) -> (i32, i32) {
    %c0_i32 = arith.constant 0 : i32
    %c0_i32_0 = arith.constant 0 : i32
    return %arg0, %c0_i32 : i32, i32
  }
  func.func @transform_5(%arg0: i32) -> (i32, i32) {
    %c0_i32 = arith.constant 0 : i32
    %c0_i32_0 = arith.constant 0 : i32
    return %arg0, %c0_i32 : i32, i32
  }
  func.func @transform_6(%arg0: i32) -> (i32, i32) {
    %c0_i32 = arith.constant 0 : i32
    %c0_i32_0 = arith.constant 0 : i32
    return %arg0, %c0_i32 : i32, i32
  }
  func.func @transform_7(%arg0: i32) -> (i32, i32) {
    %c0_i32 = arith.constant 0 : i32
    %c0_i32_0 = arith.constant 0 : i32
    return %arg0, %c0_i32 : i32, i32
  }
  func.func @transform_8(%arg0: i32) -> (i32, i32) {
    %c0_i32 = arith.constant 0 : i32
    %c0_i32_0 = arith.constant 0 : i32
    return %arg0, %c0_i32 : i32, i32
  }
  func.func @transform_9(%arg0: i32) -> (i32, i32) {
    %c0_i32 = arith.constant 0 : i32
    %c0_i32_0 = arith.constant 0 : i32
    return %arg0, %c0_i32 : i32, i32
  }
}

module attributes {stable_mosaic.version = 11 : i64} {
  func.func @_fused_mm_kernel(%arg0: i32, %arg1: memref<128x16xbf16, #tpu.memory_space<vmem>>, %arg2: memref<16x32xbf16, #tpu.memory_space<vmem>>, %arg3: memref<1x16xf32, #tpu.memory_space<vmem>>, %arg4: memref<1x16xf32, #tpu.memory_space<vmem>>, %arg5: memref<1x32xf32, #tpu.memory_space<vmem>>, %arg6: memref<1x32xf32, #tpu.memory_space<vmem>>, %arg7: memref<128x32xbf16, #tpu.memory_space<vmem>>) attributes {dimension_semantics = [#tpu.dimension_semantics<parallel>], iteration_bounds = array<i64: 1>, scalar_prefetch = 0 : i64, scratch_operands = 0 : i64, tpu.core_type = #tpu.core_type<tc>, window_params = [{transform_indices = @transform_0, window_bounds = array<i64: 128, 16>}, {pipeline_mode = #tpu.pipeline_mode<synchronous>, transform_indices = @transform_1, window_bounds = array<i64: 16, 32>}, {pipeline_mode = #tpu.pipeline_mode<synchronous>, transform_indices = @transform_2, window_bounds = array<i64: 1, 16>}, {pipeline_mode = #tpu.pipeline_mode<synchronous>, transform_indices = @transform_3, window_bounds = array<i64: 1, 16>}, {pipeline_mode = #tpu.pipeline_mode<synchronous>, transform_indices = @transform_4, window_bounds = array<i64: 1, 32>}, {pipeline_mode = #tpu.pipeline_mode<synchronous>, transform_indices = @transform_5, window_bounds = array<i64: 1, 32>}, {transform_indices = @transform_6, window_bounds = array<i64: 128, 32>}]} {
    %c0 = arith.constant 0 : index
    %c0_0 = arith.constant 0 : index
    %0 = vector.load %arg3[%c0, %c0_0] : memref<1x16xf32, #tpu.memory_space<vmem>>, vector<1x16xf32>
    %c0_1 = arith.constant 0 : index
    %c0_2 = arith.constant 0 : index
    %1 = vector.load %arg1[%c0_1, %c0_2] : memref<128x16xbf16, #tpu.memory_space<vmem>>, vector<128x16xbf16>
    %2 = arith.extf %1 : vector<128x16xbf16> to vector<128x16xf32>
    %3 = vector.broadcast %0 : vector<1x16xf32> to vector<128x16xf32>
    %4 = arith.mulf %3, %2 : vector<128x16xf32>
    %c0_3 = arith.constant 0 : index
    %c0_4 = arith.constant 0 : index
    %5 = vector.load %arg4[%c0_3, %c0_4] : memref<1x16xf32, #tpu.memory_space<vmem>>, vector<1x16xf32>
    %6 = vector.broadcast %5 : vector<1x16xf32> to vector<128x16xf32>
    %7 = arith.addf %4, %6 : vector<128x16xf32>
    %cst = arith.constant 0.000000e+00 : f32
    %8 = vector.broadcast %cst : f32 to vector<128x16xf32>
    %9 = arith.maximumf %7, %8 : vector<128x16xf32>
    %10 = arith.truncf %9 : vector<128x16xf32> to vector<128x16xbf16>
    %c0_5 = arith.constant 0 : index
    %c0_6 = arith.constant 0 : index
    %11 = vector.load %arg2[%c0_5, %c0_6] : memref<16x32xbf16, #tpu.memory_space<vmem>>, vector<16x32xbf16>
    %cst_7 = arith.constant dense<0.000000e+00> : vector<128x32xf32>
    %12 = tpu.matmul %10, %11, %cst_7 {dimension_numbers = #tpu.dot_dimension_numbers<[1], [0], [0], [1], [0, 0, 1, 1], [], []>} : vector<128x16xbf16>, vector<16x32xbf16>, vector<128x32xf32> -> vector<128x32xf32>
    %c0_8 = arith.constant 0 : index
    %c0_9 = arith.constant 0 : index
    %13 = vector.load %arg5[%c0_8, %c0_9] : memref<1x32xf32, #tpu.memory_space<vmem>>, vector<1x32xf32>
    %14 = vector.broadcast %13 : vector<1x32xf32> to vector<128x32xf32>
    %15 = arith.mulf %12, %14 : vector<128x32xf32>
    %c0_10 = arith.constant 0 : index
    %c0_11 = arith.constant 0 : index
    %16 = vector.load %arg6[%c0_10, %c0_11] : memref<1x32xf32, #tpu.memory_space<vmem>>, vector<1x32xf32>
    %17 = vector.broadcast %16 : vector<1x32xf32> to vector<128x32xf32>
    %18 = arith.addf %15, %17 : vector<128x32xf32>
    %cst_12 = arith.constant 0.000000e+00 : f32
    %19 = vector.broadcast %cst_12 : f32 to vector<128x32xf32>
    %20 = arith.maximumf %18, %19 : vector<128x32xf32>
    %21 = arith.truncf %20 : vector<128x32xf32> to vector<128x32xbf16>
    %c0_13 = arith.constant 0 : index
    %c0_14 = arith.constant 0 : index
    %22 = vector.load %arg7[%c0_13, %c0_14] : memref<128x32xbf16, #tpu.memory_space<vmem>>, vector<128x32xbf16>
    tpu.vector_store %arg7[%c0_13, %c0_14], %21 {strides = array<i32>} : memref<128x32xbf16, #tpu.memory_space<vmem>>, vector<128x32xbf16>,
    return
  }
  func.func @transform_0(%arg0: i32) -> (i32, i32) {
    %c0_i32 = arith.constant 0 : i32
    %c0_i32_0 = arith.constant 0 : i32
    return %arg0, %c0_i32 : i32, i32
  }
  func.func @transform_1(%arg0: i32) -> (i32, i32) {
    %c0_i32 = arith.constant 0 : i32
    %c0_i32_0 = arith.constant 0 : i32
    %c0_i32_1 = arith.constant 0 : i32
    return %c0_i32, %c0_i32_0 : i32, i32
  }
  func.func @transform_2(%arg0: i32) -> (i32, i32) {
    %c0_i32 = arith.constant 0 : i32
    %c0_i32_0 = arith.constant 0 : i32
    %c0_i32_1 = arith.constant 0 : i32
    return %c0_i32, %c0_i32_0 : i32, i32
  }
  func.func @transform_3(%arg0: i32) -> (i32, i32) {
    %c0_i32 = arith.constant 0 : i32
    %c0_i32_0 = arith.constant 0 : i32
    %c0_i32_1 = arith.constant 0 : i32
    return %c0_i32, %c0_i32_0 : i32, i32
  }
  func.func @transform_4(%arg0: i32) -> (i32, i32) {
    %c0_i32 = arith.constant 0 : i32
    %c0_i32_0 = arith.constant 0 : i32
    %c0_i32_1 = arith.constant 0 : i32
    return %c0_i32, %c0_i32_0 : i32, i32
  }
  func.func @transform_5(%arg0: i32) -> (i32, i32) {
    %c0_i32 = arith.constant 0 : i32
    %c0_i32_0 = arith.constant 0 : i32
    %c0_i32_1 = arith.constant 0 : i32
    return %c0_i32, %c0_i32_0 : i32, i32
  }
  func.func @transform_6(%arg0: i32) -> (i32, i32) {
    %c0_i32 = arith.constant 0 : i32
    %c0_i32_0 = arith.constant 0 : i32
    return %arg0, %c0_i32 : i32, i32
  }
}

module attributes {stable_mosaic.version = 11 : i64} {
  func.func @_fused_mm_kernel(%arg0: i32, %arg1: memref<128x288xbf16, #tpu.memory_space<vmem>>, %arg2: memref<288x8xbf16, #tpu.memory_space<vmem>>, %arg3: memref<128x8xbf16, #tpu.memory_space<vmem>>) attributes {dimension_semantics = [#tpu.dimension_semantics<parallel>], iteration_bounds = array<i64: 1>, scalar_prefetch = 0 : i64, scratch_operands = 0 : i64, tpu.core_type = #tpu.core_type<tc>, window_params = [{transform_indices = @transform_0, window_bounds = array<i64: 128, 288>}, {pipeline_mode = #tpu.pipeline_mode<synchronous>, transform_indices = @transform_1, window_bounds = array<i64: 288, 8>}, {transform_indices = @transform_2, window_bounds = array<i64: 128, 8>}]} {
    %c0 = arith.constant 0 : index
    %c0_0 = arith.constant 0 : index
    %0 = vector.load %arg1[%c0, %c0_0] : memref<128x288xbf16, #tpu.memory_space<vmem>>, vector<128x288xbf16>
    %c0_1 = arith.constant 0 : index
    %c0_2 = arith.constant 0 : index
    %1 = vector.load %arg2[%c0_1, %c0_2] : memref<288x8xbf16, #tpu.memory_space<vmem>>, vector<288x8xbf16>
    %cst = arith.constant dense<0.000000e+00> : vector<128x8xf32>
    %2 = tpu.matmul %0, %1, %cst {dimension_numbers = #tpu.dot_dimension_numbers<[1], [0], [0], [1], [0, 0, 1, 1], [], []>} : vector<128x288xbf16>, vector<288x8xbf16>, vector<128x8xf32> -> vector<128x8xf32>
    %3 = arith.truncf %2 : vector<128x8xf32> to vector<128x8xbf16>
    %c0_3 = arith.constant 0 : index
    %c0_4 = arith.constant 0 : index
    %4 = vector.load %arg3[%c0_3, %c0_4] : memref<128x8xbf16, #tpu.memory_space<vmem>>, vector<128x8xbf16>
    tpu.vector_store %arg3[%c0_3, %c0_4], %3 {strides = array<i32>} : memref<128x8xbf16, #tpu.memory_space<vmem>>, vector<128x8xbf16>,
    return
  }
  func.func @transform_0(%arg0: i32) -> (i32, i32) {
    %c0_i32 = arith.constant 0 : i32
    %c0_i32_0 = arith.constant 0 : i32
    return %arg0, %c0_i32 : i32, i32
  }
  func.func @transform_1(%arg0: i32) -> (i32, i32) {
    %c0_i32 = arith.constant 0 : i32
    %c0_i32_0 = arith.constant 0 : i32
    %c0_i32_1 = arith.constant 0 : i32
    return %c0_i32, %c0_i32_0 : i32, i32
  }
  func.func @transform_2(%arg0: i32) -> (i32, i32) {
    %c0_i32 = arith.constant 0 : i32
    %c0_i32_0 = arith.constant 0 : i32
    return %arg0, %c0_i32 : i32, i32
  }
}

module attributes {stable_mosaic.version = 11 : i64} {
  func.func @_fused_mm_kernel(%arg0: i32, %arg1: memref<128x24xbf16, #tpu.memory_space<vmem>>, %arg2: memref<24x32xbf16, #tpu.memory_space<vmem>>, %arg3: memref<1x24xf32, #tpu.memory_space<vmem>>, %arg4: memref<1x24xf32, #tpu.memory_space<vmem>>, %arg5: memref<1x32xf32, #tpu.memory_space<vmem>>, %arg6: memref<1x32xf32, #tpu.memory_space<vmem>>, %arg7: memref<128x32xbf16, #tpu.memory_space<vmem>>) attributes {dimension_semantics = [#tpu.dimension_semantics<parallel>], iteration_bounds = array<i64: 1>, scalar_prefetch = 0 : i64, scratch_operands = 0 : i64, tpu.core_type = #tpu.core_type<tc>, window_params = [{transform_indices = @transform_0, window_bounds = array<i64: 128, 24>}, {pipeline_mode = #tpu.pipeline_mode<synchronous>, transform_indices = @transform_1, window_bounds = array<i64: 24, 32>}, {pipeline_mode = #tpu.pipeline_mode<synchronous>, transform_indices = @transform_2, window_bounds = array<i64: 1, 24>}, {pipeline_mode = #tpu.pipeline_mode<synchronous>, transform_indices = @transform_3, window_bounds = array<i64: 1, 24>}, {pipeline_mode = #tpu.pipeline_mode<synchronous>, transform_indices = @transform_4, window_bounds = array<i64: 1, 32>}, {pipeline_mode = #tpu.pipeline_mode<synchronous>, transform_indices = @transform_5, window_bounds = array<i64: 1, 32>}, {transform_indices = @transform_6, window_bounds = array<i64: 128, 32>}]} {
    %c0 = arith.constant 0 : index
    %c0_0 = arith.constant 0 : index
    %0 = vector.load %arg3[%c0, %c0_0] : memref<1x24xf32, #tpu.memory_space<vmem>>, vector<1x24xf32>
    %c0_1 = arith.constant 0 : index
    %c0_2 = arith.constant 0 : index
    %1 = vector.load %arg1[%c0_1, %c0_2] : memref<128x24xbf16, #tpu.memory_space<vmem>>, vector<128x24xbf16>
    %2 = arith.extf %1 : vector<128x24xbf16> to vector<128x24xf32>
    %3 = vector.broadcast %0 : vector<1x24xf32> to vector<128x24xf32>
    %4 = arith.mulf %3, %2 : vector<128x24xf32>
    %c0_3 = arith.constant 0 : index
    %c0_4 = arith.constant 0 : index
    %5 = vector.load %arg4[%c0_3, %c0_4] : memref<1x24xf32, #tpu.memory_space<vmem>>, vector<1x24xf32>
    %6 = vector.broadcast %5 : vector<1x24xf32> to vector<128x24xf32>
    %7 = arith.addf %4, %6 : vector<128x24xf32>
    %cst = arith.constant 0.000000e+00 : f32
    %8 = vector.broadcast %cst : f32 to vector<128x24xf32>
    %9 = arith.maximumf %7, %8 : vector<128x24xf32>
    %10 = arith.truncf %9 : vector<128x24xf32> to vector<128x24xbf16>
    %c0_5 = arith.constant 0 : index
    %c0_6 = arith.constant 0 : index
    %11 = vector.load %arg2[%c0_5, %c0_6] : memref<24x32xbf16, #tpu.memory_space<vmem>>, vector<24x32xbf16>
    %cst_7 = arith.constant dense<0.000000e+00> : vector<128x32xf32>
    %12 = tpu.matmul %10, %11, %cst_7 {dimension_numbers = #tpu.dot_dimension_numbers<[1], [0], [0], [1], [0, 0, 1, 1], [], []>} : vector<128x24xbf16>, vector<24x32xbf16>, vector<128x32xf32> -> vector<128x32xf32>
    %c0_8 = arith.constant 0 : index
    %c0_9 = arith.constant 0 : index
    %13 = vector.load %arg5[%c0_8, %c0_9] : memref<1x32xf32, #tpu.memory_space<vmem>>, vector<1x32xf32>
    %14 = vector.broadcast %13 : vector<1x32xf32> to vector<128x32xf32>
    %15 = arith.mulf %12, %14 : vector<128x32xf32>
    %c0_10 = arith.constant 0 : index
    %c0_11 = arith.constant 0 : index
    %16 = vector.load %arg6[%c0_10, %c0_11] : memref<1x32xf32, #tpu.memory_space<vmem>>, vector<1x32xf32>
    %17 = vector.broadcast %16 : vector<1x32xf32> to vector<128x32xf32>
    %18 = arith.addf %15, %17 : vector<128x32xf32>
    %cst_12 = arith.constant 0.000000e+00 : f32
    %19 = vector.broadcast %cst_12 : f32 to vector<128x32xf32>
    %20 = arith.maximumf %18, %19 : vector<128x32xf32>
    %21 = arith.truncf %20 : vector<128x32xf32> to vector<128x32xbf16>
    %c0_13 = arith.constant 0 : index
    %c0_14 = arith.constant 0 : index
    %22 = vector.load %arg7[%c0_13, %c0_14] : memref<128x32xbf16, #tpu.memory_space<vmem>>, vector<128x32xbf16>
    tpu.vector_store %arg7[%c0_13, %c0_14], %21 {strides = array<i32>} : memref<128x32xbf16, #tpu.memory_space<vmem>>, vector<128x32xbf16>,
    return
  }
  func.func @transform_0(%arg0: i32) -> (i32, i32) {
    %c0_i32 = arith.constant 0 : i32
    %c0_i32_0 = arith.constant 0 : i32
    return %arg0, %c0_i32 : i32, i32
  }
  func.func @transform_1(%arg0: i32) -> (i32, i32) {
    %c0_i32 = arith.constant 0 : i32
    %c0_i32_0 = arith.constant 0 : i32
    %c0_i32_1 = arith.constant 0 : i32
    return %c0_i32, %c0_i32_0 : i32, i32
  }
  func.func @transform_2(%arg0: i32) -> (i32, i32) {
    %c0_i32 = arith.constant 0 : i32
    %c0_i32_0 = arith.constant 0 : i32
    %c0_i32_1 = arith.constant 0 : i32
    return %c0_i32, %c0_i32_0 : i32, i32
  }
  func.func @transform_3(%arg0: i32) -> (i32, i32) {
    %c0_i32 = arith.constant 0 : i32
    %c0_i32_0 = arith.constant 0 : i32
    %c0_i32_1 = arith.constant 0 : i32
    return %c0_i32, %c0_i32_0 : i32, i32
  }
  func.func @transform_4(%arg0: i32) -> (i32, i32) {
    %c0_i32 = arith.constant 0 : i32
    %c0_i32_0 = arith.constant 0 : i32
    %c0_i32_1 = arith.constant 0 : i32
    return %c0_i32, %c0_i32_0 : i32, i32
  }
  func.func @transform_5(%arg0: i32) -> (i32, i32) {
    %c0_i32 = arith.constant 0 : i32
    %c0_i32_0 = arith.constant 0 : i32
    %c0_i32_1 = arith.constant 0 : i32
    return %c0_i32, %c0_i32_0 : i32, i32
  }
  func.func @transform_6(%arg0: i32) -> (i32, i32) {
    %c0_i32 = arith.constant 0 : i32
    %c0_i32_0 = arith.constant 0 : i32
    return %arg0, %c0_i32 : i32, i32
  }
}

module attributes {stable_mosaic.version = 11 : i64} {
  func.func @_fused_mm_kernel(%arg0: i32, %arg1: memref<128x32xbf16, #tpu.memory_space<vmem>>, %arg2: memref<32x16xbf16, #tpu.memory_space<vmem>>, %arg3: memref<1x32xf32, #tpu.memory_space<vmem>>, %arg4: memref<1x32xf32, #tpu.memory_space<vmem>>, %arg5: memref<128x16xbf16, #tpu.memory_space<vmem>>) attributes {dimension_semantics = [#tpu.dimension_semantics<parallel>], iteration_bounds = array<i64: 1>, scalar_prefetch = 0 : i64, scratch_operands = 0 : i64, tpu.core_type = #tpu.core_type<tc>, window_params = [{transform_indices = @transform_0, window_bounds = array<i64: 128, 32>}, {pipeline_mode = #tpu.pipeline_mode<synchronous>, transform_indices = @transform_1, window_bounds = array<i64: 32, 16>}, {pipeline_mode = #tpu.pipeline_mode<synchronous>, transform_indices = @transform_2, window_bounds = array<i64: 1, 32>}, {pipeline_mode = #tpu.pipeline_mode<synchronous>, transform_indices = @transform_3, window_bounds = array<i64: 1, 32>}, {transform_indices = @transform_4, window_bounds = array<i64: 128, 16>}]} {
    %c0 = arith.constant 0 : index
    %c0_0 = arith.constant 0 : index
    %0 = vector.load %arg3[%c0, %c0_0] : memref<1x32xf32, #tpu.memory_space<vmem>>, vector<1x32xf32>
    %c0_1 = arith.constant 0 : index
    %c0_2 = arith.constant 0 : index
    %1 = vector.load %arg1[%c0_1, %c0_2] : memref<128x32xbf16, #tpu.memory_space<vmem>>, vector<128x32xbf16>
    %2 = arith.extf %1 : vector<128x32xbf16> to vector<128x32xf32>
    %3 = vector.broadcast %0 : vector<1x32xf32> to vector<128x32xf32>
    %4 = arith.mulf %3, %2 : vector<128x32xf32>
    %c0_3 = arith.constant 0 : index
    %c0_4 = arith.constant 0 : index
    %5 = vector.load %arg4[%c0_3, %c0_4] : memref<1x32xf32, #tpu.memory_space<vmem>>, vector<1x32xf32>
    %6 = vector.broadcast %5 : vector<1x32xf32> to vector<128x32xf32>
    %7 = arith.addf %4, %6 : vector<128x32xf32>
    %cst = arith.constant 0.000000e+00 : f32
    %8 = vector.broadcast %cst : f32 to vector<128x32xf32>
    %9 = arith.maximumf %7, %8 : vector<128x32xf32>
    %10 = arith.truncf %9 : vector<128x32xf32> to vector<128x32xbf16>
    %c0_5 = arith.constant 0 : index
    %c0_6 = arith.constant 0 : index
    %11 = vector.load %arg2[%c0_5, %c0_6] : memref<32x16xbf16, #tpu.memory_space<vmem>>, vector<32x16xbf16>
    %cst_7 = arith.constant dense<0.000000e+00> : vector<128x16xf32>
    %12 = tpu.matmul %10, %11, %cst_7 {dimension_numbers = #tpu.dot_dimension_numbers<[1], [0], [0], [1], [0, 0, 1, 1], [], []>} : vector<128x32xbf16>, vector<32x16xbf16>, vector<128x16xf32> -> vector<128x16xf32>
    %13 = arith.truncf %12 : vector<128x16xf32> to vector<128x16xbf16>
    %c0_8 = arith.constant 0 : index
    %c0_9 = arith.constant 0 : index
    %14 = vector.load %arg5[%c0_8, %c0_9] : memref<128x16xbf16, #tpu.memory_space<vmem>>, vector<128x16xbf16>
    tpu.vector_store %arg5[%c0_8, %c0_9], %13 {strides = array<i32>} : memref<128x16xbf16, #tpu.memory_space<vmem>>, vector<128x16xbf16>,
    return
  }
  func.func @transform_0(%arg0: i32) -> (i32, i32) {
    %c0_i32 = arith.constant 0 : i32
    %c0_i32_0 = arith.constant 0 : i32
    return %arg0, %c0_i32 : i32, i32
  }
  func.func @transform_1(%arg0: i32) -> (i32, i32) {
    %c0_i32 = arith.constant 0 : i32
    %c0_i32_0 = arith.constant 0 : i32
    %c0_i32_1 = arith.constant 0 : i32
    return %c0_i32, %c0_i32_0 : i32, i32
  }
  func.func @transform_2(%arg0: i32) -> (i32, i32) {
    %c0_i32 = arith.constant 0 : i32
    %c0_i32_0 = arith.constant 0 : i32
    %c0_i32_1 = arith.constant 0 : i32
    return %c0_i32, %c0_i32_0 : i32, i32
  }
  func.func @transform_3(%arg0: i32) -> (i32, i32) {
    %c0_i32 = arith.constant 0 : i32
    %c0_i32_0 = arith.constant 0 : i32
    %c0_i32_1 = arith.constant 0 : i32
    return %c0_i32, %c0_i32_0 : i32, i32
  }
  func.func @transform_4(%arg0: i32) -> (i32, i32) {
    %c0_i32 = arith.constant 0 : i32
    %c0_i32_0 = arith.constant 0 : i32
    return %arg0, %c0_i32 : i32, i32
  }
}

module attributes {stable_mosaic.version = 11 : i64} {
  func.func @_pool_kernel(%arg0: i32, %arg1: memref<32x16xbf16, #tpu.memory_space<vmem>>, %arg2: memref<32x16xbf16, #tpu.memory_space<vmem>>, %arg3: memref<32x16xbf16, #tpu.memory_space<vmem>>, %arg4: memref<32x16xbf16, #tpu.memory_space<vmem>>, %arg5: memref<32x16xbf16, #tpu.memory_space<vmem>>) attributes {dimension_semantics = [#tpu.dimension_semantics<parallel>], iteration_bounds = array<i64: 1>, scalar_prefetch = 0 : i64, scratch_operands = 0 : i64, tpu.core_type = #tpu.core_type<tc>, window_params = [{transform_indices = @transform_0, window_bounds = array<i64: 32, 16>}, {transform_indices = @transform_1, window_bounds = array<i64: 32, 16>}, {transform_indices = @transform_2, window_bounds = array<i64: 32, 16>}, {transform_indices = @transform_3, window_bounds = array<i64: 32, 16>}, {transform_indices = @transform_4, window_bounds = array<i64: 32, 16>}]} {
    %c0 = arith.constant 0 : index
    %c0_0 = arith.constant 0 : index
    %0 = vector.load %arg1[%c0, %c0_0] : memref<32x16xbf16, #tpu.memory_space<vmem>>, vector<32x16xbf16>
    %1 = arith.extf %0 : vector<32x16xbf16> to vector<32x16xf32>
    %c0_1 = arith.constant 0 : index
    %c0_2 = arith.constant 0 : index
    %2 = vector.load %arg2[%c0_1, %c0_2] : memref<32x16xbf16, #tpu.memory_space<vmem>>, vector<32x16xbf16>
    %3 = arith.extf %2 : vector<32x16xbf16> to vector<32x16xf32>
    %4 = arith.addf %1, %3 : vector<32x16xf32>
    %c0_3 = arith.constant 0 : index
    %c0_4 = arith.constant 0 : index
    %5 = vector.load %arg3[%c0_3, %c0_4] : memref<32x16xbf16, #tpu.memory_space<vmem>>, vector<32x16xbf16>
    %6 = arith.extf %5 : vector<32x16xbf16> to vector<32x16xf32>
    %7 = arith.addf %4, %6 : vector<32x16xf32>
    %c0_5 = arith.constant 0 : index
    %c0_6 = arith.constant 0 : index
    %8 = vector.load %arg4[%c0_5, %c0_6] : memref<32x16xbf16, #tpu.memory_space<vmem>>, vector<32x16xbf16>
    %9 = arith.extf %8 : vector<32x16xbf16> to vector<32x16xf32>
    %10 = arith.addf %7, %9 : vector<32x16xf32>
    %cst = arith.constant 2.500000e-01 : f32
    %11 = vector.broadcast %cst : f32 to vector<32x16xf32>
    %12 = arith.mulf %10, %11 : vector<32x16xf32>
    %13 = arith.truncf %12 : vector<32x16xf32> to vector<32x16xbf16>
    %c0_7 = arith.constant 0 : index
    %c0_8 = arith.constant 0 : index
    %14 = vector.load %arg5[%c0_7, %c0_8] : memref<32x16xbf16, #tpu.memory_space<vmem>>, vector<32x16xbf16>
    tpu.vector_store %arg5[%c0_7, %c0_8], %13 {strides = array<i32>} : memref<32x16xbf16, #tpu.memory_space<vmem>>, vector<32x16xbf16>,
    return
  }
  func.func @transform_0(%arg0: i32) -> (i32, i32) {
    %c0_i32 = arith.constant 0 : i32
    %c0_i32_0 = arith.constant 0 : i32
    return %arg0, %c0_i32 : i32, i32
  }
  func.func @transform_1(%arg0: i32) -> (i32, i32) {
    %c0_i32 = arith.constant 0 : i32
    %c0_i32_0 = arith.constant 0 : i32
    return %arg0, %c0_i32 : i32, i32
  }
  func.func @transform_2(%arg0: i32) -> (i32, i32) {
    %c0_i32 = arith.constant 0 : i32
    %c0_i32_0 = arith.constant 0 : i32
    return %arg0, %c0_i32 : i32, i32
  }
  func.func @transform_3(%arg0: i32) -> (i32, i32) {
    %c0_i32 = arith.constant 0 : i32
    %c0_i32_0 = arith.constant 0 : i32
    return %arg0, %c0_i32 : i32, i32
  }
  func.func @transform_4(%arg0: i32) -> (i32, i32) {
    %c0_i32 = arith.constant 0 : i32
    %c0_i32_0 = arith.constant 0 : i32
    return %arg0, %c0_i32 : i32, i32
  }
}

module attributes {stable_mosaic.version = 11 : i64} {
  func.func @_fused_mm_kernel(%arg0: i32, %arg1: memref<32x16xbf16, #tpu.memory_space<vmem>>, %arg2: memref<16x32xbf16, #tpu.memory_space<vmem>>, %arg3: memref<1x16xf32, #tpu.memory_space<vmem>>, %arg4: memref<1x16xf32, #tpu.memory_space<vmem>>, %arg5: memref<1x32xf32, #tpu.memory_space<vmem>>, %arg6: memref<1x32xf32, #tpu.memory_space<vmem>>, %arg7: memref<32x32xbf16, #tpu.memory_space<vmem>>) attributes {dimension_semantics = [#tpu.dimension_semantics<parallel>], iteration_bounds = array<i64: 1>, scalar_prefetch = 0 : i64, scratch_operands = 0 : i64, tpu.core_type = #tpu.core_type<tc>, window_params = [{transform_indices = @transform_0, window_bounds = array<i64: 32, 16>}, {pipeline_mode = #tpu.pipeline_mode<synchronous>, transform_indices = @transform_1, window_bounds = array<i64: 16, 32>}, {pipeline_mode = #tpu.pipeline_mode<synchronous>, transform_indices = @transform_2, window_bounds = array<i64: 1, 16>}, {pipeline_mode = #tpu.pipeline_mode<synchronous>, transform_indices = @transform_3, window_bounds = array<i64: 1, 16>}, {pipeline_mode = #tpu.pipeline_mode<synchronous>, transform_indices = @transform_4, window_bounds = array<i64: 1, 32>}, {pipeline_mode = #tpu.pipeline_mode<synchronous>, transform_indices = @transform_5, window_bounds = array<i64: 1, 32>}, {transform_indices = @transform_6, window_bounds = array<i64: 32, 32>}]} {
    %c0 = arith.constant 0 : index
    %c0_0 = arith.constant 0 : index
    %0 = vector.load %arg3[%c0, %c0_0] : memref<1x16xf32, #tpu.memory_space<vmem>>, vector<1x16xf32>
    %c0_1 = arith.constant 0 : index
    %c0_2 = arith.constant 0 : index
    %1 = vector.load %arg1[%c0_1, %c0_2] : memref<32x16xbf16, #tpu.memory_space<vmem>>, vector<32x16xbf16>
    %2 = arith.extf %1 : vector<32x16xbf16> to vector<32x16xf32>
    %3 = vector.broadcast %0 : vector<1x16xf32> to vector<32x16xf32>
    %4 = arith.mulf %3, %2 : vector<32x16xf32>
    %c0_3 = arith.constant 0 : index
    %c0_4 = arith.constant 0 : index
    %5 = vector.load %arg4[%c0_3, %c0_4] : memref<1x16xf32, #tpu.memory_space<vmem>>, vector<1x16xf32>
    %6 = vector.broadcast %5 : vector<1x16xf32> to vector<32x16xf32>
    %7 = arith.addf %4, %6 : vector<32x16xf32>
    %cst = arith.constant 0.000000e+00 : f32
    %8 = vector.broadcast %cst : f32 to vector<32x16xf32>
    %9 = arith.maximumf %7, %8 : vector<32x16xf32>
    %10 = arith.truncf %9 : vector<32x16xf32> to vector<32x16xbf16>
    %c0_5 = arith.constant 0 : index
    %c0_6 = arith.constant 0 : index
    %11 = vector.load %arg2[%c0_5, %c0_6] : memref<16x32xbf16, #tpu.memory_space<vmem>>, vector<16x32xbf16>
    %cst_7 = arith.constant dense<0.000000e+00> : vector<32x32xf32>
    %12 = tpu.matmul %10, %11, %cst_7 {dimension_numbers = #tpu.dot_dimension_numbers<[1], [0], [0], [1], [0, 0, 1, 1], [], []>} : vector<32x16xbf16>, vector<16x32xbf16>, vector<32x32xf32> -> vector<32x32xf32>
    %c0_8 = arith.constant 0 : index
    %c0_9 = arith.constant 0 : index
    %13 = vector.load %arg5[%c0_8, %c0_9] : memref<1x32xf32, #tpu.memory_space<vmem>>, vector<1x32xf32>
    %14 = vector.broadcast %13 : vector<1x32xf32> to vector<32x32xf32>
    %15 = arith.mulf %12, %14 : vector<32x32xf32>
    %c0_10 = arith.constant 0 : index
    %c0_11 = arith.constant 0 : index
    %16 = vector.load %arg6[%c0_10, %c0_11] : memref<1x32xf32, #tpu.memory_space<vmem>>, vector<1x32xf32>
    %17 = vector.broadcast %16 : vector<1x32xf32> to vector<32x32xf32>
    %18 = arith.addf %15, %17 : vector<32x32xf32>
    %cst_12 = arith.constant 0.000000e+00 : f32
    %19 = vector.broadcast %cst_12 : f32 to vector<32x32xf32>
    %20 = arith.maximumf %18, %19 : vector<32x32xf32>
    %21 = arith.truncf %20 : vector<32x32xf32> to vector<32x32xbf16>
    %c0_13 = arith.constant 0 : index
    %c0_14 = arith.constant 0 : index
    %22 = vector.load %arg7[%c0_13, %c0_14] : memref<32x32xbf16, #tpu.memory_space<vmem>>, vector<32x32xbf16>
    tpu.vector_store %arg7[%c0_13, %c0_14], %21 {strides = array<i32>} : memref<32x32xbf16, #tpu.memory_space<vmem>>, vector<32x32xbf16>,
    return
  }
  func.func @transform_0(%arg0: i32) -> (i32, i32) {
    %c0_i32 = arith.constant 0 : i32
    %c0_i32_0 = arith.constant 0 : i32
    return %arg0, %c0_i32 : i32, i32
  }
  func.func @transform_1(%arg0: i32) -> (i32, i32) {
    %c0_i32 = arith.constant 0 : i32
    %c0_i32_0 = arith.constant 0 : i32
    %c0_i32_1 = arith.constant 0 : i32
    return %c0_i32, %c0_i32_0 : i32, i32
  }
  func.func @transform_2(%arg0: i32) -> (i32, i32) {
    %c0_i32 = arith.constant 0 : i32
    %c0_i32_0 = arith.constant 0 : i32
    %c0_i32_1 = arith.constant 0 : i32
    return %c0_i32, %c0_i32_0 : i32, i32
  }
  func.func @transform_3(%arg0: i32) -> (i32, i32) {
    %c0_i32 = arith.constant 0 : i32
    %c0_i32_0 = arith.constant 0 : i32
    %c0_i32_1 = arith.constant 0 : i32
    return %c0_i32, %c0_i32_0 : i32, i32
  }
  func.func @transform_4(%arg0: i32) -> (i32, i32) {
    %c0_i32 = arith.constant 0 : i32
    %c0_i32_0 = arith.constant 0 : i32
    %c0_i32_1 = arith.constant 0 : i32
    return %c0_i32, %c0_i32_0 : i32, i32
  }
  func.func @transform_5(%arg0: i32) -> (i32, i32) {
    %c0_i32 = arith.constant 0 : i32
    %c0_i32_0 = arith.constant 0 : i32
    %c0_i32_1 = arith.constant 0 : i32
    return %c0_i32, %c0_i32_0 : i32, i32
  }
  func.func @transform_6(%arg0: i32) -> (i32, i32) {
    %c0_i32 = arith.constant 0 : i32
    %c0_i32_0 = arith.constant 0 : i32
    return %arg0, %c0_i32 : i32, i32
  }
}

module attributes {stable_mosaic.version = 11 : i64} {
  func.func @_fused_mm_kernel(%arg0: i32, %arg1: memref<32x288xbf16, #tpu.memory_space<vmem>>, %arg2: memref<288x8xbf16, #tpu.memory_space<vmem>>, %arg3: memref<32x8xbf16, #tpu.memory_space<vmem>>) attributes {dimension_semantics = [#tpu.dimension_semantics<parallel>], iteration_bounds = array<i64: 1>, scalar_prefetch = 0 : i64, scratch_operands = 0 : i64, tpu.core_type = #tpu.core_type<tc>, window_params = [{transform_indices = @transform_0, window_bounds = array<i64: 32, 288>}, {pipeline_mode = #tpu.pipeline_mode<synchronous>, transform_indices = @transform_1, window_bounds = array<i64: 288, 8>}, {transform_indices = @transform_2, window_bounds = array<i64: 32, 8>}]} {
    %c0 = arith.constant 0 : index
    %c0_0 = arith.constant 0 : index
    %0 = vector.load %arg1[%c0, %c0_0] : memref<32x288xbf16, #tpu.memory_space<vmem>>, vector<32x288xbf16>
    %c0_1 = arith.constant 0 : index
    %c0_2 = arith.constant 0 : index
    %1 = vector.load %arg2[%c0_1, %c0_2] : memref<288x8xbf16, #tpu.memory_space<vmem>>, vector<288x8xbf16>
    %cst = arith.constant dense<0.000000e+00> : vector<32x8xf32>
    %2 = tpu.matmul %0, %1, %cst {dimension_numbers = #tpu.dot_dimension_numbers<[1], [0], [0], [1], [0, 0, 1, 1], [], []>} : vector<32x288xbf16>, vector<288x8xbf16>, vector<32x8xf32> -> vector<32x8xf32>
    %3 = arith.truncf %2 : vector<32x8xf32> to vector<32x8xbf16>
    %c0_3 = arith.constant 0 : index
    %c0_4 = arith.constant 0 : index
    %4 = vector.load %arg3[%c0_3, %c0_4] : memref<32x8xbf16, #tpu.memory_space<vmem>>, vector<32x8xbf16>
    tpu.vector_store %arg3[%c0_3, %c0_4], %3 {strides = array<i32>} : memref<32x8xbf16, #tpu.memory_space<vmem>>, vector<32x8xbf16>,
    return
  }
  func.func @transform_0(%arg0: i32) -> (i32, i32) {
    %c0_i32 = arith.constant 0 : i32
    %c0_i32_0 = arith.constant 0 : i32
    return %arg0, %c0_i32 : i32, i32
  }
  func.func @transform_1(%arg0: i32) -> (i32, i32) {
    %c0_i32 = arith.constant 0 : i32
    %c0_i32_0 = arith.constant 0 : i32
    %c0_i32_1 = arith.constant 0 : i32
    return %c0_i32, %c0_i32_0 : i32, i32
  }
  func.func @transform_2(%arg0: i32) -> (i32, i32) {
    %c0_i32 = arith.constant 0 : i32
    %c0_i32_0 = arith.constant 0 : i32
    return %arg0, %c0_i32 : i32, i32
  }
}

module attributes {stable_mosaic.version = 11 : i64} {
  func.func @_fused_mm_kernel(%arg0: i32, %arg1: memref<32x24xbf16, #tpu.memory_space<vmem>>, %arg2: memref<24x32xbf16, #tpu.memory_space<vmem>>, %arg3: memref<1x24xf32, #tpu.memory_space<vmem>>, %arg4: memref<1x24xf32, #tpu.memory_space<vmem>>, %arg5: memref<1x32xf32, #tpu.memory_space<vmem>>, %arg6: memref<1x32xf32, #tpu.memory_space<vmem>>, %arg7: memref<32x32xbf16, #tpu.memory_space<vmem>>) attributes {dimension_semantics = [#tpu.dimension_semantics<parallel>], iteration_bounds = array<i64: 1>, scalar_prefetch = 0 : i64, scratch_operands = 0 : i64, tpu.core_type = #tpu.core_type<tc>, window_params = [{transform_indices = @transform_0, window_bounds = array<i64: 32, 24>}, {pipeline_mode = #tpu.pipeline_mode<synchronous>, transform_indices = @transform_1, window_bounds = array<i64: 24, 32>}, {pipeline_mode = #tpu.pipeline_mode<synchronous>, transform_indices = @transform_2, window_bounds = array<i64: 1, 24>}, {pipeline_mode = #tpu.pipeline_mode<synchronous>, transform_indices = @transform_3, window_bounds = array<i64: 1, 24>}, {pipeline_mode = #tpu.pipeline_mode<synchronous>, transform_indices = @transform_4, window_bounds = array<i64: 1, 32>}, {pipeline_mode = #tpu.pipeline_mode<synchronous>, transform_indices = @transform_5, window_bounds = array<i64: 1, 32>}, {transform_indices = @transform_6, window_bounds = array<i64: 32, 32>}]} {
    %c0 = arith.constant 0 : index
    %c0_0 = arith.constant 0 : index
    %0 = vector.load %arg3[%c0, %c0_0] : memref<1x24xf32, #tpu.memory_space<vmem>>, vector<1x24xf32>
    %c0_1 = arith.constant 0 : index
    %c0_2 = arith.constant 0 : index
    %1 = vector.load %arg1[%c0_1, %c0_2] : memref<32x24xbf16, #tpu.memory_space<vmem>>, vector<32x24xbf16>
    %2 = arith.extf %1 : vector<32x24xbf16> to vector<32x24xf32>
    %3 = vector.broadcast %0 : vector<1x24xf32> to vector<32x24xf32>
    %4 = arith.mulf %3, %2 : vector<32x24xf32>
    %c0_3 = arith.constant 0 : index
    %c0_4 = arith.constant 0 : index
    %5 = vector.load %arg4[%c0_3, %c0_4] : memref<1x24xf32, #tpu.memory_space<vmem>>, vector<1x24xf32>
    %6 = vector.broadcast %5 : vector<1x24xf32> to vector<32x24xf32>
    %7 = arith.addf %4, %6 : vector<32x24xf32>
    %cst = arith.constant 0.000000e+00 : f32
    %8 = vector.broadcast %cst : f32 to vector<32x24xf32>
    %9 = arith.maximumf %7, %8 : vector<32x24xf32>
    %10 = arith.truncf %9 : vector<32x24xf32> to vector<32x24xbf16>
    %c0_5 = arith.constant 0 : index
    %c0_6 = arith.constant 0 : index
    %11 = vector.load %arg2[%c0_5, %c0_6] : memref<24x32xbf16, #tpu.memory_space<vmem>>, vector<24x32xbf16>
    %cst_7 = arith.constant dense<0.000000e+00> : vector<32x32xf32>
    %12 = tpu.matmul %10, %11, %cst_7 {dimension_numbers = #tpu.dot_dimension_numbers<[1], [0], [0], [1], [0, 0, 1, 1], [], []>} : vector<32x24xbf16>, vector<24x32xbf16>, vector<32x32xf32> -> vector<32x32xf32>
    %c0_8 = arith.constant 0 : index
    %c0_9 = arith.constant 0 : index
    %13 = vector.load %arg5[%c0_8, %c0_9] : memref<1x32xf32, #tpu.memory_space<vmem>>, vector<1x32xf32>
    %14 = vector.broadcast %13 : vector<1x32xf32> to vector<32x32xf32>
    %15 = arith.mulf %12, %14 : vector<32x32xf32>
    %c0_10 = arith.constant 0 : index
    %c0_11 = arith.constant 0 : index
    %16 = vector.load %arg6[%c0_10, %c0_11] : memref<1x32xf32, #tpu.memory_space<vmem>>, vector<1x32xf32>
    %17 = vector.broadcast %16 : vector<1x32xf32> to vector<32x32xf32>
    %18 = arith.addf %15, %17 : vector<32x32xf32>
    %cst_12 = arith.constant 0.000000e+00 : f32
    %19 = vector.broadcast %cst_12 : f32 to vector<32x32xf32>
    %20 = arith.maximumf %18, %19 : vector<32x32xf32>
    %21 = arith.truncf %20 : vector<32x32xf32> to vector<32x32xbf16>
    %c0_13 = arith.constant 0 : index
    %c0_14 = arith.constant 0 : index
    %22 = vector.load %arg7[%c0_13, %c0_14] : memref<32x32xbf16, #tpu.memory_space<vmem>>, vector<32x32xbf16>
    tpu.vector_store %arg7[%c0_13, %c0_14], %21 {strides = array<i32>} : memref<32x32xbf16, #tpu.memory_space<vmem>>, vector<32x32xbf16>,
    return
  }
  func.func @transform_0(%arg0: i32) -> (i32, i32) {
    %c0_i32 = arith.constant 0 : i32
    %c0_i32_0 = arith.constant 0 : i32
    return %arg0, %c0_i32 : i32, i32
  }
  func.func @transform_1(%arg0: i32) -> (i32, i32) {
    %c0_i32 = arith.constant 0 : i32
    %c0_i32_0 = arith.constant 0 : i32
    %c0_i32_1 = arith.constant 0 : i32
    return %c0_i32, %c0_i32_0 : i32, i32
  }
  func.func @transform_2(%arg0: i32) -> (i32, i32) {
    %c0_i32 = arith.constant 0 : i32
    %c0_i32_0 = arith.constant 0 : i32
    %c0_i32_1 = arith.constant 0 : i32
    return %c0_i32, %c0_i32_0 : i32, i32
  }
  func.func @transform_3(%arg0: i32) -> (i32, i32) {
    %c0_i32 = arith.constant 0 : i32
    %c0_i32_0 = arith.constant 0 : i32
    %c0_i32_1 = arith.constant 0 : i32
    return %c0_i32, %c0_i32_0 : i32, i32
  }
  func.func @transform_4(%arg0: i32) -> (i32, i32) {
    %c0_i32 = arith.constant 0 : i32
    %c0_i32_0 = arith.constant 0 : i32
    %c0_i32_1 = arith.constant 0 : i32
    return %c0_i32, %c0_i32_0 : i32, i32
  }
  func.func @transform_5(%arg0: i32) -> (i32, i32) {
    %c0_i32 = arith.constant 0 : i32
    %c0_i32_0 = arith.constant 0 : i32
    %c0_i32_1 = arith.constant 0 : i32
    return %c0_i32, %c0_i32_0 : i32, i32
  }
  func.func @transform_6(%arg0: i32) -> (i32, i32) {
    %c0_i32 = arith.constant 0 : i32
    %c0_i32_0 = arith.constant 0 : i32
    return %arg0, %c0_i32 : i32, i32
  }
}

module attributes {stable_mosaic.version = 11 : i64} {
  func.func @_tail_kernel(%arg0: i32, %arg1: memref<2x16x32xbf16, #tpu.memory_space<vmem>>, %arg2: memref<1x32xf32, #tpu.memory_space<vmem>>, %arg3: memref<1x32xf32, #tpu.memory_space<vmem>>, %arg4: memref<32x18xf32, #tpu.memory_space<vmem>>, %arg5: memref<1x18xf32, #tpu.memory_space<vmem>>, %arg6: memref<2x18xf32, #tpu.memory_space<vmem>>, %arg7: memref<1x2xf32, #tpu.memory_space<vmem>>) attributes {dimension_semantics = [#tpu.dimension_semantics<arbitrary>], iteration_bounds = array<i64: 1>, scalar_prefetch = 0 : i64, scratch_operands = 0 : i64, tpu.core_type = #tpu.core_type<tc>, window_params = [{pipeline_mode = #tpu.pipeline_mode<synchronous>, transform_indices = @transform_0, window_bounds = array<i64: 2, 16, 32>}, {pipeline_mode = #tpu.pipeline_mode<synchronous>, transform_indices = @transform_1, window_bounds = array<i64: 1, 32>}, {pipeline_mode = #tpu.pipeline_mode<synchronous>, transform_indices = @transform_2, window_bounds = array<i64: 1, 32>}, {pipeline_mode = #tpu.pipeline_mode<synchronous>, transform_indices = @transform_3, window_bounds = array<i64: 32, 18>}, {pipeline_mode = #tpu.pipeline_mode<synchronous>, transform_indices = @transform_4, window_bounds = array<i64: 1, 18>}, {pipeline_mode = #tpu.pipeline_mode<synchronous>, transform_indices = @transform_5, window_bounds = array<i64: 2, 18>}, {pipeline_mode = #tpu.pipeline_mode<synchronous>, transform_indices = @transform_6, window_bounds = array<i64: 1, 2>}]} {
    %c0 = arith.constant 0 : index
    %c0_0 = arith.constant 0 : index
    %c0_1 = arith.constant 0 : index
    %0 = vector.load %arg1[%c0, %c0_0, %c0_1] : memref<2x16x32xbf16, #tpu.memory_space<vmem>>, vector<2x16x32xbf16>
    %1 = arith.extf %0 : vector<2x16x32xbf16> to vector<2x16x32xf32>
    %c0_2 = arith.constant 0 : index
    %c0_3 = arith.constant 0 : index
    %2 = vector.load %arg2[%c0_2, %c0_3] : memref<1x32xf32, #tpu.memory_space<vmem>>, vector<1x32xf32>
    %3 = vector.shape_cast %2 : vector<1x32xf32> to vector<1x1x32xf32>
    %4 = vector.broadcast %3 : vector<1x1x32xf32> to vector<2x16x32xf32>
    %5 = arith.mulf %1, %4 : vector<2x16x32xf32>
    %c0_4 = arith.constant 0 : index
    %c0_5 = arith.constant 0 : index
    %6 = vector.load %arg3[%c0_4, %c0_5] : memref<1x32xf32, #tpu.memory_space<vmem>>, vector<1x32xf32>
    %7 = vector.shape_cast %6 : vector<1x32xf32> to vector<1x1x32xf32>
    %8 = vector.broadcast %7 : vector<1x1x32xf32> to vector<2x16x32xf32>
    %9 = arith.addf %5, %8 : vector<2x16x32xf32>
    %cst = arith.constant 0.000000e+00 : f32
    %10 = vector.broadcast %cst : f32 to vector<2x16x32xf32>
    %11 = arith.maximumf %9, %10 : vector<2x16x32xf32>
    %cst_6 = arith.constant dense<0.000000e+00> : vector<2x32xf32>
    %12 = vector.multi_reduction <add>, %11, %cst_6 [1] : vector<2x16x32xf32> to vector<2x32xf32>
    %cst_7 = arith.constant 1.600000e+01 : f32
    %13 = vector.broadcast %cst_7 : f32 to vector<2x32xf32>
    %14 = arith.divf %12, %13 : vector<2x32xf32>
    %c0_8 = arith.constant 0 : index
    %c0_9 = arith.constant 0 : index
    %15 = vector.load %arg4[%c0_8, %c0_9] : memref<32x18xf32, #tpu.memory_space<vmem>>, vector<32x18xf32>
    %cst_10 = arith.constant dense<0.000000e+00> : vector<2x18xf32>
    %16 = tpu.matmul %14, %15, %cst_10 {dimension_numbers = #tpu.dot_dimension_numbers<[1], [0], [0], [1], [0, 0, 1, 1], [], []>} : vector<2x32xf32>, vector<32x18xf32>, vector<2x18xf32> -> vector<2x18xf32>
    %c0_11 = arith.constant 0 : index
    %c0_12 = arith.constant 0 : index
    %17 = vector.load %arg5[%c0_11, %c0_12] : memref<1x18xf32, #tpu.memory_space<vmem>>, vector<1x18xf32>
    %18 = vector.broadcast %17 : vector<1x18xf32> to vector<2x18xf32>
    %19 = arith.addf %16, %18 : vector<2x18xf32>
    %c0_13 = arith.constant 0 : index
    %c0_14 = arith.constant 0 : index
    %20 = vector.load %arg6[%c0_13, %c0_14] : memref<2x18xf32, #tpu.memory_space<vmem>>, vector<2x18xf32>
    tpu.vector_store %arg6[%c0_13, %c0_14], %19 {strides = array<i32>} : memref<2x18xf32, #tpu.memory_space<vmem>>, vector<2x18xf32>,
    %21 = vector.extract_strided_slice %19 {offsets = [0, 0], sizes = [1, 18], strides = [1, 1]} : vector<2x18xf32> to vector<1x18xf32>
    %22 = tpu.iota {dimensions = array<i32: 1>} : vector<1x18xi32>
    %c16_i32 = arith.constant 16 : i32
    %23 = vector.broadcast %c16_i32 : i32 to vector<1x18xi32>
    %24 = arith.cmpi eq, %22, %23 : vector<1x18xi32>
    %cst_15 = arith.constant 0.000000e+00 : f32
    %25 = vector.broadcast %cst_15 : f32 to vector<1x18xf32>
    %26 = arith.select %24, %21, %25 : vector<1x18xi1>, vector<1x18xf32>
    %cst_16 = arith.constant dense<0.000000e+00> : vector<1xf32>
    %27 = vector.multi_reduction <add>, %26, %cst_16 [1] : vector<1x18xf32> to vector<1xf32>
    %28 = vector.shape_cast %27 : vector<1xf32> to vector<1x1xf32>
    %cst_17 = arith.constant 0.870524823 : f32
    %29 = vector.broadcast %cst_17 : f32 to vector<1x1xf32>
    %30 = arith.mulf %28, %29 : vector<1x1xf32>
    %cst_18 = arith.constant 3.41374373 : f32
    %31 = vector.broadcast %cst_18 : f32 to vector<1x1xf32>
    %32 = arith.addf %30, %31 : vector<1x1xf32>
    %cst_19 = arith.constant 0.000000e+00 : f32
    %cst_20 = arith.constant 8.000000e+00 : f32
    %33 = vector.broadcast %cst_19 : f32 to vector<1x1xf32>
    %34 = arith.maximumf %33, %32 : vector<1x1xf32>
    %35 = vector.broadcast %cst_20 : f32 to vector<1x1xf32>
    %36 = arith.minimumf %35, %34 : vector<1x1xf32>
    %cst_21 = arith.constant 0.548442304 : f32
    %37 = vector.broadcast %cst_21 : f32 to vector<1x1xf32>
    %38 = arith.mulf %28, %37 : vector<1x1xf32>
    %cst_22 = arith.constant 2.55359769 : f32
    %39 = vector.broadcast %cst_22 : f32 to vector<1x1xf32>
    %40 = arith.addf %38, %39 : vector<1x1xf32>
    %cst_23 = arith.constant 0.000000e+00 : f32
    %cst_24 = arith.constant 6.000000e+00 : f32
    %41 = vector.broadcast %cst_23 : f32 to vector<1x1xf32>
    %42 = arith.maximumf %41, %40 : vector<1x1xf32>
    %43 = vector.broadcast %cst_24 : f32 to vector<1x1xf32>
    %44 = arith.minimumf %43, %42 : vector<1x1xf32>
    %45 = tpu.concatenate %36, %44 in 1 : vector<1x1xf32>, vector<1x1xf32> -> vector<1x2xf32>
    %c0_25 = arith.constant 0 : index
    %c0_26 = arith.constant 0 : index
    %46 = vector.load %arg7[%c0_25, %c0_26] : memref<1x2xf32, #tpu.memory_space<vmem>>, vector<1x2xf32>
    tpu.vector_store %arg7[%c0_25, %c0_26], %45 {strides = array<i32>} : memref<1x2xf32, #tpu.memory_space<vmem>>, vector<1x2xf32>,
    return
  }
  func.func @transform_0(%arg0: i32) -> (i32, i32, i32) {
    %c0_i32 = arith.constant 0 : i32
    %c0_i32_0 = arith.constant 0 : i32
    %c0_i32_1 = arith.constant 0 : i32
    %c0_i32_2 = arith.constant 0 : i32
    return %c0_i32, %c0_i32_0, %c0_i32_1 : i32, i32, i32
  }
  func.func @transform_1(%arg0: i32) -> (i32, i32) {
    %c0_i32 = arith.constant 0 : i32
    %c0_i32_0 = arith.constant 0 : i32
    %c0_i32_1 = arith.constant 0 : i32
    return %c0_i32, %c0_i32_0 : i32, i32
  }
  func.func @transform_2(%arg0: i32) -> (i32, i32) {
    %c0_i32 = arith.constant 0 : i32
    %c0_i32_0 = arith.constant 0 : i32
    %c0_i32_1 = arith.constant 0 : i32
    return %c0_i32, %c0_i32_0 : i32, i32
  }
  func.func @transform_3(%arg0: i32) -> (i32, i32) {
    %c0_i32 = arith.constant 0 : i32
    %c0_i32_0 = arith.constant 0 : i32
    %c0_i32_1 = arith.constant 0 : i32
    return %c0_i32, %c0_i32_0 : i32, i32
  }
  func.func @transform_4(%arg0: i32) -> (i32, i32) {
    %c0_i32 = arith.constant 0 : i32
    %c0_i32_0 = arith.constant 0 : i32
    %c0_i32_1 = arith.constant 0 : i32
    return %c0_i32, %c0_i32_0 : i32, i32
  }
  func.func @transform_5(%arg0: i32) -> (i32, i32) {
    %c0_i32 = arith.constant 0 : i32
    %c0_i32_0 = arith.constant 0 : i32
    %c0_i32_1 = arith.constant 0 : i32
    return %c0_i32, %c0_i32_0 : i32, i32
  }
  func.func @transform_6(%arg0: i32) -> (i32, i32) {
    %c0_i32 = arith.constant 0 : i32
    %c0_i32_0 = arith.constant 0 : i32
    %c0_i32_1 = arith.constant 0 : i32
    return %c0_i32, %c0_i32_0 : i32, i32
  }
}

</mosaic_0001>

<llo_original>
// kernel: pneumonia_severity_net.13
$region0: #{pneumonia_severity_net.13}
  #allocation0 [shape = 'u32[]', space=smem, size = 0x4, offset = 0x4, fixed_abs, tag = 'smem constant byte address 0x4 - core index']
  #allocation1 [shape = 'u32[144,128]{1,0:T(1,128)}', space=vmem, size = 0x12000, scoped, tag = 'internal scratch']
  %s0 = inlined_call_operand.vmem [shape: bf16[512,49], index: 0, kind: input, shape index: {}]
  %s1 = inlined_call_operand.vmem [shape: bf16[49,16], index: 1, kind: input, shape index: {}]
  %s2 = inlined_call_operand.vmem [shape: f32[1,16], index: 2, kind: input, shape index: {}]
  %s3 = inlined_call_operand.vmem [shape: f32[1,16], index: 3, kind: input, shape index: {}]
  %s4 = inlined_call_operand.vmem [shape: bf16[512,16], index: 4, kind: output, shape index: {}]
  %s5 = sld [smem:[#allocation0]]
  $region49: #{pneumonia_severity_net.13} parent=0
    _
  %s7 = ssub.s32 1, %s5
  %s8 = scalar_select 0, %s7, %s5
  loop: start=0, step=1, limit=4
  $region2: #{pneumonia_severity_net.13} parent=0 // loop_pre_header
    _
  $region3: #{pneumonia_severity_net.13} parent=0 // loop_header
    %s10 = sphi 0, %s14
    %p11 = scmp.ge.s32.totalorder %s10, 4
    %s20 = sphi 0, %s22
    %s23 = sphi 0, %s20
    %s24 = sphi 0, %s23
    %s40 = sphi 0, %s24
    %s44 = sphi 0, %s44
    %s46 = sphi 0, %s44
    %s47 = sphi 0, %s46
    %s61 = sphi 0, %s47
    %s65 = sphi 0, %s65
    %s67 = sphi 0, %s65
    %s68 = sphi 0, %s67
    %s82 = sphi 0, %s68
    %s86 = sphi 0, %s86
    %s88 = sphi 0, %s86
    %s89 = sphi 0, %s88
    %s103 = sphi 0, %s89
    %s109 = sphi 0, %s111
    %s112 = sphi 0, %s109
    %s113 = sphi 0, %s112
    %s129 = sphi 0, %s113
  $region4: #{pneumonia_severity_net.13} parent=0 // loop_header_branch
    %13 = sbr.rel (%p11) target = $region8
  $region5: #{pneumonia_severity_net.13} parent=0 // loop_body
    %s15 = ssub.s32 %s10, 1
    %s16 = ssub.s32 %s10, 2
    %s17 = sadd.s32 %s10, 1
    %s18 = ssub.s32 %s10, %s17
    %p19 = scmp.eq.s32.totalorder %s18, 0
    %s21 = sadd.s32 %s20, 1
    %s22 = scalar_select %p19, %s20, %s21
    %p25 = pneg %p19
    %p26 = scmp.eq.s32.totalorder %s10, 1
    %p27 = por %p25, %p26
    %p28 = scmp.ne.s32.totalorder %s20, %s23
    %p29 = scmp.eq.s32.totalorder %s10, 0
    %p30 = por %p28, %p29
    %p31 = scmp.ne.s32.totalorder %s20, %s23
    %p32 = scmp.eq.s32.totalorder %s15, 1
    %p33 = por %p31, %p32
    %p34 = scmp.ne.s32.totalorder %s23, %s24
    %p35 = scmp.eq.s32.totalorder %s15, 0
    %p36 = por %p34, %p35
    %p37 = scmp.ne.s32.totalorder %s23, %s24
    %p38 = scmp.eq.s32.totalorder %s16, 1
    %p39 = por %p37, %p38
    %p41 = scmp.ne.s32.totalorder %s24, %s40
    %p42 = scmp.eq.s32.totalorder %s16, 0
    %p43 = por %p41, %p42
    %s45 = sadd.s32 %s44, 1
    %p48 = scmp.eq.s32.totalorder %s10, 1
    %p49 = scmp.ne.s32.totalorder %s44, %s46
    %p50 = scmp.eq.s32.totalorder %s10, 0
    %p51 = por %p49, %p50
    %p52 = scmp.ne.s32.totalorder %s44, %s46
    %p53 = scmp.eq.s32.totalorder %s15, 1
    %p54 = por %p52, %p53
    %p55 = scmp.ne.s32.totalorder %s46, %s47
    %p56 = scmp.eq.s32.totalorder %s15, 0
    %p57 = por %p55, %p56
    %p58 = scmp.ne.s32.totalorder %s46, %s47
    %p59 = scmp.eq.s32.totalorder %s16, 1
    %p60 = por %p58, %p59
    %p62 = scmp.ne.s32.totalorder %s47, %s61
    %p63 = scmp.eq.s32.totalorder %s16, 0
    %p64 = por %p62, %p63
    %s66 = sadd.s32 %s65, 1
    %p69 = scmp.eq.s32.totalorder %s10, 1
    %p70 = scmp.ne.s32.totalorder %s65, %s67
    %p71 = scmp.eq.s32.totalorder %s10, 0
    %p72 = por %p70, %p71
    %p73 = scmp.ne.s32.totalorder %s65, %s67
    %p74 = scmp.eq.s32.totalorder %s15, 1
    %p75 = por %p73, %p74
    %p76 = scmp.ne.s32.totalorder %s67, %s68
    %p77 = scmp.eq.s32.totalorder %s15, 0
    %p78 = por %p76, %p77
    %p79 = scmp.ne.s32.totalorder %s67, %s68
    %p80 = scmp.eq.s32.totalorder %s16, 1
    %p81 = por %p79, %p80
    %p83 = scmp.ne.s32.totalorder %s68, %s82
    %p84 = scmp.eq.s32.totalorder %s16, 0
    %p85 = por %p83, %p84
    %s87 = sadd.s32 %s86, 1
    %p90 = scmp.eq.s32.totalorder %s10, 1
    %p91 = scmp.ne.s32.totalorder %s86, %s88
    %p92 = scmp.eq.s32.totalorder %s10, 0
    %p93 = por %p91, %p92
    %p94 = scmp.ne.s32.totalorder %s86, %s88
    %p95 = scmp.eq.s32.totalorder %s15, 1
    %p96 = por %p94, %p95
    %p97 = scmp.ne.s32.totalorder %s88, %s89
    %p98 = scmp.eq.s32.totalorder %s15, 0
    %p99 = por %p97, %p98
    %p100 = scmp.ne.s32.totalorder %s88, %s89
    %p101 = scmp.eq.s32.totalorder %s16, 1
    %p102 = por %p100, %p101
    %p104 = scmp.ne.s32.totalorder %s89, %s103
    %p105 = scmp.eq.s32.totalorder %s16, 0
    %p106 = por %p104, %p105
    %s107 = ssub.s32 %s10, %s17
    %p108 = scmp.eq.s32.totalorder %s107, 0
    %s110 = sadd.s32 %s109, 1
    %s111 = scalar_select %p108, %s109, %s110
    %p114 = pneg %p108
    %p115 = scmp.eq.s32.totalorder %s10, 1
    %p116 = por %p114, %p115
    %p117 = scmp.ne.s32.totalorder %s109, %s112
    %p118 = scmp.eq.s32.totalorder %s10, 0
    %p119 = por %p117, %p118
    %p120 = scmp.ne.s32.totalorder %s109, %s112
    %p121 = scmp.eq.s32.totalorder %s15, 1
    %p122 = por %p120, %p121
    %p123 = scmp.ne.s32.totalorder %s112, %s113
    %p124 = scmp.eq.s32.totalorder %s15, 0
    %p125 = por %p123, %p124
    %p126 = scmp.ne.s32.totalorder %s112, %s113
    %p127 = scmp.eq.s32.totalorder %s16, 1
    %p128 = por %p126, %p127
    %p130 = scmp.ne.s32.totalorder %s113, %s129
    %p131 = scmp.eq.s32.totalorder %s16, 0
    %p132 = por %p130, %p131
    %p133 = scmp.le.s32.totalorder 1, %s10
    %p134 = scmp.lt.s32.totalorder %s10, 3
    %p135 = pnand %p133, %p134
    %p136 = pneg %p135
    // Predicated region
    $region9: #{pneumonia_severity_net.13} parent=5 // pred_check
      _
    $region10: #{pneumonia_severity_net.13} parent=5 // pred_check_branch
      %138 = sbr.rel (%p135) target = $region12
    $region11: #{pneumonia_severity_net.13} parent=5 // pred_region
      %s139 = ssub.s32 %s10, 1
      // Predicated region
      $region13: #{pneumonia_severity_net.13} parent=11 // pred_check
        %p140 = pneg %p57
      $region14: #{pneumonia_severity_net.13} parent=11 // pred_check_branch
        %142 = sbr.rel (%p140) target = $region16
      $region15: #{pneumonia_severity_net.13} parent=11 // pred_region
        _
      $region16: #{pneumonia_severity_net.13} parent=11 // pred_fallthru
        _
      // Predicated region
      $region17: #{pneumonia_severity_net.13} parent=11 // pred_check
        %p143 = pneg %p78
      $region18: #{pneumonia_severity_net.13} parent=11 // pred_check_branch
        %145 = sbr.rel (%p143) target = $region20
      $region19: #{pneumonia_severity_net.13} parent=11 // pred_region
        _
      $region20: #{pneumonia_severity_net.13} parent=11 // pred_fallthru
        _
      // Predicated region
      $region21: #{pneumonia_severity_net.13} parent=11 // pred_check
        %p146 = pneg %p99
      $region22: #{pneumonia_severity_net.13} parent=11 // pred_check_branch
        %148 = sbr.rel (%p146) target = $region24
      $region23: #{pneumonia_severity_net.13} parent=11 // pred_region
        _
      $region24: #{pneumonia_severity_net.13} parent=11 // pred_fallthru
        _
    $region12: #{pneumonia_severity_net.13} parent=5 // pred_fallthru
      _
    %p149 = scmp.lt.s32.totalorder %s10, 2
    // Predicated region
    $region25: #{pneumonia_severity_net.13} parent=5 // pred_check
      %p150 = pneg %p149
    $region26: #{pneumonia_severity_net.13} parent=5 // pred_check_branch
      %152 = sbr.rel (%p150) target = $region28
    $region27: #{pneumonia_severity_net.13} parent=5 // pred_region
      // Predicated region
      $region29: #{pneumonia_severity_net.13} parent=27 // pred_check
        %p153 = pneg %p30
      $region30: #{pneumonia_severity_net.13} parent=27 // pred_check_branch
        %155 = sbr.rel (%p153) target = $region32
      $region31: #{pneumonia_severity_net.13} parent=27 // pred_region
        %s156 = smul.u32 32, %s10
        %p157 = scmp.lt.s32.totalorder %s156, 63
        %s158 = scalar_select %p157, %s156, 63
        %s159 = smul.addr %s158, 4
        %s160 = scalar_lea.vmem %s0, %s159
        %s161 = smul.u32 32, %s10
      $region32: #{pneumonia_severity_net.13} parent=27 // pred_fallthru
        _
    $region28: #{pneumonia_severity_net.13} parent=5 // pred_fallthru
      _
    %p162 = scmp.le.s32.totalorder 1, %s10
    %p163 = scmp.lt.s32.totalorder %s10, 3
    %p164 = pnand %p162, %p163
    %p165 = pneg %p164
    // Predicated region
    $region33: #{pneumonia_severity_net.13} parent=5 // pred_check
      _
    $region34: #{pneumonia_severity_net.13} parent=5 // pred_check_branch
      %167 = sbr.rel (%p164) target = $region36
    $region35: #{pneumonia_severity_net.13} parent=5 // pred_region
      %s168 = ssub.s32 %s10, 1
      %s169 = smul.u32 32, %s15
      %p170 = scmp.lt.s32.totalorder %s169, 63
      %s171 = scalar_select %p170, %s169, 63
      %s172 = smul.addr %s171, 4
      %s173 = scalar_lea.vmem %s0, %s172
      %p174 = pneg %p36
      %p175 = pneg %p33
      %p176 = pneg %p57
      %p177 = pneg %p54
      %p178 = pneg %p78
      %p179 = pneg %p75
      %p180 = pneg %p99
      %p181 = pneg %p96
      %p182 = pneg %p125
      %p183 = pneg %p122
      %s184 = smul.u32 32, %s15
      %p185 = scmp.lt.s32.totalorder %s184, 63
      %s186 = scalar_select %p185, %s184, 63
      %s187 = smul.addr %s186, 4
      %s188 = scalar_lea.vmem %s4, %s187
      %s189 = smul.u32 32, %s15
      %p190 = scmp.lt.s32.totalorder %s189, 63
      %s191 = scalar_select %p190, %s189, 63
      %s192 = smul.addr %s191, 4
      %s193 = scalar_lea.vmem %s0, %s192
      %s194 = smul.u32 32, %s15
      %s195 = smul.u32 32, %s15
      %p196 = scmp.lt.s32.totalorder %s195, 63
      %s197 = scalar_select %p196, %s195, 63
      %s198 = smul.addr %s197, 4
      %s199 = scalar_lea.vmem %s4, %s198
      %s200 = smul.u32 32, %s15
      %v202 = vld [vmem:[%s193] sm:$0xf]
      %v203 = vld [vmem:[%s193 + $0x4] sm:$0xf]
      %v204 = vld [vmem:[%s193 + $0x8] sm:$0xf]
      %v205 = vld [vmem:[%s193 + $0xc] sm:$0xf]
      %v206 = vld [vmem:[%s193 + $0x10] sm:$0xf]
      %v207 = vld [vmem:[%s193 + $0x14] sm:$0xf]
      %v208 = vld [vmem:[%s193 + $0x18] sm:$0xf]
      %v209 = vld [vmem:[%s193 + $0x1c] sm:$0xf]
      %v210 = vld [vmem:[%s193 + $0x20] sm:$0xf]
      %v211 = vld [vmem:[%s193 + $0x24] sm:$0xf]
      %v212 = vld [vmem:[%s193 + $0x28] sm:$0xf]
      %v213 = vld [vmem:[%s193 + $0x2c] sm:$0xf]
      %v214 = vld [vmem:[%s193 + $0x30] sm:$0xf]
      %v215 = vld [vmem:[%s193 + $0x34] sm:$0xf]
      %v216 = vld [vmem:[%s193 + $0x38] sm:$0xf]
      %v217 = vld [vmem:[%s193 + $0x3c] sm:$0xf]
      %v218 = vld [vmem:[%s193 + $0x40] sm:$0xf]
      %v219 = vld [vmem:[%s193 + $0x44] sm:$0xf]
      %v220 = vld [vmem:[%s193 + $0x48] sm:$0xf]
      %v221 = vld [vmem:[%s193 + $0x4c] sm:$0xf]
      %v222 = vld [vmem:[%s193 + $0x50] sm:$0xf]
      %v223 = vld [vmem:[%s193 + $0x54] sm:$0xf]
      %v224 = vld [vmem:[%s193 + $0x58] sm:$0xf]
      %v225 = vld [vmem:[%s193 + $0x5c] sm:$0xf]
      %v226 = vld [vmem:[%s193 + $0x60] sm:$0xf]
      %v227 = vld [vmem:[%s193 + $0x64] sm:$0xf]
      %v228 = vld [vmem:[%s193 + $0x68] sm:$0xf]
      %v229 = vld [vmem:[%s193 + $0x6c] sm:$0xf]
      %v230 = vld [vmem:[%s193 + $0x70] sm:$0xf]
      %v231 = vld [vmem:[%s193 + $0x74] sm:$0xf]
      %v232 = vld [vmem:[%s193 + $0x78] sm:$0xf]
      %v233 = vld [vmem:[%s193 + $0x7c] sm:$0xf]
      %v234 = vld [vmem:[%s1] sm:$0xf]
      %v235 = vld [vmem:[%s1 + $0x4] sm:$0xf]
      %v236 = vld [vmem:[%s1 + $0x8] sm:$0xf]
      %v237 = vld [vmem:[%s1 + $0xc] sm:$0xf]
      %v238 = vld [vmem:[%s1 + $0x10] sm:$0xf]
      %v239 = vld [vmem:[%s1 + $0x14] sm:$0xf]
      %v240 = vld [vmem:[%s1 + $0x18] sm:$0x1]
      %v273 = vunpack.c.l.b16 %v202
      %v274 = vunpack.c.l.b16 %v203
      %v275 = vunpack.c.l.b16 %v204
      %v276 = vunpack.c.l.b16 %v205
      %v277 = vunpack.c.l.b16 %v206
      %v278 = vunpack.c.l.b16 %v207
      %v279 = vunpack.c.l.b16 %v208
      %v280 = vunpack.c.l.b16 %v209
      %v281 = vunpack.c.l.b16 %v210
      %v282 = vunpack.c.l.b16 %v211
      %v283 = vunpack.c.l.b16 %v212
      %v284 = vunpack.c.l.b16 %v213
      %v285 = vunpack.c.l.b16 %v214
      %v286 = vunpack.c.l.b16 %v215
      %v287 = vunpack.c.l.b16 %v216
      %v288 = vunpack.c.l.b16 %v217
      %v289 = vunpack.c.l.b16 %v218
      %v290 = vunpack.c.l.b16 %v219
      %v291 = vunpack.c.l.b16 %v220
      %v292 = vunpack.c.l.b16 %v221
      %v293 = vunpack.c.l.b16 %v222
      %v294 = vunpack.c.l.b16 %v223
      %v295 = vunpack.c.l.b16 %v224
      %v296 = vunpack.c.l.b16 %v225
      %v297 = vunpack.c.l.b16 %v226
      %v298 = vunpack.c.l.b16 %v227
      %v299 = vunpack.c.l.b16 %v228
      %v300 = vunpack.c.l.b16 %v229
      %v301 = vunpack.c.l.b16 %v230
      %v302 = vunpack.c.l.b16 %v231
      %v303 = vunpack.c.l.b16 %v232
      %v304 = vunpack.c.l.b16 %v233
      %v305 = vpack.c.b16 %v274, %v273
      %v306 = vpack.c.b16 %v276, %v275
      %v307 = vpack.c.b16 %v278, %v277
      %v308 = vpack.c.b16 %v280, %v279
      %v309 = vpack.c.b16 %v282, %v281
      %v310 = vpack.c.b16 %v284, %v283
      %v311 = vpack.c.b16 %v286, %v285
      %v312 = vpack.c.b16 %v288, %v287
      %v313 = vpack.c.b16 %v290, %v289
      %v314 = vpack.c.b16 %v292, %v291
      %v315 = vpack.c.b16 %v294, %v293
      %v316 = vpack.c.b16 %v296, %v295
      %v317 = vpack.c.b16 %v298, %v297
      %v318 = vpack.c.b16 %v300, %v299
      %v319 = vpack.c.b16 %v302, %v301
      %v320 = vpack.c.b16 %v304, %v303
      %v328 = vunpack.c.l.b16 %v234
      %v329 = vunpack.c.l.b16 %v235
      %v330 = vunpack.c.l.b16 %v236
      %v331 = vunpack.c.l.b16 %v237
      %v332 = vunpack.c.l.b16 %v238
      %v333 = vunpack.c.l.b16 %v239
      %v334 = vunpack.c.l.b16 %v240
      %v335 = vpack.c.b16 %v329, %v328
      %v336 = vpack.c.b16 %v331, %v330
      %v337 = vpack.c.b16 %v333, %v332
      %v338 = vpack.c.b16 %v334, %v334
      %vm342 = vcmask 400384
      %v344 = vsel %vm342, %v305, 0
      %v347 = vsel %vm342, %v306, 0
      %v350 = vsel %vm342, %v307, 0
      %v353 = vsel %vm342, %v308, 0
      %v356 = vsel %vm342, %v309, 0
      %v359 = vsel %vm342, %v310, 0
      %v362 = vsel %vm342, %v311, 0
      %v365 = vsel %vm342, %v312, 0
      %v368 = vsel %vm342, %v313, 0
      %v371 = vsel %vm342, %v314, 0
      %v374 = vsel %vm342, %v315, 0
      %v377 = vsel %vm342, %v316, 0
      %v380 = vsel %vm342, %v317, 0
      %v383 = vsel %vm342, %v318, 0
      %v386 = vsel %vm342, %v319, 0
      %v389 = vsel %vm342, %v320, 0
      %vm391 = vcmask 1040384
      %v392 = vsel 0, 4294967295, 65535
      %v393 = vsel %vm391, %v392, 0
      %v395 = vand.u32 %v338, %v393
      %397 = vmatprep.subr.bf16.mxu0 0
      %398 = vmatpush1.bf16.msra.mxu0 %v335
      %399 = vmatprep.subr.bf16.mxu0 0
      %400 = vmatpush1.bf16.msra.mxu0 %v336
      %401 = vmatprep.subr.bf16.mxu0 0
      %402 = vmatpush1.bf16.msra.mxu0 %v337
      %403 = vmatprep.subr.bf16.mxu0 0
      %404 = vmatpush1.bf16.msra.mxu0 %v395
      %405 = vmatprep.subr.bf16.mxu0 0
      %406 = vmatpush1.bf16.msra.mxu0 0
      %407 = vmatprep.subr.bf16.mxu0 0
      %408 = vmatpush1.bf16.msra.mxu0 0
      %409 = vmatprep.subr.bf16.mxu0 0
      %410 = vmatpush1.bf16.msra.mxu0 0
      %411 = vmatprep.subr.bf16.mxu0 0
      %412 = vmatpush1.bf16.msra.mxu0 0
      %413 = vmatprep.subr.bf16.mxu0 0
      %414 = vmatpush1.bf16.msra.mxu0 0
      %415 = vmatprep.subr.bf16.mxu0 0
      %416 = vmatpush1.bf16.msra.mxu0 0
      %417 = vmatprep.subr.bf16.mxu0 0
      %418 = vmatpush1.bf16.msra.mxu0 0
      %419 = vmatprep.subr.bf16.mxu0 0
      %420 = vmatpush1.bf16.msra.mxu0 0
      %421 = vmatprep.subr.bf16.mxu0 0
      %422 = vmatpush1.bf16.msra.mxu0 0
      %423 = vmatprep.subr.bf16.mxu0 0
      %424 = vmatpush1.bf16.msra.mxu0 0
      %425 = vmatprep.subr.bf16.mxu0 0
      %426 = vmatpush1.bf16.msra.mxu0 0
      %427 = vmatprep.subr.bf16.mxu0 0
      %428 = vmatpush1.bf16.msra.mxu0 0
      %429 = vmatprep.mubr.bf16.mxu0 0
      %430 = vmatmul.mubr.bf16.gmra.mrb[0].mxu0 %v344
      %v431 = vpop.f32.mrb[0].mxu0
      %v432 = vadd.f32 0.0, %v431
      %v433 = vpop.f32.mrb[0].mxu0
      %v434 = vpop.f32.mrb[0].mxu0
      %v435 = vadd.f32 0.0, %v434
      %v436 = vpop.f32.mrb[0].mxu0
      %437 = vmatprep.mubr.bf16.mxu0 0
      %438 = vmatmul.mubr.bf16.gmra.mrb[0].mxu0 %v347
      %v439 = vpop.f32.mrb[0].mxu0
      %v440 = vadd.f32 0.0, %v439
      %v441 = vpop.f32.mrb[0].mxu0
      %v442 = vpop.f32.mrb[0].mxu0
      %v443 = vadd.f32 0.0, %v442
      %v444 = vpop.f32.mrb[0].mxu0
      %445 = vmatprep.mubr.bf16.mxu0 0
      %446 = vmatmul.mubr.bf16.gmra.mrb[0].mxu0 %v350
      %v447 = vpop.f32.mrb[0].mxu0
      %v448 = vadd.f32 0.0, %v447
      %v449 = vpop.f32.mrb[0].mxu0
      %v450 = vpop.f32.mrb[0].mxu0
      %v451 = vadd.f32 0.0, %v450
      %v452 = vpop.f32.mrb[0].mxu0
      %453 = vmatprep.mubr.bf16.mxu0 0
      %454 = vmatmul.mubr.bf16.gmra.mrb[0].mxu0 %v353
      %v455 = vpop.f32.mrb[0].mxu0
      %v456 = vadd.f32 0.0, %v455
      %v457 = vpop.f32.mrb[0].mxu0
      %v458 = vpop.f32.mrb[0].mxu0
      %v459 = vadd.f32 0.0, %v458
      %v460 = vpop.f32.mrb[0].mxu0
      %461 = vmatprep.mubr.bf16.mxu0 0
      %462 = vmatmul.mubr.bf16.gmra.mrb[0].mxu0 %v356
      %v463 = vpop.f32.mrb[0].mxu0
      %v464 = vadd.f32 0.0, %v463
      %v465 = vpop.f32.mrb[0].mxu0
      %v466 = vpop.f32.mrb[0].mxu0
      %v467 = vadd.f32 0.0, %v466
      %v468 = vpop.f32.mrb[0].mxu0
      %469 = vmatprep.mubr.bf16.mxu0 0
      %470 = vmatmul.mubr.bf16.gmra.mrb[0].mxu0 %v359
      %v471 = vpop.f32.mrb[0].mxu0
      %v472 = vadd.f32 0.0, %v471
      %v473 = vpop.f32.mrb[0].mxu0
      %v474 = vpop.f32.mrb[0].mxu0
      %v475 = vadd.f32 0.0, %v474
      %v476 = vpop.f32.mrb[0].mxu0
      %477 = vmatprep.mubr.bf16.mxu0 0
      %478 = vmatmul.mubr.bf16.gmra.mrb[0].mxu0 %v362
      %v479 = vpop.f32.mrb[0].mxu0
      %v480 = vadd.f32 0.0, %v479
      %v481 = vpop.f32.mrb[0].mxu0
      %v482 = vpop.f32.mrb[0].mxu0
      %v483 = vadd.f32 0.0, %v482
      %v484 = vpop.f32.mrb[0].mxu0
      %485 = vmatprep.mubr.bf16.mxu0 0
      %486 = vmatmul.mubr.bf16.gmra.mrb[0].mxu0 %v365
      %v487 = vpop.f32.mrb[0].mxu0
      %v488 = vadd.f32 0.0, %v487
      %v489 = vpop.f32.mrb[0].mxu0
      %v490 = vpop.f32.mrb[0].mxu0
      %v491 = vadd.f32 0.0, %v490
      %v492 = vpop.f32.mrb[0].mxu0
      %493 = vmatprep.mubr.bf16.mxu0 0
      %494 = vmatmul.mubr.bf16.gmra.mrb[0].mxu0 %v368
      %v495 = vpop.f32.mrb[0].mxu0
      %v496 = vadd.f32 0.0, %v495
      %v497 = vpop.f32.mrb[0].mxu0
      %v498 = vpop.f32.mrb[0].mxu0
      %v499 = vadd.f32 0.0, %v498
      %v500 = vpop.f32.mrb[0].mxu0
      %501 = vmatprep.mubr.bf16.mxu0 0
      %502 = vmatmul.mubr.bf16.gmra.mrb[0].mxu0 %v371
      %v503 = vpop.f32.mrb[0].mxu0
      %v504 = vadd.f32 0.0, %v503
      %v505 = vpop.f32.mrb[0].mxu0
      %v506 = vpop.f32.mrb[0].mxu0
      %v507 = vadd.f32 0.0, %v506
      %v508 = vpop.f32.mrb[0].mxu0
      %509 = vmatprep.mubr.bf16.mxu0 0
      %510 = vmatmul.mubr.bf16.gmra.mrb[0].mxu0 %v374
      %v511 = vpop.f32.mrb[0].mxu0
      %v512 = vadd.f32 0.0, %v511
      %v513 = vpop.f32.mrb[0].mxu0
      %v514 = vpop.f32.mrb[0].mxu0
      %v515 = vadd.f32 0.0, %v514
      %v516 = vpop.f32.mrb[0].mxu0
      %517 = vmatprep.mubr.bf16.mxu0 0
      %518 = vmatmul.mubr.bf16.gmra.mrb[0].mxu0 %v377
      %v519 = vpop.f32.mrb[0].mxu0
      %v520 = vadd.f32 0.0, %v519
      %v521 = vpop.f32.mrb[0].mxu0
      %v522 = vpop.f32.mrb[0].mxu0
      %v523 = vadd.f32 0.0, %v522
      %v524 = vpop.f32.mrb[0].mxu0
      %525 = vmatprep.mubr.bf16.mxu0 0
      %526 = vmatmul.mubr.bf16.gmra.mrb[0].mxu0 %v380
      %v527 = vpop.f32.mrb[0].mxu0
      %v528 = vadd.f32 0.0, %v527
      %v529 = vpop.f32.mrb[0].mxu0
      %v530 = vpop.f32.mrb[0].mxu0
      %v531 = vadd.f32 0.0, %v530
      %v532 = vpop.f32.mrb[0].mxu0
      %533 = vmatprep.mubr.bf16.mxu0 0
      %534 = vmatmul.mubr.bf16.gmra.mrb[0].mxu0 %v383
      %v535 = vpop.f32.mrb[0].mxu0
      %v536 = vadd.f32 0.0, %v535
      %v537 = vpop.f32.mrb[0].mxu0
      %v538 = vpop.f32.mrb[0].mxu0
      %v539 = vadd.f32 0.0, %v538
      %v540 = vpop.f32.mrb[0].mxu0
      %541 = vmatprep.mubr.bf16.mxu0 0
      %542 = vmatmul.mubr.bf16.gmra.mrb[0].mxu0 %v386
      %v543 = vpop.f32.mrb[0].mxu0
      %v544 = vadd.f32 0.0, %v543
      %v545 = vpop.f32.mrb[0].mxu0
      %v546 = vpop.f32.mrb[0].mxu0
      %v547 = vadd.f32 0.0, %v546
      %v548 = vpop.f32.mrb[0].mxu0
      %549 = vmatprep.mubr.bf16.mxu0 0
      %550 = vmatmul.mubr.bf16.gmra.mrb[0].mxu0 %v389
      %v551 = vpop.f32.mrb[0].mxu0
      %v552 = vadd.f32 0.0, %v551
      %v553 = vpop.f32.mrb[0].mxu0
      %v554 = vpop.f32.mrb[0].mxu0
      %v555 = vadd.f32 0.0, %v554
      %v556 = vpop.f32.mrb[0].mxu0
      %557 = vdwg.mxu0
      %v558 = vld [vmem:[%s2] sm:$0x1]
      %v560 = vlaneseq
      %v561 = vshrl.u32 %v560, 7
      %v562 = vsub.s32 0, %v561
      %v563 = vrot.slane %v558, %v562
      %v565 = vmul.f32 %v432, %v563
      %v566 = vmul.f32 %v435, %v563
      %v567 = vmul.f32 %v440, %v563
      %v568 = vmul.f32 %v443, %v563
      %v569 = vmul.f32 %v448, %v563
      %v570 = vmul.f32 %v451, %v563
      %v571 = vmul.f32 %v456, %v563
      %v572 = vmul.f32 %v459, %v563
      %v573 = vmul.f32 %v464, %v563
      %v574 = vmul.f32 %v467, %v563
      %v575 = vmul.f32 %v472, %v563
      %v576 = vmul.f32 %v475, %v563
      %v577 = vmul.f32 %v480, %v563
      %v578 = vmul.f32 %v483, %v563
      %v579 = vmul.f32 %v488, %v563
      %v580 = vmul.f32 %v491, %v563
      %v581 = vmul.f32 %v496, %v563
      %v582 = vmul.f32 %v499, %v563
      %v583 = vmul.f32 %v504, %v563
      %v584 = vmul.f32 %v507, %v563
      %v585 = vmul.f32 %v512, %v563
      %v586 = vmul.f32 %v515, %v563
      %v587 = vmul.f32 %v520, %v563
      %v588 = vmul.f32 %v523, %v563
      %v589 = vmul.f32 %v528, %v563
      %v590 = vmul.f32 %v531, %v563
      %v591 = vmul.f32 %v536, %v563
      %v592 = vmul.f32 %v539, %v563
      %v593 = vmul.f32 %v544, %v563
      %v594 = vmul.f32 %v547, %v563
      %v595 = vmul.f32 %v552, %v563
      %v596 = vmul.f32 %v555, %v563
      %v597 = vld [vmem:[%s3] sm:$0x1]
      %v599 = vlaneseq
      %v600 = vshrl.u32 %v599, 7
      %v601 = vsub.s32 0, %v600
      %v602 = vrot.slane %v597, %v601
      %v604 = vadd.f32 %v565, %v602
      %v605 = vadd.f32 %v566, %v602
      %v606 = vadd.f32 %v567, %v602
      %v607 = vadd.f32 %v568, %v602
      %v608 = vadd.f32 %v569, %v602
      %v609 = vadd.f32 %v570, %v602
      %v610 = vadd.f32 %v571, %v602
      %v611 = vadd.f32 %v572, %v602
      %v612 = vadd.f32 %v573, %v602
      %v613 = vadd.f32 %v574, %v602
      %v614 = vadd.f32 %v575, %v602
      %v615 = vadd.f32 %v576, %v602
      %v616 = vadd.f32 %v577, %v602
      %v617 = vadd.f32 %v578, %v602
      %v618 = vadd.f32 %v579, %v602
      %v619 = vadd.f32 %v580, %v602
      %v620 = vadd.f32 %v581, %v602
      %v621 = vadd.f32 %v582, %v602
      %v622 = vadd.f32 %v583, %v602
      %v623 = vadd.f32 %v584, %v602
      %v624 = vadd.f32 %v585, %v602
      %v625 = vadd.f32 %v586, %v602
      %v626 = vadd.f32 %v587, %v602
      %v627 = vadd.f32 %v588, %v602
      %v628 = vadd.f32 %v589, %v602
      %v629 = vadd.f32 %v590, %v602
      %v630 = vadd.f32 %v591, %v602
      %v631 = vadd.f32 %v592, %v602
      %v632 = vadd.f32 %v593, %v602
      %v633 = vadd.f32 %v594, %v602
      %v634 = vadd.f32 %v595, %v602
      %v635 = vadd.f32 %v596, %v602
      %v636 = vmax.f32 %v604, 0.0
      %v637 = vmax.f32 %v605, 0.0
      %v638 = vmax.f32 %v606, 0.0
      %v639 = vmax.f32 %v607, 0.0
      %v640 = vmax.f32 %v608, 0.0
      %v641 = vmax.f32 %v609, 0.0
      %v642 = vmax.f32 %v610, 0.0
      %v643 = vmax.f32 %v611, 0.0
      %v644 = vmax.f32 %v612, 0.0
      %v645 = vmax.f32 %v613, 0.0
      %v646 = vmax.f32 %v614, 0.0
      %v647 = vmax.f32 %v615, 0.0
      %v648 = vmax.f32 %v616, 0.0
      %v649 = vmax.f32 %v617, 0.0
      %v650 = vmax.f32 %v618, 0.0
      %v651 = vmax.f32 %v619, 0.0
      %v652 = vmax.f32 %v620, 0.0
      %v653 = vmax.f32 %v621, 0.0
      %v654 = vmax.f32 %v622, 0.0
      %v655 = vmax.f32 %v623, 0.0
      %v656 = vmax.f32 %v624, 0.0
      %v657 = vmax.f32 %v625, 0.0
      %v658 = vmax.f32 %v626, 0.0
      %v659 = vmax.f32 %v627, 0.0
      %v660 = vmax.f32 %v628, 0.0
      %v661 = vmax.f32 %v629, 0.0
      %v662 = vmax.f32 %v630, 0.0
      %v663 = vmax.f32 %v631, 0.0
      %v664 = vmax.f32 %v632, 0.0
      %v665 = vmax.f32 %v633, 0.0
      %v666 = vmax.f32 %v634, 0.0
      %v667 = vmax.f32 %v635, 0.0
      %v668 = vpack.c.bf16 %v637, %v636
      %v669 = vpack.c.bf16 %v639, %v638
      %v670 = vpack.c.bf16 %v641, %v640
      %v671 = vpack.c.bf16 %v643, %v642
      %v672 = vpack.c.bf16 %v645, %v644
      %v673 = vpack.c.bf16 %v647, %v646
      %v674 = vpack.c.bf16 %v649, %v648
      %v675 = vpack.c.bf16 %v651, %v650
      %v676 = vpack.c.bf16 %v653, %v652
      %v677 = vpack.c.bf16 %v655, %v654
      %v678 = vpack.c.bf16 %v657, %v656
      %v679 = vpack.c.bf16 %v659, %v658
      %v680 = vpack.c.bf16 %v661, %v660
      %v681 = vpack.c.bf16 %v663, %v662
      %v682 = vpack.c.bf16 %v665, %v664
      %v683 = vpack.c.bf16 %v667, %v666
      %v700 = vunpack.c.l.b16 %v668
      %v701 = vunpack.c.h.b16 %v668
      %v702 = vunpack.c.l.b16 %v669
      %v703 = vunpack.c.h.b16 %v669
      %v704 = vunpack.c.l.b16 %v670
      %v705 = vunpack.c.h.b16 %v670
      %v706 = vunpack.c.l.b16 %v671
      %v707 = vunpack.c.h.b16 %v671
      %v708 = vunpack.c.l.b16 %v672
      %v709 = vunpack.c.h.b16 %v672
      %v710 = vunpack.c.l.b16 %v673
      %v711 = vunpack.c.h.b16 %v673
      %v712 = vunpack.c.l.b16 %v674
      %v713 = vunpack.c.h.b16 %v674
      %v714 = vunpack.c.l.b16 %v675
      %v715 = vunpack.c.h.b16 %v675
      %v716 = vunpack.c.l.b16 %v676
      %v717 = vunpack.c.h.b16 %v676
      %v718 = vunpack.c.l.b16 %v677
      %v719 = vunpack.c.h.b16 %v677
      %v720 = vunpack.c.l.b16 %v678
      %v721 = vunpack.c.h.b16 %v678
      %v722 = vunpack.c.l.b16 %v679
      %v723 = vunpack.c.h.b16 %v679
      %v724 = vunpack.c.l.b16 %v680
      %v725 = vunpack.c.h.b16 %v680
      %v726 = vunpack.c.l.b16 %v681
      %v727 = vunpack.c.h.b16 %v681
      %v728 = vunpack.c.l.b16 %v682
      %v729 = vunpack.c.h.b16 %v682
      %v730 = vunpack.c.l.b16 %v683
      %v731 = vunpack.c.h.b16 %v683
      %v732 = vpack.c.b16 %v700, %v700
      %v733 = vpack.c.b16 %v701, %v701
      %v734 = vpack.c.b16 %v702, %v702
      %v735 = vpack.c.b16 %v703, %v703
      %v736 = vpack.c.b16 %v704, %v704
      %v737 = vpack.c.b16 %v705, %v705
      %v738 = vpack.c.b16 %v706, %v706
      %v739 = vpack.c.b16 %v707, %v707
      %v740 = vpack.c.b16 %v708, %v708
      %v741 = vpack.c.b16 %v709, %v709
      %v742 = vpack.c.b16 %v710, %v710
      %v743 = vpack.c.b16 %v711, %v711
      %v744 = vpack.c.b16 %v712, %v712
      %v745 = vpack.c.b16 %v713, %v713
      %v746 = vpack.c.b16 %v714, %v714
      %v747 = vpack.c.b16 %v715, %v715
      %v748 = vpack.c.b16 %v716, %v716
      %v749 = vpack.c.b16 %v717, %v717
      %v750 = vpack.c.b16 %v718, %v718
      %v751 = vpack.c.b16 %v719, %v719
      %v752 = vpack.c.b16 %v720, %v720
      %v753 = vpack.c.b16 %v721, %v721
      %v754 = vpack.c.b16 %v722, %v722
      %v755 = vpack.c.b16 %v723, %v723
      %v756 = vpack.c.b16 %v724, %v724
      %v757 = vpack.c.b16 %v725, %v725
      %v758 = vpack.c.b16 %v726, %v726
      %v759 = vpack.c.b16 %v727, %v727
      %v760 = vpack.c.b16 %v728, %v728
      %v761 = vpack.c.b16 %v729, %v729
      %v762 = vpack.c.b16 %v730, %v730
      %v763 = vpack.c.b16 %v731, %v731
      %vm796 = vcmask 125952
      %797 = vst.msk [vmem:[%s199] sm:$0xf] %vm796, %v732
      %798 = vst.msk [vmem:[%s199 + $0x4] sm:$0xf] %vm796, %v733
      %799 = vst.msk [vmem:[%s199 + $0x8] sm:$0xf] %vm796, %v734
      %800 = vst.msk [vmem:[%s199 + $0xc] sm:$0xf] %vm796, %v735
      %801 = vst.msk [vmem:[%s199 + $0x10] sm:$0xf] %vm796, %v736
      %802 = vst.msk [vmem:[%s199 + $0x14] sm:$0xf] %vm796, %v737
      %803 = vst.msk [vmem:[%s199 + $0x18] sm:$0xf] %vm796, %v738
      %804 = vst.msk [vmem:[%s199 + $0x1c] sm:$0xf] %vm796, %v739
      %805 = vst.msk [vmem:[%s199 + $0x20] sm:$0xf] %vm796, %v740
      %806 = vst.msk [vmem:[%s199 + $0x24] sm:$0xf] %vm796, %v741
      %807 = vst.msk [vmem:[%s199 + $0x28] sm:$0xf] %vm796, %v742
      %808 = vst.msk [vmem:[%s199 + $0x2c] sm:$0xf] %vm796, %v743
      %809 = vst.msk [vmem:[%s199 + $0x30] sm:$0xf] %vm796, %v744
      %810 = vst.msk [vmem:[%s199 + $0x34] sm:$0xf] %vm796, %v745
      %811 = vst.msk [vmem:[%s199 + $0x38] sm:$0xf] %vm796, %v746
      %812 = vst.msk [vmem:[%s199 + $0x3c] sm:$0xf] %vm796, %v747
      %813 = vst.msk [vmem:[%s199 + $0x40] sm:$0xf] %vm796, %v748
      %814 = vst.msk [vmem:[%s199 + $0x44] sm:$0xf] %vm796, %v749
      %815 = vst.msk [vmem:[%s199 + $0x48] sm:$0xf] %vm796, %v750
      %816 = vst.msk [vmem:[%s199 + $0x4c] sm:$0xf] %vm796, %v751
      %817 = vst.msk [vmem:[%s199 + $0x50] sm:$0xf] %vm796, %v752
      %818 = vst.msk [vmem:[%s199 + $0x54] sm:$0xf] %vm796, %v753
      %819 = vst.msk [vmem:[%s199 + $0x58] sm:$0xf] %vm796, %v754
      %820 = vst.msk [vmem:[%s199 + $0x5c] sm:$0xf] %vm796, %v755
      %821 = vst.msk [vmem:[%s199 + $0x60] sm:$0xf] %vm796, %v756
      %822 = vst.msk [vmem:[%s199 + $0x64] sm:$0xf] %vm796, %v757
      %823 = vst.msk [vmem:[%s199 + $0x68] sm:$0xf] %vm796, %v758
      %824 = vst.msk [vmem:[%s199 + $0x6c] sm:$0xf] %vm796, %v759
      %825 = vst.msk [vmem:[%s199 + $0x70] sm:$0xf] %vm796, %v760
      %826 = vst.msk [vmem:[%s199 + $0x74] sm:$0xf] %vm796, %v761
      %827 = vst.msk [vmem:[%s199 + $0x78] sm:$0xf] %vm796, %v762
      %828 = vst.msk [vmem:[%s199 + $0x7c] sm:$0xf] %vm796, %v763
      %s829 = smul.u32 32, %s15
      %p830 = scmp.lt.s32.totalorder %s829, 63
      %s831 = scalar_select %p830, %s829, 63
      %s832 = smul.addr %s831, 4
      %s833 = scalar_lea.vmem %s4, %s832
      // Predicated region
      $region37: #{pneumonia_severity_net.13} parent=35 // pred_check
        %p834 = pneg %p122
      $region38: #{pneumonia_severity_net.13} parent=35 // pred_check_branch
        %836 = sbr.rel (%p834) target = $region40
      $region39: #{pneumonia_severity_net.13} parent=35 // pred_region
        %s837 = smul.u32 32, %s15
      $region40: #{pneumonia_severity_net.13} parent=35 // pred_fallthru
        _
    $region36: #{pneumonia_severity_net.13} parent=5 // pred_fallthru
      _
    %p838 = scmp.le.s32.totalorder 2, %s10
    // Predicated region
    $region41: #{pneumonia_severity_net.13} parent=5 // pred_check
      %p839 = pneg %p838
    $region42: #{pneumonia_severity_net.13} parent=5 // pred_check_branch
      %841 = sbr.rel (%p839) target = $region44
    $region43: #{pneumonia_severity_net.13} parent=5 // pred_region
      %s842 = ssub.s32 %s10, 2
      // Predicated region
      $region45: #{pneumonia_severity_net.13} parent=43 // pred_check
        %p843 = pneg %p128
      $region46: #{pneumonia_severity_net.13} parent=43 // pred_check_branch
        %845 = sbr.rel (%p843) target = $region48
      $region47: #{pneumonia_severity_net.13} parent=43 // pred_region
        %s846 = smul.u32 32, %s16
        %p847 = scmp.lt.s32.totalorder %s846, 63
        %s848 = scalar_select %p847, %s846, 63
        %s849 = smul.addr %s848, 4
        %s850 = scalar_lea.vmem %s4, %s849
      $region48: #{pneumonia_severity_net.13} parent=43 // pred_fallthru
        _
    $region44: #{pneumonia_severity_net.13} parent=5 // pred_fallthru
      _
  $region6: #{pneumonia_severity_net.13} parent=0 // loop_footer
    %s14 = sadd.s32 1, %s10
  $region7: #{pneumonia_severity_net.13} parent=0 // loop_footer_branch
    %9 = sbr.rel target = $region3
  $region8: #{pneumonia_severity_net.13} parent=0 // loop_exit
    _

// kernel: pneumonia_severity_net.15
$region0: #{pneumonia_severity_net.15}
  #allocation0 [shape = 'u32[]', space=smem, size = 0x4, offset = 0x4, fixed_abs, tag = 'smem constant byte address 0x4 - core index']
  #allocation1 [shape = 'u32[144,128]{1,0:T(1,128)}', space=vmem, size = 0x12000, scoped, tag = 'internal scratch']
  %s0 = inlined_call_operand.vmem [shape: bf16[128,16], index: 0, kind: input, shape index: {}]
  %s1 = inlined_call_operand.vmem [shape: bf16[16,32], index: 1, kind: input, shape index: {}]
  %s2 = inlined_call_operand.vmem [shape: f32[1,16], index: 2, kind: input, shape index: {}]
  %s3 = inlined_call_operand.vmem [shape: f32[1,16], index: 3, kind: input, shape index: {}]
  %s4 = inlined_call_operand.vmem [shape: f32[1,32], index: 4, kind: input, shape index: {}]
  %s5 = inlined_call_operand.vmem [shape: f32[1,32], index: 5, kind: input, shape index: {}]
  %s6 = inlined_call_operand.vmem [shape: bf16[128,32], index: 6, kind: output, shape index: {}]
  %s7 = sld [smem:[#allocation0]]
  $region34: #{pneumonia_severity_net.15} parent=0
    _
  %s9 = ssub.s32 1, %s7
  %s10 = scalar_select 0, %s9, %s7
  // Predicated region
  $region2: #{pneumonia_severity_net.15} parent=0 // pred_check
    _
  $region3: #{pneumonia_severity_net.15} parent=0 // pred_check_branch
    %12 = sbr.rel (0) target = $region5
  $region4: #{pneumonia_severity_net.15} parent=0 // pred_region
    _
  $region5: #{pneumonia_severity_net.15} parent=0 // pred_fallthru
    _
  // Predicated region
  $region6: #{pneumonia_severity_net.15} parent=0 // pred_check
    _
  $region7: #{pneumonia_severity_net.15} parent=0 // pred_check_branch
    %14 = sbr.rel (0) target = $region9
  $region8: #{pneumonia_severity_net.15} parent=0 // pred_region
    _
  $region9: #{pneumonia_severity_net.15} parent=0 // pred_fallthru
    _
  // Predicated region
  $region10: #{pneumonia_severity_net.15} parent=0 // pred_check
    _
  $region11: #{pneumonia_severity_net.15} parent=0 // pred_check_branch
    %16 = sbr.rel (0) target = $region13
  $region12: #{pneumonia_severity_net.15} parent=0 // pred_region
    _
  $region13: #{pneumonia_severity_net.15} parent=0 // pred_fallthru
    _
  // Predicated region
  $region14: #{pneumonia_severity_net.15} parent=0 // pred_check
    _
  $region15: #{pneumonia_severity_net.15} parent=0 // pred_check_branch
    %18 = sbr.rel (0) target = $region17
  $region16: #{pneumonia_severity_net.15} parent=0 // pred_region
    _
  $region17: #{pneumonia_severity_net.15} parent=0 // pred_fallthru
    _
  // Predicated region
  $region18: #{pneumonia_severity_net.15} parent=0 // pred_check
    _
  $region19: #{pneumonia_severity_net.15} parent=0 // pred_check_branch
    %20 = sbr.rel (0) target = $region21
  $region20: #{pneumonia_severity_net.15} parent=0 // pred_region
    _
  $region21: #{pneumonia_severity_net.15} parent=0 // pred_fallthru
    _
  // Predicated region
  $region22: #{pneumonia_severity_net.15} parent=0 // pred_check
    _
  $region23: #{pneumonia_severity_net.15} parent=0 // pred_check_branch
    %22 = sbr.rel (0) target = $region25
  $region24: #{pneumonia_severity_net.15} parent=0 // pred_region
    _
  $region25: #{pneumonia_severity_net.15} parent=0 // pred_fallthru
    _
  %v24 = vld [vmem:[%s2] sm:$0x1]
  %v25 = vld [vmem:[%s0] sm:$0xf]
  %v26 = vld [vmem:[%s0 + $0x4] sm:$0xf]
  %v27 = vld [vmem:[%s0 + $0x8] sm:$0xf]
  %v28 = vld [vmem:[%s0 + $0xc] sm:$0xf]
  %v29 = vld [vmem:[%s0 + $0x10] sm:$0xf]
  %v30 = vld [vmem:[%s0 + $0x14] sm:$0xf]
  %v31 = vld [vmem:[%s0 + $0x18] sm:$0xf]
  %v32 = vld [vmem:[%s0 + $0x1c] sm:$0xf]
  %v33 = vld [vmem:[%s0 + $0x20] sm:$0xf]
  %v34 = vld [vmem:[%s0 + $0x24] sm:$0xf]
  %v35 = vld [vmem:[%s0 + $0x28] sm:$0xf]
  %v36 = vld [vmem:[%s0 + $0x2c] sm:$0xf]
  %v37 = vld [vmem:[%s0 + $0x30] sm:$0xf]
  %v38 = vld [vmem:[%s0 + $0x34] sm:$0xf]
  %v39 = vld [vmem:[%s0 + $0x38] sm:$0xf]
  %v40 = vld [vmem:[%s0 + $0x3c] sm:$0xf]
  %v41 = vunpack.c.l.bf16 %v25
  %v42 = vunpack.c.l.bf16 %v26
  %v43 = vunpack.c.l.bf16 %v27
  %v44 = vunpack.c.l.bf16 %v28
  %v45 = vunpack.c.l.bf16 %v29
  %v46 = vunpack.c.l.bf16 %v30
  %v47 = vunpack.c.l.bf16 %v31
  %v48 = vunpack.c.l.bf16 %v32
  %v49 = vunpack.c.l.bf16 %v33
  %v50 = vunpack.c.l.bf16 %v34
  %v51 = vunpack.c.l.bf16 %v35
  %v52 = vunpack.c.l.bf16 %v36
  %v53 = vunpack.c.l.bf16 %v37
  %v54 = vunpack.c.l.bf16 %v38
  %v55 = vunpack.c.l.bf16 %v39
  %v56 = vunpack.c.l.bf16 %v40
  %v58 = vlaneseq
  %v59 = vshrl.u32 %v58, 7
  %v60 = vsub.s32 0, %v59
  %v61 = vrot.slane %v24, %v60
  %v63 = vmul.f32 %v61, %v41
  %v64 = vmul.f32 %v61, %v42
  %v65 = vmul.f32 %v61, %v43
  %v66 = vmul.f32 %v61, %v44
  %v67 = vmul.f32 %v61, %v45
  %v68 = vmul.f32 %v61, %v46
  %v69 = vmul.f32 %v61, %v47
  %v70 = vmul.f32 %v61, %v48
  %v71 = vmul.f32 %v61, %v49
  %v72 = vmul.f32 %v61, %v50
  %v73 = vmul.f32 %v61, %v51
  %v74 = vmul.f32 %v61, %v52
  %v75 = vmul.f32 %v61, %v53
  %v76 = vmul.f32 %v61, %v54
  %v77 = vmul.f32 %v61, %v55
  %v78 = vmul.f32 %v61, %v56
  %v79 = vld [vmem:[%s3] sm:$0x1]
  %v81 = vlaneseq
  %v82 = vshrl.u32 %v81, 7
  %v83 = vsub.s32 0, %v82
  %v84 = vrot.slane %v79, %v83
  %v86 = vadd.f32 %v63, %v84
  %v87 = vadd.f32 %v64, %v84
  %v88 = vadd.f32 %v65, %v84
  %v89 = vadd.f32 %v66, %v84
  %v90 = vadd.f32 %v67, %v84
  %v91 = vadd.f32 %v68, %v84
  %v92 = vadd.f32 %v69, %v84
  %v93 = vadd.f32 %v70, %v84
  %v94 = vadd.f32 %v71, %v84
  %v95 = vadd.f32 %v72, %v84
  %v96 = vadd.f32 %v73, %v84
  %v97 = vadd.f32 %v74, %v84
  %v98 = vadd.f32 %v75, %v84
  %v99 = vadd.f32 %v76, %v84
  %v100 = vadd.f32 %v77, %v84
  %v101 = vadd.f32 %v78, %v84
  %v102 = vmax.f32 %v86, 0.0
  %v103 = vmax.f32 %v87, 0.0
  %v104 = vmax.f32 %v88, 0.0
  %v105 = vmax.f32 %v89, 0.0
  %v106 = vmax.f32 %v90, 0.0
  %v107 = vmax.f32 %v91, 0.0
  %v108 = vmax.f32 %v92, 0.0
  %v109 = vmax.f32 %v93, 0.0
  %v110 = vmax.f32 %v94, 0.0
  %v111 = vmax.f32 %v95, 0.0
  %v112 = vmax.f32 %v96, 0.0
  %v113 = vmax.f32 %v97, 0.0
  %v114 = vmax.f32 %v98, 0.0
  %v115 = vmax.f32 %v99, 0.0
  %v116 = vmax.f32 %v100, 0.0
  %v117 = vmax.f32 %v101, 0.0
  %v118 = vpack.c.bf16 %v103, %v102
  %v119 = vpack.c.bf16 %v105, %v104
  %v120 = vpack.c.bf16 %v107, %v106
  %v121 = vpack.c.bf16 %v109, %v108
  %v122 = vpack.c.bf16 %v111, %v110
  %v123 = vpack.c.bf16 %v113, %v112
  %v124 = vpack.c.bf16 %v115, %v114
  %v125 = vpack.c.bf16 %v117, %v116
  %v126 = vld [vmem:[%s1] sm:$0xf]
  %v127 = vld [vmem:[%s1 + $0x4] sm:$0xf]
  %v130 = vunpack.c.l.b16 %v126
  %v131 = vunpack.c.l.b16 %v127
  %v132 = vpack.c.b16 %v131, %v130
  %vm134 = vcmask 130048
  %v136 = vsel %vm134, %v118, 0
  %v139 = vsel %vm134, %v119, 0
  %v142 = vsel %vm134, %v120, 0
  %v145 = vsel %vm134, %v121, 0
  %v148 = vsel %vm134, %v122, 0
  %v151 = vsel %vm134, %v123, 0
  %v154 = vsel %vm134, %v124, 0
  %v157 = vsel %vm134, %v125, 0
  %159 = vmatprep.subr.bf16.mxu0 0
  %160 = vmatpush1.bf16.msra.mxu0 %v132
  %161 = vmatprep.subr.bf16.mxu0 0
  %162 = vmatpush1.bf16.msra.mxu0 0
  %163 = vmatprep.subr.bf16.mxu0 0
  %164 = vmatpush1.bf16.msra.mxu0 0
  %165 = vmatprep.subr.bf16.mxu0 0
  %166 = vmatpush1.bf16.msra.mxu0 0
  %167 = vmatprep.subr.bf16.mxu0 0
  %168 = vmatpush1.bf16.msra.mxu0 0
  %169 = vmatprep.subr.bf16.mxu0 0
  %170 = vmatpush1.bf16.msra.mxu0 0
  %171 = vmatprep.subr.bf16.mxu0 0
  %172 = vmatpush1.bf16.msra.mxu0 0
  %173 = vmatprep.subr.bf16.mxu0 0
  %174 = vmatpush1.bf16.msra.mxu0 0
  %175 = vmatprep.subr.bf16.mxu0 0
  %176 = vmatpush1.bf16.msra.mxu0 0
  %177 = vmatprep.subr.bf16.mxu0 0
  %178 = vmatpush1.bf16.msra.mxu0 0
  %179 = vmatprep.subr.bf16.mxu0 0
  %180 = vmatpush1.bf16.msra.mxu0 0
  %181 = vmatprep.subr.bf16.mxu0 0
  %182 = vmatpush1.bf16.msra.mxu0 0
  %183 = vmatprep.subr.bf16.mxu0 0
  %184 = vmatpush1.bf16.msra.mxu0 0
  %185 = vmatprep.subr.bf16.mxu0 0
  %186 = vmatpush1.bf16.msra.mxu0 0
  %187 = vmatprep.subr.bf16.mxu0 0
  %188 = vmatpush1.bf16.msra.mxu0 0
  %189 = vmatprep.subr.bf16.mxu0 0
  %190 = vmatpush1.bf16.msra.mxu0 0
  %191 = vmatprep.mubr.bf16.mxu0 0
  %192 = vmatmul.mubr.bf16.gmra.mrb[0].mxu0 %v136
  %v193 = vpop.f32.mrb[0].mxu0
  %v194 = vadd.f32 0.0, %v193
  %v195 = vpop.f32.mrb[0].mxu0
  %v196 = vpop.f32.mrb[0].mxu0
  %v197 = vadd.f32 0.0, %v196
  %v198 = vpop.f32.mrb[0].mxu0
  %199 = vmatprep.mubr.bf16.mxu0 0
  %200 = vmatmul.mubr.bf16.gmra.mrb[0].mxu0 %v139
  %v201 = vpop.f32.mrb[0].mxu0
  %v202 = vadd.f32 0.0, %v201
  %v203 = vpop.f32.mrb[0].mxu0
  %v204 = vpop.f32.mrb[0].mxu0
  %v205 = vadd.f32 0.0, %v204
  %v206 = vpop.f32.mrb[0].mxu0
  %207 = vmatprep.mubr.bf16.mxu0 0
  %208 = vmatmul.mubr.bf16.gmra.mrb[0].mxu0 %v142
  %v209 = vpop.f32.mrb[0].mxu0
  %v210 = vadd.f32 0.0, %v209
  %v211 = vpop.f32.mrb[0].mxu0
  %v212 = vpop.f32.mrb[0].mxu0
  %v213 = vadd.f32 0.0, %v212
  %v214 = vpop.f32.mrb[0].mxu0
  %215 = vmatprep.mubr.bf16.mxu0 0
  %216 = vmatmul.mubr.bf16.gmra.mrb[0].mxu0 %v145
  %v217 = vpop.f32.mrb[0].mxu0
  %v218 = vadd.f32 0.0, %v217
  %v219 = vpop.f32.mrb[0].mxu0
  %v220 = vpop.f32.mrb[0].mxu0
  %v221 = vadd.f32 0.0, %v220
  %v222 = vpop.f32.mrb[0].mxu0
  %223 = vmatprep.mubr.bf16.mxu0 0
  %224 = vmatmul.mubr.bf16.gmra.mrb[0].mxu0 %v148
  %v225 = vpop.f32.mrb[0].mxu0
  %v226 = vadd.f32 0.0, %v225
  %v227 = vpop.f32.mrb[0].mxu0
  %v228 = vpop.f32.mrb[0].mxu0
  %v229 = vadd.f32 0.0, %v228
  %v230 = vpop.f32.mrb[0].mxu0
  %231 = vmatprep.mubr.bf16.mxu0 0
  %232 = vmatmul.mubr.bf16.gmra.mrb[0].mxu0 %v151
  %v233 = vpop.f32.mrb[0].mxu0
  %v234 = vadd.f32 0.0, %v233
  %v235 = vpop.f32.mrb[0].mxu0
  %v236 = vpop.f32.mrb[0].mxu0
  %v237 = vadd.f32 0.0, %v236
  %v238 = vpop.f32.mrb[0].mxu0
  %239 = vmatprep.mubr.bf16.mxu0 0
  %240 = vmatmul.mubr.bf16.gmra.mrb[0].mxu0 %v154
  %v241 = vpop.f32.mrb[0].mxu0
  %v242 = vadd.f32 0.0, %v241
  %v243 = vpop.f32.mrb[0].mxu0
  %v244 = vpop.f32.mrb[0].mxu0
  %v245 = vadd.f32 0.0, %v244
  %v246 = vpop.f32.mrb[0].mxu0
  %247 = vmatprep.mubr.bf16.mxu0 0
  %248 = vmatmul.mubr.bf16.gmra.mrb[0].mxu0 %v157
  %v249 = vpop.f32.mrb[0].mxu0
  %v250 = vadd.f32 0.0, %v249
  %v251 = vpop.f32.mrb[0].mxu0
  %v252 = vpop.f32.mrb[0].mxu0
  %v253 = vadd.f32 0.0, %v252
  %v254 = vpop.f32.mrb[0].mxu0
  %255 = vdwg.mxu0
  %v256 = vld [vmem:[%s4] sm:$0x1]
  %v258 = vlaneseq
  %v259 = vshrl.u32 %v258, 7
  %v260 = vsub.s32 0, %v259
  %v261 = vrot.slane %v256, %v260
  %v263 = vmul.f32 %v194, %v261
  %v264 = vmul.f32 %v197, %v261
  %v265 = vmul.f32 %v202, %v261
  %v266 = vmul.f32 %v205, %v261
  %v267 = vmul.f32 %v210, %v261
  %v268 = vmul.f32 %v213, %v261
  %v269 = vmul.f32 %v218, %v261
  %v270 = vmul.f32 %v221, %v261
  %v271 = vmul.f32 %v226, %v261
  %v272 = vmul.f32 %v229, %v261
  %v273 = vmul.f32 %v234, %v261
  %v274 = vmul.f32 %v237, %v261
  %v275 = vmul.f32 %v242, %v261
  %v276 = vmul.f32 %v245, %v261
  %v277 = vmul.f32 %v250, %v261
  %v278 = vmul.f32 %v253, %v261
  %v279 = vld [vmem:[%s5] sm:$0x1]
  %v281 = vlaneseq
  %v282 = vshrl.u32 %v281, 7
  %v283 = vsub.s32 0, %v282
  %v284 = vrot.slane %v279, %v283
  %v286 = vadd.f32 %v263, %v284
  %v287 = vadd.f32 %v264, %v284
  %v288 = vadd.f32 %v265, %v284
  %v289 = vadd.f32 %v266, %v284
  %v290 = vadd.f32 %v267, %v284
  %v291 = vadd.f32 %v268, %v284
  %v292 = vadd.f32 %v269, %v284
  %v293 = vadd.f32 %v270, %v284
  %v294 = vadd.f32 %v271, %v284
  %v295 = vadd.f32 %v272, %v284
  %v296 = vadd.f32 %v273, %v284
  %v297 = vadd.f32 %v274, %v284
  %v298 = vadd.f32 %v275, %v284
  %v299 = vadd.f32 %v276, %v284
  %v300 = vadd.f32 %v277, %v284
  %v301 = vadd.f32 %v278, %v284
  %v302 = vmax.f32 %v286, 0.0
  %v303 = vmax.f32 %v287, 0.0
  %v304 = vmax.f32 %v288, 0.0
  %v305 = vmax.f32 %v289, 0.0
  %v306 = vmax.f32 %v290, 0.0
  %v307 = vmax.f32 %v291, 0.0
  %v308 = vmax.f32 %v292, 0.0
  %v309 = vmax.f32 %v293, 0.0
  %v310 = vmax.f32 %v294, 0.0
  %v311 = vmax.f32 %v295, 0.0
  %v312 = vmax.f32 %v296, 0.0
  %v313 = vmax.f32 %v297, 0.0
  %v314 = vmax.f32 %v298, 0.0
  %v315 = vmax.f32 %v299, 0.0
  %v316 = vmax.f32 %v300, 0.0
  %v317 = vmax.f32 %v301, 0.0
  %v318 = vpack.c.bf16 %v303, %v302
  %v319 = vpack.c.bf16 %v305, %v304
  %v320 = vpack.c.bf16 %v307, %v306
  %v321 = vpack.c.bf16 %v309, %v308
  %v322 = vpack.c.bf16 %v311, %v310
  %v323 = vpack.c.bf16 %v313, %v312
  %v324 = vpack.c.bf16 %v315, %v314
  %v325 = vpack.c.bf16 %v317, %v316
  %v334 = vunpack.c.l.b16 %v318
  %v335 = vunpack.c.h.b16 %v318
  %v336 = vunpack.c.l.b16 %v319
  %v337 = vunpack.c.h.b16 %v319
  %v338 = vunpack.c.l.b16 %v320
  %v339 = vunpack.c.h.b16 %v320
  %v340 = vunpack.c.l.b16 %v321
  %v341 = vunpack.c.h.b16 %v321
  %v342 = vunpack.c.l.b16 %v322
  %v343 = vunpack.c.h.b16 %v322
  %v344 = vunpack.c.l.b16 %v323
  %v345 = vunpack.c.h.b16 %v323
  %v346 = vunpack.c.l.b16 %v324
  %v347 = vunpack.c.h.b16 %v324
  %v348 = vunpack.c.l.b16 %v325
  %v349 = vunpack.c.h.b16 %v325
  %v350 = vpack.c.b16 %v334, %v334
  %v351 = vpack.c.b16 %v335, %v335
  %v352 = vpack.c.b16 %v336, %v336
  %v353 = vpack.c.b16 %v337, %v337
  %v354 = vpack.c.b16 %v338, %v338
  %v355 = vpack.c.b16 %v339, %v339
  %v356 = vpack.c.b16 %v340, %v340
  %v357 = vpack.c.b16 %v341, %v341
  %v358 = vpack.c.b16 %v342, %v342
  %v359 = vpack.c.b16 %v343, %v343
  %v360 = vpack.c.b16 %v344, %v344
  %v361 = vpack.c.b16 %v345, %v345
  %v362 = vpack.c.b16 %v346, %v346
  %v363 = vpack.c.b16 %v347, %v347
  %v364 = vpack.c.b16 %v348, %v348
  %v365 = vpack.c.b16 %v349, %v349
  %vm382 = vcmask 257024
  %383 = vst.msk [vmem:[%s6] sm:$0xf] %vm382, %v350
  %384 = vst.msk [vmem:[%s6 + $0x4] sm:$0xf] %vm382, %v351
  %385 = vst.msk [vmem:[%s6 + $0x8] sm:$0xf] %vm382, %v352
  %386 = vst.msk [vmem:[%s6 + $0xc] sm:$0xf] %vm382, %v353
  %387 = vst.msk [vmem:[%s6 + $0x10] sm:$0xf] %vm382, %v354
  %388 = vst.msk [vmem:[%s6 + $0x14] sm:$0xf] %vm382, %v355
  %389 = vst.msk [vmem:[%s6 + $0x18] sm:$0xf] %vm382, %v356
  %390 = vst.msk [vmem:[%s6 + $0x1c] sm:$0xf] %vm382, %v357
  %391 = vst.msk [vmem:[%s6 + $0x20] sm:$0xf] %vm382, %v358
  %392 = vst.msk [vmem:[%s6 + $0x24] sm:$0xf] %vm382, %v359
  %393 = vst.msk [vmem:[%s6 + $0x28] sm:$0xf] %vm382, %v360
  %394 = vst.msk [vmem:[%s6 + $0x2c] sm:$0xf] %vm382, %v361
  %395 = vst.msk [vmem:[%s6 + $0x30] sm:$0xf] %vm382, %v362
  %396 = vst.msk [vmem:[%s6 + $0x34] sm:$0xf] %vm382, %v363
  %397 = vst.msk [vmem:[%s6 + $0x38] sm:$0xf] %vm382, %v364
  %398 = vst.msk [vmem:[%s6 + $0x3c] sm:$0xf] %vm382, %v365
  // Predicated region
  $region26: #{pneumonia_severity_net.15} parent=0 // pred_check
    _
  $region27: #{pneumonia_severity_net.15} parent=0 // pred_check_branch
    %400 = sbr.rel (0) target = $region29
  $region28: #{pneumonia_severity_net.15} parent=0 // pred_region
    _
  $region29: #{pneumonia_severity_net.15} parent=0 // pred_fallthru
    _
  // Predicated region
  $region30: #{pneumonia_severity_net.15} parent=0 // pred_check
    _
  $region31: #{pneumonia_severity_net.15} parent=0 // pred_check_branch
    %402 = sbr.rel (0) target = $region33
  $region32: #{pneumonia_severity_net.15} parent=0 // pred_region
    _
  $region33: #{pneumonia_severity_net.15} parent=0 // pred_fallthru
    _

// kernel: pneumonia_severity_net.14
$region0: #{pneumonia_severity_net.14}
  #allocation0 [shape = 'u32[]', space=smem, size = 0x4, offset = 0x4, fixed_abs, tag = 'smem constant byte address 0x4 - core index']
  #allocation1 [shape = 'u32[144,128]{1,0:T(1,128)}', space=vmem, size = 0x12000, scoped, tag = 'internal scratch']
  %s0 = inlined_call_operand.vmem [shape: bf16[128,16], index: 0, kind: input, shape index: {}]
  %s1 = inlined_call_operand.vmem [shape: bf16[128,16], index: 1, kind: input, shape index: {}]
  %s2 = inlined_call_operand.vmem [shape: bf16[128,16], index: 2, kind: input, shape index: {}]
  %s3 = inlined_call_operand.vmem [shape: bf16[128,16], index: 3, kind: input, shape index: {}]
  %s4 = inlined_call_operand.vmem [shape: bf16[128,16], index: 4, kind: input, shape index: {}]
  %s5 = inlined_call_operand.vmem [shape: bf16[128,16], index: 5, kind: input, shape index: {}]
  %s6 = inlined_call_operand.vmem [shape: bf16[128,16], index: 6, kind: input, shape index: {}]
  %s7 = inlined_call_operand.vmem [shape: bf16[128,16], index: 7, kind: input, shape index: {}]
  %s8 = inlined_call_operand.vmem [shape: bf16[128,16], index: 8, kind: input, shape index: {}]
  %s9 = inlined_call_operand.vmem [shape: bf16[128,16], index: 9, kind: output, shape index: {}]
  %s10 = sld [smem:[#allocation0]]
  $region46: #{pneumonia_severity_net.14} parent=0
    _
  %s12 = ssub.s32 1, %s10
  %s13 = scalar_select 0, %s12, %s10
  // Predicated region
  $region2: #{pneumonia_severity_net.14} parent=0 // pred_check
    _
  $region3: #{pneumonia_severity_net.14} parent=0 // pred_check_branch
    %15 = sbr.rel (0) target = $region5
  $region4: #{pneumonia_severity_net.14} parent=0 // pred_region
    _
  $region5: #{pneumonia_severity_net.14} parent=0 // pred_fallthru
    _
  // Predicated region
  $region6: #{pneumonia_severity_net.14} parent=0 // pred_check
    _
  $region7: #{pneumonia_severity_net.14} parent=0 // pred_check_branch
    %17 = sbr.rel (0) target = $region9
  $region8: #{pneumonia_severity_net.14} parent=0 // pred_region
    _
  $region9: #{pneumonia_severity_net.14} parent=0 // pred_fallthru
    _
  // Predicated region
  $region10: #{pneumonia_severity_net.14} parent=0 // pred_check
    _
  $region11: #{pneumonia_severity_net.14} parent=0 // pred_check_branch
    %19 = sbr.rel (0) target = $region13
  $region12: #{pneumonia_severity_net.14} parent=0 // pred_region
    _
  $region13: #{pneumonia_severity_net.14} parent=0 // pred_fallthru
    _
  // Predicated region
  $region14: #{pneumonia_severity_net.14} parent=0 // pred_check
    _
  $region15: #{pneumonia_severity_net.14} parent=0 // pred_check_branch
    %21 = sbr.rel (0) target = $region17
  $region16: #{pneumonia_severity_net.14} parent=0 // pred_region
    _
  $region17: #{pneumonia_severity_net.14} parent=0 // pred_fallthru
    _
  // Predicated region
  $region18: #{pneumonia_severity_net.14} parent=0 // pred_check
    _
  $region19: #{pneumonia_severity_net.14} parent=0 // pred_check_branch
    %23 = sbr.rel (0) target = $region21
  $region20: #{pneumonia_severity_net.14} parent=0 // pred_region
    _
  $region21: #{pneumonia_severity_net.14} parent=0 // pred_fallthru
    _
  // Predicated region
  $region22: #{pneumonia_severity_net.14} parent=0 // pred_check
    _
  $region23: #{pneumonia_severity_net.14} parent=0 // pred_check_branch
    %25 = sbr.rel (0) target = $region25
  $region24: #{pneumonia_severity_net.14} parent=0 // pred_region
    _
  $region25: #{pneumonia_severity_net.14} parent=0 // pred_fallthru
    _
  // Predicated region
  $region26: #{pneumonia_severity_net.14} parent=0 // pred_check
    _
  $region27: #{pneumonia_severity_net.14} parent=0 // pred_check_branch
    %27 = sbr.rel (0) target = $region29
  $region28: #{pneumonia_severity_net.14} parent=0 // pred_region
    _
  $region29: #{pneumonia_severity_net.14} parent=0 // pred_fallthru
    _
  // Predicated region
  $region30: #{pneumonia_severity_net.14} parent=0 // pred_check
    _
  $region31: #{pneumonia_severity_net.14} parent=0 // pred_check_branch
    %29 = sbr.rel (0) target = $region33
  $region32: #{pneumonia_severity_net.14} parent=0 // pred_region
    _
  $region33: #{pneumonia_severity_net.14} parent=0 // pred_fallthru
    _
  // Predicated region
  $region34: #{pneumonia_severity_net.14} parent=0 // pred_check
    _
  $region35: #{pneumonia_severity_net.14} parent=0 // pred_check_branch
    %31 = sbr.rel (0) target = $region37
  $region36: #{pneumonia_severity_net.14} parent=0 // pred_region
    _
  $region37: #{pneumonia_severity_net.14} parent=0 // pred_fallthru
    _
  %v32 = vld [vmem:[%s0] sm:$0xf]
  %v33 = vld [vmem:[%s0 + $0x4] sm:$0xf]
  %v34 = vld [vmem:[%s0 + $0x8] sm:$0xf]
  %v35 = vld [vmem:[%s0 + $0xc] sm:$0xf]
  %v36 = vld [vmem:[%s0 + $0x10] sm:$0xf]
  %v37 = vld [vmem:[%s0 + $0x14] sm:$0xf]
  %v38 = vld [vmem:[%s0 + $0x18] sm:$0xf]
  %v39 = vld [vmem:[%s0 + $0x1c] sm:$0xf]
  %v40 = vld [vmem:[%s0 + $0x20] sm:$0xf]
  %v41 = vld [vmem:[%s0 + $0x24] sm:$0xf]
  %v42 = vld [vmem:[%s0 + $0x28] sm:$0xf]
  %v43 = vld [vmem:[%s0 + $0x2c] sm:$0xf]
  %v44 = vld [vmem:[%s0 + $0x30] sm:$0xf]
  %v45 = vld [vmem:[%s0 + $0x34] sm:$0xf]
  %v46 = vld [vmem:[%s0 + $0x38] sm:$0xf]
  %v47 = vld [vmem:[%s0 + $0x3c] sm:$0xf]
  %v48 = vunpack.c.l.bf16 %v32
  %v49 = vunpack.c.l.bf16 %v33
  %v50 = vunpack.c.l.bf16 %v34
  %v51 = vunpack.c.l.bf16 %v35
  %v52 = vunpack.c.l.bf16 %v36
  %v53 = vunpack.c.l.bf16 %v37
  %v54 = vunpack.c.l.bf16 %v38
  %v55 = vunpack.c.l.bf16 %v39
  %v56 = vunpack.c.l.bf16 %v40
  %v57 = vunpack.c.l.bf16 %v41
  %v58 = vunpack.c.l.bf16 %v42
  %v59 = vunpack.c.l.bf16 %v43
  %v60 = vunpack.c.l.bf16 %v44
  %v61 = vunpack.c.l.bf16 %v45
  %v62 = vunpack.c.l.bf16 %v46
  %v63 = vunpack.c.l.bf16 %v47
  %v64 = vld [vmem:[%s1] sm:$0xf]
  %v65 = vld [vmem:[%s1 + $0x4] sm:$0xf]
  %v66 = vld [vmem:[%s1 + $0x8] sm:$0xf]
  %v67 = vld [vmem:[%s1 + $0xc] sm:$0xf]
  %v68 = vld [vmem:[%s1 + $0x10] sm:$0xf]
  %v69 = vld [vmem:[%s1 + $0x14] sm:$0xf]
  %v70 = vld [vmem:[%s1 + $0x18] sm:$0xf]
  %v71 = vld [vmem:[%s1 + $0x1c] sm:$0xf]
  %v72 = vld [vmem:[%s1 + $0x20] sm:$0xf]
  %v73 = vld [vmem:[%s1 + $0x24] sm:$0xf]
  %v74 = vld [vmem:[%s1 + $0x28] sm:$0xf]
  %v75 = vld [vmem:[%s1 + $0x2c] sm:$0xf]
  %v76 = vld [vmem:[%s1 + $0x30] sm:$0xf]
  %v77 = vld [vmem:[%s1 + $0x34] sm:$0xf]
  %v78 = vld [vmem:[%s1 + $0x38] sm:$0xf]
  %v79 = vld [vmem:[%s1 + $0x3c] sm:$0xf]
  %v80 = vunpack.c.l.bf16 %v64
  %v81 = vunpack.c.l.bf16 %v65
  %v82 = vunpack.c.l.bf16 %v66
  %v83 = vunpack.c.l.bf16 %v67
  %v84 = vunpack.c.l.bf16 %v68
  %v85 = vunpack.c.l.bf16 %v69
  %v86 = vunpack.c.l.bf16 %v70
  %v87 = vunpack.c.l.bf16 %v71
  %v88 = vunpack.c.l.bf16 %v72
  %v89 = vunpack.c.l.bf16 %v73
  %v90 = vunpack.c.l.bf16 %v74
  %v91 = vunpack.c.l.bf16 %v75
  %v92 = vunpack.c.l.bf16 %v76
  %v93 = vunpack.c.l.bf16 %v77
  %v94 = vunpack.c.l.bf16 %v78
  %v95 = vunpack.c.l.bf16 %v79
  %v96 = vmax.f32 %v48, %v80
  %v97 = vmax.f32 %v49, %v81
  %v98 = vmax.f32 %v50, %v82
  %v99 = vmax.f32 %v51, %v83
  %v100 = vmax.f32 %v52, %v84
  %v101 = vmax.f32 %v53, %v85
  %v102 = vmax.f32 %v54, %v86
  %v103 = vmax.f32 %v55, %v87
  %v104 = vmax.f32 %v56, %v88
  %v105 = vmax.f32 %v57, %v89
  %v106 = vmax.f32 %v58, %v90
  %v107 = vmax.f32 %v59, %v91
  %v108 = vmax.f32 %v60, %v92
  %v109 = vmax.f32 %v61, %v93
  %v110 = vmax.f32 %v62, %v94
  %v111 = vmax.f32 %v63, %v95
  %v112 = vld [vmem:[%s2] sm:$0xf]
  %v113 = vld [vmem:[%s2 + $0x4] sm:$0xf]
  %v114 = vld [vmem:[%s2 + $0x8] sm:$0xf]
  %v115 = vld [vmem:[%s2 + $0xc] sm:$0xf]
  %v116 = vld [vmem:[%s2 + $0x10] sm:$0xf]
  %v117 = vld [vmem:[%s2 + $0x14] sm:$0xf]
  %v118 = vld [vmem:[%s2 + $0x18] sm:$0xf]
  %v119 = vld [vmem:[%s2 + $0x1c] sm:$0xf]
  %v120 = vld [vmem:[%s2 + $0x20] sm:$0xf]
  %v121 = vld [vmem:[%s2 + $0x24] sm:$0xf]
  %v122 = vld [vmem:[%s2 + $0x28] sm:$0xf]
  %v123 = vld [vmem:[%s2 + $0x2c] sm:$0xf]
  %v124 = vld [vmem:[%s2 + $0x30] sm:$0xf]
  %v125 = vld [vmem:[%s2 + $0x34] sm:$0xf]
  %v126 = vld [vmem:[%s2 + $0x38] sm:$0xf]
  %v127 = vld [vmem:[%s2 + $0x3c] sm:$0xf]
  %v128 = vunpack.c.l.bf16 %v112
  %v129 = vunpack.c.l.bf16 %v113
  %v130 = vunpack.c.l.bf16 %v114
  %v131 = vunpack.c.l.bf16 %v115
  %v132 = vunpack.c.l.bf16 %v116
  %v133 = vunpack.c.l.bf16 %v117
  %v134 = vunpack.c.l.bf16 %v118
  %v135 = vunpack.c.l.bf16 %v119
  %v136 = vunpack.c.l.bf16 %v120
  %v137 = vunpack.c.l.bf16 %v121
  %v138 = vunpack.c.l.bf16 %v122
  %v139 = vunpack.c.l.bf16 %v123
  %v140 = vunpack.c.l.bf16 %v124
  %v141 = vunpack.c.l.bf16 %v125
  %v142 = vunpack.c.l.bf16 %v126
  %v143 = vunpack.c.l.bf16 %v127
  %v144 = vmax.f32 %v96, %v128
  %v145 = vmax.f32 %v97, %v129
  %v146 = vmax.f32 %v98, %v130
  %v147 = vmax.f32 %v99, %v131
  %v148 = vmax.f32 %v100, %v132
  %v149 = vmax.f32 %v101, %v133
  %v150 = vmax.f32 %v102, %v134
  %v151 = vmax.f32 %v103, %v135
  %v152 = vmax.f32 %v104, %v136
  %v153 = vmax.f32 %v105, %v137
  %v154 = vmax.f32 %v106, %v138
  %v155 = vmax.f32 %v107, %v139
  %v156 = vmax.f32 %v108, %v140
  %v157 = vmax.f32 %v109, %v141
  %v158 = vmax.f32 %v110, %v142
  %v159 = vmax.f32 %v111, %v143
  %v160 = vld [vmem:[%s3] sm:$0xf]
  %v161 = vld [vmem:[%s3 + $0x4] sm:$0xf]
  %v162 = vld [vmem:[%s3 + $0x8] sm:$0xf]
  %v163 = vld [vmem:[%s3 + $0xc] sm:$0xf]
  %v164 = vld [vmem:[%s3 + $0x10] sm:$0xf]
  %v165 = vld [vmem:[%s3 + $0x14] sm:$0xf]
  %v166 = vld [vmem:[%s3 + $0x18] sm:$0xf]
  %v167 = vld [vmem:[%s3 + $0x1c] sm:$0xf]
  %v168 = vld [vmem:[%s3 + $0x20] sm:$0xf]
  %v169 = vld [vmem:[%s3 + $0x24] sm:$0xf]
  %v170 = vld [vmem:[%s3 + $0x28] sm:$0xf]
  %v171 = vld [vmem:[%s3 + $0x2c] sm:$0xf]
  %v172 = vld [vmem:[%s3 + $0x30] sm:$0xf]
  %v173 = vld [vmem:[%s3 + $0x34] sm:$0xf]
  %v174 = vld [vmem:[%s3 + $0x38] sm:$0xf]
  %v175 = vld [vmem:[%s3 + $0x3c] sm:$0xf]
  %v176 = vunpack.c.l.bf16 %v160
  %v177 = vunpack.c.l.bf16 %v161
  %v178 = vunpack.c.l.bf16 %v162
  %v179 = vunpack.c.l.bf16 %v163
  %v180 = vunpack.c.l.bf16 %v164
  %v181 = vunpack.c.l.bf16 %v165
  %v182 = vunpack.c.l.bf16 %v166
  %v183 = vunpack.c.l.bf16 %v167
  %v184 = vunpack.c.l.bf16 %v168
  %v185 = vunpack.c.l.bf16 %v169
  %v186 = vunpack.c.l.bf16 %v170
  %v187 = vunpack.c.l.bf16 %v171
  %v188 = vunpack.c.l.bf16 %v172
  %v189 = vunpack.c.l.bf16 %v173
  %v190 = vunpack.c.l.bf16 %v174
  %v191 = vunpack.c.l.bf16 %v175
  %v192 = vmax.f32 %v144, %v176
  %v193 = vmax.f32 %v145, %v177
  %v194 = vmax.f32 %v146, %v178
  %v195 = vmax.f32 %v147, %v179
  %v196 = vmax.f32 %v148, %v180
  %v197 = vmax.f32 %v149, %v181
  %v198 = vmax.f32 %v150, %v182
  %v199 = vmax.f32 %v151, %v183
  %v200 = vmax.f32 %v152, %v184
  %v201 = vmax.f32 %v153, %v185
  %v202 = vmax.f32 %v154, %v186
  %v203 = vmax.f32 %v155, %v187
  %v204 = vmax.f32 %v156, %v188
  %v205 = vmax.f32 %v157, %v189
  %v206 = vmax.f32 %v158, %v190
  %v207 = vmax.f32 %v159, %v191
  %v208 = vld [vmem:[%s4] sm:$0xf]
  %v209 = vld [vmem:[%s4 + $0x4] sm:$0xf]
  %v210 = vld [vmem:[%s4 + $0x8] sm:$0xf]
  %v211 = vld [vmem:[%s4 + $0xc] sm:$0xf]
  %v212 = vld [vmem:[%s4 + $0x10] sm:$0xf]
  %v213 = vld [vmem:[%s4 + $0x14] sm:$0xf]
  %v214 = vld [vmem:[%s4 + $0x18] sm:$0xf]
  %v215 = vld [vmem:[%s4 + $0x1c] sm:$0xf]
  %v216 = vld [vmem:[%s4 + $0x20] sm:$0xf]
  %v217 = vld [vmem:[%s4 + $0x24] sm:$0xf]
  %v218 = vld [vmem:[%s4 + $0x28] sm:$0xf]
  %v219 = vld [vmem:[%s4 + $0x2c] sm:$0xf]
  %v220 = vld [vmem:[%s4 + $0x30] sm:$0xf]
  %v221 = vld [vmem:[%s4 + $0x34] sm:$0xf]
  %v222 = vld [vmem:[%s4 + $0x38] sm:$0xf]
  %v223 = vld [vmem:[%s4 + $0x3c] sm:$0xf]
  %v224 = vunpack.c.l.bf16 %v208
  %v225 = vunpack.c.l.bf16 %v209
  %v226 = vunpack.c.l.bf16 %v210
  %v227 = vunpack.c.l.bf16 %v211
  %v228 = vunpack.c.l.bf16 %v212
  %v229 = vunpack.c.l.bf16 %v213
  %v230 = vunpack.c.l.bf16 %v214
  %v231 = vunpack.c.l.bf16 %v215
  %v232 = vunpack.c.l.bf16 %v216
  %v233 = vunpack.c.l.bf16 %v217
  %v234 = vunpack.c.l.bf16 %v218
  %v235 = vunpack.c.l.bf16 %v219
  %v236 = vunpack.c.l.bf16 %v220
  %v237 = vunpack.c.l.bf16 %v221
  %v238 = vunpack.c.l.bf16 %v222
  %v239 = vunpack.c.l.bf16 %v223
  %v240 = vmax.f32 %v192, %v224
  %v241 = vmax.f32 %v193, %v225
  %v242 = vmax.f32 %v194, %v226
  %v243 = vmax.f32 %v195, %v227
  %v244 = vmax.f32 %v196, %v228
  %v245 = vmax.f32 %v197, %v229
  %v246 = vmax.f32 %v198, %v230
  %v247 = vmax.f32 %v199, %v231
  %v248 = vmax.f32 %v200, %v232
  %v249 = vmax.f32 %v201, %v233
  %v250 = vmax.f32 %v202, %v234
  %v251 = vmax.f32 %v203, %v235
  %v252 = vmax.f32 %v204, %v236
  %v253 = vmax.f32 %v205, %v237
  %v254 = vmax.f32 %v206, %v238
  %v255 = vmax.f32 %v207, %v239
  %v256 = vld [vmem:[%s5] sm:$0xf]
  %v257 = vld [vmem:[%s5 + $0x4] sm:$0xf]
  %v258 = vld [vmem:[%s5 + $0x8] sm:$0xf]
  %v259 = vld [vmem:[%s5 + $0xc] sm:$0xf]
  %v260 = vld [vmem:[%s5 + $0x10] sm:$0xf]
  %v261 = vld [vmem:[%s5 + $0x14] sm:$0xf]
  %v262 = vld [vmem:[%s5 + $0x18] sm:$0xf]
  %v263 = vld [vmem:[%s5 + $0x1c] sm:$0xf]
  %v264 = vld [vmem:[%s5 + $0x20] sm:$0xf]
  %v265 = vld [vmem:[%s5 + $0x24] sm:$0xf]
  %v266 = vld [vmem:[%s5 + $0x28] sm:$0xf]
  %v267 = vld [vmem:[%s5 + $0x2c] sm:$0xf]
  %v268 = vld [vmem:[%s5 + $0x30] sm:$0xf]
  %v269 = vld [vmem:[%s5 + $0x34] sm:$0xf]
  %v270 = vld [vmem:[%s5 + $0x38] sm:$0xf]
  %v271 = vld [vmem:[%s5 + $0x3c] sm:$0xf]
  %v272 = vunpack.c.l.bf16 %v256
  %v273 = vunpack.c.l.bf16 %v257
  %v274 = vunpack.c.l.bf16 %v258
  %v275 = vunpack.c.l.bf16 %v259
  %v276 = vunpack.c.l.bf16 %v260
  %v277 = vunpack.c.l.bf16 %v261
  %v278 = vunpack.c.l.bf16 %v262
  %v279 = vunpack.c.l.bf16 %v263
  %v280 = vunpack.c.l.bf16 %v264
  %v281 = vunpack.c.l.bf16 %v265
  %v282 = vunpack.c.l.bf16 %v266
  %v283 = vunpack.c.l.bf16 %v267
  %v284 = vunpack.c.l.bf16 %v268
  %v285 = vunpack.c.l.bf16 %v269
  %v286 = vunpack.c.l.bf16 %v270
  %v287 = vunpack.c.l.bf16 %v271
  %v288 = vmax.f32 %v240, %v272
  %v289 = vmax.f32 %v241, %v273
  %v290 = vmax.f32 %v242, %v274
  %v291 = vmax.f32 %v243, %v275
  %v292 = vmax.f32 %v244, %v276
  %v293 = vmax.f32 %v245, %v277
  %v294 = vmax.f32 %v246, %v278
  %v295 = vmax.f32 %v247, %v279
  %v296 = vmax.f32 %v248, %v280
  %v297 = vmax.f32 %v249, %v281
  %v298 = vmax.f32 %v250, %v282
  %v299 = vmax.f32 %v251, %v283
  %v300 = vmax.f32 %v252, %v284
  %v301 = vmax.f32 %v253, %v285
  %v302 = vmax.f32 %v254, %v286
  %v303 = vmax.f32 %v255, %v287
  %v304 = vld [vmem:[%s6] sm:$0xf]
  %v305 = vld [vmem:[%s6 + $0x4] sm:$0xf]
  %v306 = vld [vmem:[%s6 + $0x8] sm:$0xf]
  %v307 = vld [vmem:[%s6 + $0xc] sm:$0xf]
  %v308 = vld [vmem:[%s6 + $0x10] sm:$0xf]
  %v309 = vld [vmem:[%s6 + $0x14] sm:$0xf]
  %v310 = vld [vmem:[%s6 + $0x18] sm:$0xf]
  %v311 = vld [vmem:[%s6 + $0x1c] sm:$0xf]
  %v312 = vld [vmem:[%s6 + $0x20] sm:$0xf]
  %v313 = vld [vmem:[%s6 + $0x24] sm:$0xf]
  %v314 = vld [vmem:[%s6 + $0x28] sm:$0xf]
  %v315 = vld [vmem:[%s6 + $0x2c] sm:$0xf]
  %v316 = vld [vmem:[%s6 + $0x30] sm:$0xf]
  %v317 = vld [vmem:[%s6 + $0x34] sm:$0xf]
  %v318 = vld [vmem:[%s6 + $0x38] sm:$0xf]
  %v319 = vld [vmem:[%s6 + $0x3c] sm:$0xf]
  %v320 = vunpack.c.l.bf16 %v304
  %v321 = vunpack.c.l.bf16 %v305
  %v322 = vunpack.c.l.bf16 %v306
  %v323 = vunpack.c.l.bf16 %v307
  %v324 = vunpack.c.l.bf16 %v308
  %v325 = vunpack.c.l.bf16 %v309
  %v326 = vunpack.c.l.bf16 %v310
  %v327 = vunpack.c.l.bf16 %v311
  %v328 = vunpack.c.l.bf16 %v312
  %v329 = vunpack.c.l.bf16 %v313
  %v330 = vunpack.c.l.bf16 %v314
  %v331 = vunpack.c.l.bf16 %v315
  %v332 = vunpack.c.l.bf16 %v316
  %v333 = vunpack.c.l.bf16 %v317
  %v334 = vunpack.c.l.bf16 %v318
  %v335 = vunpack.c.l.bf16 %v319
  %v336 = vmax.f32 %v288, %v320
  %v337 = vmax.f32 %v289, %v321
  %v338 = vmax.f32 %v290, %v322
  %v339 = vmax.f32 %v291, %v323
  %v340 = vmax.f32 %v292, %v324
  %v341 = vmax.f32 %v293, %v325
  %v342 = vmax.f32 %v294, %v326
  %v343 = vmax.f32 %v295, %v327
  %v344 = vmax.f32 %v296, %v328
  %v345 = vmax.f32 %v297, %v329
  %v346 = vmax.f32 %v298, %v330
  %v347 = vmax.f32 %v299, %v331
  %v348 = vmax.f32 %v300, %v332
  %v349 = vmax.f32 %v301, %v333
  %v350 = vmax.f32 %v302, %v334
  %v351 = vmax.f32 %v303, %v335
  %v352 = vld [vmem:[%s7] sm:$0xf]
  %v353 = vld [vmem:[%s7 + $0x4] sm:$0xf]
  %v354 = vld [vmem:[%s7 + $0x8] sm:$0xf]
  %v355 = vld [vmem:[%s7 + $0xc] sm:$0xf]
  %v356 = vld [vmem:[%s7 + $0x10] sm:$0xf]
  %v357 = vld [vmem:[%s7 + $0x14] sm:$0xf]
  %v358 = vld [vmem:[%s7 + $0x18] sm:$0xf]
  %v359 = vld [vmem:[%s7 + $0x1c] sm:$0xf]
  %v360 = vld [vmem:[%s7 + $0x20] sm:$0xf]
  %v361 = vld [vmem:[%s7 + $0x24] sm:$0xf]
  %v362 = vld [vmem:[%s7 + $0x28] sm:$0xf]
  %v363 = vld [vmem:[%s7 + $0x2c] sm:$0xf]
  %v364 = vld [vmem:[%s7 + $0x30] sm:$0xf]
  %v365 = vld [vmem:[%s7 + $0x34] sm:$0xf]
  %v366 = vld [vmem:[%s7 + $0x38] sm:$0xf]
  %v367 = vld [vmem:[%s7 + $0x3c] sm:$0xf]
  %v368 = vunpack.c.l.bf16 %v352
  %v369 = vunpack.c.l.bf16 %v353
  %v370 = vunpack.c.l.bf16 %v354
  %v371 = vunpack.c.l.bf16 %v355
  %v372 = vunpack.c.l.bf16 %v356
  %v373 = vunpack.c.l.bf16 %v357
  %v374 = vunpack.c.l.bf16 %v358
  %v375 = vunpack.c.l.bf16 %v359
  %v376 = vunpack.c.l.bf16 %v360
  %v377 = vunpack.c.l.bf16 %v361
  %v378 = vunpack.c.l.bf16 %v362
  %v379 = vunpack.c.l.bf16 %v363
  %v380 = vunpack.c.l.bf16 %v364
  %v381 = vunpack.c.l.bf16 %v365
  %v382 = vunpack.c.l.bf16 %v366
  %v383 = vunpack.c.l.bf16 %v367
  %v384 = vmax.f32 %v336, %v368
  %v385 = vmax.f32 %v337, %v369
  %v386 = vmax.f32 %v338, %v370
  %v387 = vmax.f32 %v339, %v371
  %v388 = vmax.f32 %v340, %v372
  %v389 = vmax.f32 %v341, %v373
  %v390 = vmax.f32 %v342, %v374
  %v391 = vmax.f32 %v343, %v375
  %v392 = vmax.f32 %v344, %v376
  %v393 = vmax.f32 %v345, %v377
  %v394 = vmax.f32 %v346, %v378
  %v395 = vmax.f32 %v347, %v379
  %v396 = vmax.f32 %v348, %v380
  %v397 = vmax.f32 %v349, %v381
  %v398 = vmax.f32 %v350, %v382
  %v399 = vmax.f32 %v351, %v383
  %v400 = vld [vmem:[%s8] sm:$0xf]
  %v401 = vld [vmem:[%s8 + $0x4] sm:$0xf]
  %v402 = vld [vmem:[%s8 + $0x8] sm:$0xf]
  %v403 = vld [vmem:[%s8 + $0xc] sm:$0xf]
  %v404 = vld [vmem:[%s8 + $0x10] sm:$0xf]
  %v405 = vld [vmem:[%s8 + $0x14] sm:$0xf]
  %v406 = vld [vmem:[%s8 + $0x18] sm:$0xf]
  %v407 = vld [vmem:[%s8 + $0x1c] sm:$0xf]
  %v408 = vld [vmem:[%s8 + $0x20] sm:$0xf]
  %v409 = vld [vmem:[%s8 + $0x24] sm:$0xf]
  %v410 = vld [vmem:[%s8 + $0x28] sm:$0xf]
  %v411 = vld [vmem:[%s8 + $0x2c] sm:$0xf]
  %v412 = vld [vmem:[%s8 + $0x30] sm:$0xf]
  %v413 = vld [vmem:[%s8 + $0x34] sm:$0xf]
  %v414 = vld [vmem:[%s8 + $0x38] sm:$0xf]
  %v415 = vld [vmem:[%s8 + $0x3c] sm:$0xf]
  %v416 = vunpack.c.l.bf16 %v400
  %v417 = vunpack.c.l.bf16 %v401
  %v418 = vunpack.c.l.bf16 %v402
  %v419 = vunpack.c.l.bf16 %v403
  %v420 = vunpack.c.l.bf16 %v404
  %v421 = vunpack.c.l.bf16 %v405
  %v422 = vunpack.c.l.bf16 %v406
  %v423 = vunpack.c.l.bf16 %v407
  %v424 = vunpack.c.l.bf16 %v408
  %v425 = vunpack.c.l.bf16 %v409
  %v426 = vunpack.c.l.bf16 %v410
  %v427 = vunpack.c.l.bf16 %v411
  %v428 = vunpack.c.l.bf16 %v412
  %v429 = vunpack.c.l.bf16 %v413
  %v430 = vunpack.c.l.bf16 %v414
  %v431 = vunpack.c.l.bf16 %v415
  %v432 = vmax.f32 %v384, %v416
  %v433 = vmax.f32 %v385, %v417
  %v434 = vmax.f32 %v386, %v418
  %v435 = vmax.f32 %v387, %v419
  %v436 = vmax.f32 %v388, %v420
  %v437 = vmax.f32 %v389, %v421
  %v438 = vmax.f32 %v390, %v422
  %v439 = vmax.f32 %v391, %v423
  %v440 = vmax.f32 %v392, %v424
  %v441 = vmax.f32 %v393, %v425
  %v442 = vmax.f32 %v394, %v426
  %v443 = vmax.f32 %v395, %v427
  %v444 = vmax.f32 %v396, %v428
  %v445 = vmax.f32 %v397, %v429
  %v446 = vmax.f32 %v398, %v430
  %v447 = vmax.f32 %v399, %v431
  %v448 = vpack.c.bf16 %v433, %v432
  %v449 = vpack.c.bf16 %v435, %v434
  %v450 = vpack.c.bf16 %v437, %v436
  %v451 = vpack.c.bf16 %v439, %v438
  %v452 = vpack.c.bf16 %v441, %v440
  %v453 = vpack.c.bf16 %v443, %v442
  %v454 = vpack.c.bf16 %v445, %v444
  %v455 = vpack.c.bf16 %v447, %v446
  %v464 = vunpack.c.l.b16 %v448
  %v465 = vunpack.c.h.b16 %v448
  %v466 = vunpack.c.l.b16 %v449
  %v467 = vunpack.c.h.b16 %v449
  %v468 = vunpack.c.l.b16 %v450
  %v469 = vunpack.c.h.b16 %v450
  %v470 = vunpack.c.l.b16 %v451
  %v471 = vunpack.c.h.b16 %v451
  %v472 = vunpack.c.l.b16 %v452
  %v473 = vunpack.c.h.b16 %v452
  %v474 = vunpack.c.l.b16 %v453
  %v475 = vunpack.c.h.b16 %v453
  %v476 = vunpack.c.l.b16 %v454
  %v477 = vunpack.c.h.b16 %v454
  %v478 = vunpack.c.l.b16 %v455
  %v479 = vunpack.c.h.b16 %v455
  %v480 = vpack.c.b16 %v464, %v464
  %v481 = vpack.c.b16 %v465, %v465
  %v482 = vpack.c.b16 %v466, %v466
  %v483 = vpack.c.b16 %v467, %v467
  %v484 = vpack.c.b16 %v468, %v468
  %v485 = vpack.c.b16 %v469, %v469
  %v486 = vpack.c.b16 %v470, %v470
  %v487 = vpack.c.b16 %v471, %v471
  %v488 = vpack.c.b16 %v472, %v472
  %v489 = vpack.c.b16 %v473, %v473
  %v490 = vpack.c.b16 %v474, %v474
  %v491 = vpack.c.b16 %v475, %v475
  %v492 = vpack.c.b16 %v476, %v476
  %v493 = vpack.c.b16 %v477, %v477
  %v494 = vpack.c.b16 %v478, %v478
  %v495 = vpack.c.b16 %v479, %v479
  %vm512 = vcmask 125952
  %513 = vst.msk [vmem:[%s9] sm:$0xf] %vm512, %v480
  %514 = vst.msk [vmem:[%s9 + $0x4] sm:$0xf] %vm512, %v481
  %515 = vst.msk [vmem:[%s9 + $0x8] sm:$0xf] %vm512, %v482
  %516 = vst.msk [vmem:[%s9 + $0xc] sm:$0xf] %vm512, %v483
  %517 = vst.msk [vmem:[%s9 + $0x10] sm:$0xf] %vm512, %v484
  %518 = vst.msk [vmem:[%s9 + $0x14] sm:$0xf] %vm512, %v485
  %519 = vst.msk [vmem:[%s9 + $0x18] sm:$0xf] %vm512, %v486
  %520 = vst.msk [vmem:[%s9 + $0x1c] sm:$0xf] %vm512, %v487
  %521 = vst.msk [vmem:[%s9 + $0x20] sm:$0xf] %vm512, %v488
  %522 = vst.msk [vmem:[%s9 + $0x24] sm:$0xf] %vm512, %v489
  %523 = vst.msk [vmem:[%s9 + $0x28] sm:$0xf] %vm512, %v490
  %524 = vst.msk [vmem:[%s9 + $0x2c] sm:$0xf] %vm512, %v491
  %525 = vst.msk [vmem:[%s9 + $0x30] sm:$0xf] %vm512, %v492
  %526 = vst.msk [vmem:[%s9 + $0x34] sm:$0xf] %vm512, %v493
  %527 = vst.msk [vmem:[%s9 + $0x38] sm:$0xf] %vm512, %v494
  %528 = vst.msk [vmem:[%s9 + $0x3c] sm:$0xf] %vm512, %v495
  // Predicated region
  $region38: #{pneumonia_severity_net.14} parent=0 // pred_check
    _
  $region39: #{pneumonia_severity_net.14} parent=0 // pred_check_branch
    %530 = sbr.rel (0) target = $region41
  $region40: #{pneumonia_severity_net.14} parent=0 // pred_region
    _
  $region41: #{pneumonia_severity_net.14} parent=0 // pred_fallthru
    _
  // Predicated region
  $region42: #{pneumonia_severity_net.14} parent=0 // pred_check
    _
  $region43: #{pneumonia_severity_net.14} parent=0 // pred_check_branch
    %532 = sbr.rel (0) target = $region45
  $region44: #{pneumonia_severity_net.14} parent=0 // pred_region
    _
  $region45: #{pneumonia_severity_net.14} parent=0 // pred_fallthru
    _

// kernel: pneumonia_severity_net.17
$region0: #{pneumonia_severity_net.17}
  #allocation0 [shape = 'u32[]', space=smem, size = 0x4, offset = 0x4, fixed_abs, tag = 'smem constant byte address 0x4 - core index']
  #allocation1 [shape = 'u32[144,128]{1,0:T(1,128)}', space=vmem, size = 0x12000, scoped, tag = 'internal scratch']
  %s0 = inlined_call_operand.vmem [shape: bf16[128,24], index: 0, kind: input, shape index: {}]
  %s1 = inlined_call_operand.vmem [shape: bf16[24,32], index: 1, kind: input, shape index: {}]
  %s2 = inlined_call_operand.vmem [shape: f32[1,24], index: 2, kind: input, shape index: {}]
  %s3 = inlined_call_operand.vmem [shape: f32[1,24], index: 3, kind: input, shape index: {}]
  %s4 = inlined_call_operand.vmem [shape: f32[1,32], index: 4, kind: input, shape index: {}]
  %s5 = inlined_call_operand.vmem [shape: f32[1,32], index: 5, kind: input, shape index: {}]
  %s6 = inlined_call_operand.vmem [shape: bf16[128,32], index: 6, kind: output, shape index: {}]
  %s7 = sld [smem:[#allocation0]]
  $region34: #{pneumonia_severity_net.17} parent=0
    _
  %s9 = ssub.s32 1, %s7
  %s10 = scalar_select 0, %s9, %s7
  // Predicated region
  $region2: #{pneumonia_severity_net.17} parent=0 // pred_check
    _
  $region3: #{pneumonia_severity_net.17} parent=0 // pred_check_branch
    %12 = sbr.rel (0) target = $region5
  $region4: #{pneumonia_severity_net.17} parent=0 // pred_region
    _
  $region5: #{pneumonia_severity_net.17} parent=0 // pred_fallthru
    _
  // Predicated region
  $region6: #{pneumonia_severity_net.17} parent=0 // pred_check
    _
  $region7: #{pneumonia_severity_net.17} parent=0 // pred_check_branch
    %14 = sbr.rel (0) target = $region9
  $region8: #{pneumonia_severity_net.17} parent=0 // pred_region
    _
  $region9: #{pneumonia_severity_net.17} parent=0 // pred_fallthru
    _
  // Predicated region
  $region10: #{pneumonia_severity_net.17} parent=0 // pred_check
    _
  $region11: #{pneumonia_severity_net.17} parent=0 // pred_check_branch
    %16 = sbr.rel (0) target = $region13
  $region12: #{pneumonia_severity_net.17} parent=0 // pred_region
    _
  $region13: #{pneumonia_severity_net.17} parent=0 // pred_fallthru
    _
  // Predicated region
  $region14: #{pneumonia_severity_net.17} parent=0 // pred_check
    _
  $region15: #{pneumonia_severity_net.17} parent=0 // pred_check_branch
    %18 = sbr.rel (0) target = $region17
  $region16: #{pneumonia_severity_net.17} parent=0 // pred_region
    _
  $region17: #{pneumonia_severity_net.17} parent=0 // pred_fallthru
    _
  // Predicated region
  $region18: #{pneumonia_severity_net.17} parent=0 // pred_check
    _
  $region19: #{pneumonia_severity_net.17} parent=0 // pred_check_branch
    %20 = sbr.rel (0) target = $region21
  $region20: #{pneumonia_severity_net.17} parent=0 // pred_region
    _
  $region21: #{pneumonia_severity_net.17} parent=0 // pred_fallthru
    _
  // Predicated region
  $region22: #{pneumonia_severity_net.17} parent=0 // pred_check
    _
  $region23: #{pneumonia_severity_net.17} parent=0 // pred_check_branch
    %22 = sbr.rel (0) target = $region25
  $region24: #{pneumonia_severity_net.17} parent=0 // pred_region
    _
  $region25: #{pneumonia_severity_net.17} parent=0 // pred_fallthru
    _
  %v24 = vld [vmem:[%s2] sm:$0x1]
  %v25 = vld [vmem:[%s0] sm:$0xf]
  %v26 = vld [vmem:[%s0 + $0x4] sm:$0xf]
  %v27 = vld [vmem:[%s0 + $0x8] sm:$0xf]
  %v28 = vld [vmem:[%s0 + $0xc] sm:$0xf]
  %v29 = vld [vmem:[%s0 + $0x10] sm:$0xf]
  %v30 = vld [vmem:[%s0 + $0x14] sm:$0xf]
  %v31 = vld [vmem:[%s0 + $0x18] sm:$0xf]
  %v32 = vld [vmem:[%s0 + $0x1c] sm:$0xf]
  %v33 = vld [vmem:[%s0 + $0x20] sm:$0xf]
  %v34 = vld [vmem:[%s0 + $0x24] sm:$0xf]
  %v35 = vld [vmem:[%s0 + $0x28] sm:$0xf]
  %v36 = vld [vmem:[%s0 + $0x2c] sm:$0xf]
  %v37 = vld [vmem:[%s0 + $0x30] sm:$0xf]
  %v38 = vld [vmem:[%s0 + $0x34] sm:$0xf]
  %v39 = vld [vmem:[%s0 + $0x38] sm:$0xf]
  %v40 = vld [vmem:[%s0 + $0x3c] sm:$0xf]
  %v41 = vunpack.c.l.bf16 %v25
  %v42 = vunpack.c.l.bf16 %v26
  %v43 = vunpack.c.l.bf16 %v27
  %v44 = vunpack.c.l.bf16 %v28
  %v45 = vunpack.c.l.bf16 %v29
  %v46 = vunpack.c.l.bf16 %v30
  %v47 = vunpack.c.l.bf16 %v31
  %v48 = vunpack.c.l.bf16 %v32
  %v49 = vunpack.c.l.bf16 %v33
  %v50 = vunpack.c.l.bf16 %v34
  %v51 = vunpack.c.l.bf16 %v35
  %v52 = vunpack.c.l.bf16 %v36
  %v53 = vunpack.c.l.bf16 %v37
  %v54 = vunpack.c.l.bf16 %v38
  %v55 = vunpack.c.l.bf16 %v39
  %v56 = vunpack.c.l.bf16 %v40
  %v58 = vlaneseq
  %v59 = vshrl.u32 %v58, 7
  %v60 = vsub.s32 0, %v59
  %v61 = vrot.slane %v24, %v60
  %v63 = vmul.f32 %v61, %v41
  %v64 = vmul.f32 %v61, %v42
  %v65 = vmul.f32 %v61, %v43
  %v66 = vmul.f32 %v61, %v44
  %v67 = vmul.f32 %v61, %v45
  %v68 = vmul.f32 %v61, %v46
  %v69 = vmul.f32 %v61, %v47
  %v70 = vmul.f32 %v61, %v48
  %v71 = vmul.f32 %v61, %v49
  %v72 = vmul.f32 %v61, %v50
  %v73 = vmul.f32 %v61, %v51
  %v74 = vmul.f32 %v61, %v52
  %v75 = vmul.f32 %v61, %v53
  %v76 = vmul.f32 %v61, %v54
  %v77 = vmul.f32 %v61, %v55
  %v78 = vmul.f32 %v61, %v56
  %v79 = vld [vmem:[%s3] sm:$0x1]
  %v81 = vlaneseq
  %v82 = vshrl.u32 %v81, 7
  %v83 = vsub.s32 0, %v82
  %v84 = vrot.slane %v79, %v83
  %v86 = vadd.f32 %v63, %v84
  %v87 = vadd.f32 %v64, %v84
  %v88 = vadd.f32 %v65, %v84
  %v89 = vadd.f32 %v66, %v84
  %v90 = vadd.f32 %v67, %v84
  %v91 = vadd.f32 %v68, %v84
  %v92 = vadd.f32 %v69, %v84
  %v93 = vadd.f32 %v70, %v84
  %v94 = vadd.f32 %v71, %v84
  %v95 = vadd.f32 %v72, %v84
  %v96 = vadd.f32 %v73, %v84
  %v97 = vadd.f32 %v74, %v84
  %v98 = vadd.f32 %v75, %v84
  %v99 = vadd.f32 %v76, %v84
  %v100 = vadd.f32 %v77, %v84
  %v101 = vadd.f32 %v78, %v84
  %v102 = vmax.f32 %v86, 0.0
  %v103 = vmax.f32 %v87, 0.0
  %v104 = vmax.f32 %v88, 0.0
  %v105 = vmax.f32 %v89, 0.0
  %v106 = vmax.f32 %v90, 0.0
  %v107 = vmax.f32 %v91, 0.0
  %v108 = vmax.f32 %v92, 0.0
  %v109 = vmax.f32 %v93, 0.0
  %v110 = vmax.f32 %v94, 0.0
  %v111 = vmax.f32 %v95, 0.0
  %v112 = vmax.f32 %v96, 0.0
  %v113 = vmax.f32 %v97, 0.0
  %v114 = vmax.f32 %v98, 0.0
  %v115 = vmax.f32 %v99, 0.0
  %v116 = vmax.f32 %v100, 0.0
  %v117 = vmax.f32 %v101, 0.0
  %v118 = vpack.c.bf16 %v103, %v102
  %v119 = vpack.c.bf16 %v105, %v104
  %v120 = vpack.c.bf16 %v107, %v106
  %v121 = vpack.c.bf16 %v109, %v108
  %v122 = vpack.c.bf16 %v111, %v110
  %v123 = vpack.c.bf16 %v113, %v112
  %v124 = vpack.c.bf16 %v115, %v114
  %v125 = vpack.c.bf16 %v117, %v116
  %v126 = vld [vmem:[%s1] sm:$0xf]
  %v127 = vld [vmem:[%s1 + $0x4] sm:$0xf]
  %v128 = vld [vmem:[%s1 + $0x8] sm:$0xf]
  %v132 = vunpack.c.l.b16 %v126
  %v133 = vunpack.c.l.b16 %v127
  %v134 = vunpack.c.l.b16 %v128
  %v135 = vpack.c.b16 %v133, %v132
  %v136 = vpack.c.b16 %v134, %v134
  %vm138 = vcmask 195584
  %v140 = vsel %vm138, %v118, 0
  %v143 = vsel %vm138, %v119, 0
  %v146 = vsel %vm138, %v120, 0
  %v149 = vsel %vm138, %v121, 0
  %v152 = vsel %vm138, %v122, 0
  %v155 = vsel %vm138, %v123, 0
  %v158 = vsel %vm138, %v124, 0
  %v161 = vsel %vm138, %v125, 0
  %vm163 = vcmask 1043456
  %v165 = vsel %vm163, %v136, 0
  %167 = vmatprep.subr.bf16.mxu0 0
  %168 = vmatpush1.bf16.msra.mxu0 %v135
  %169 = vmatprep.subr.bf16.mxu0 0
  %170 = vmatpush1.bf16.msra.mxu0 %v165
  %171 = vmatprep.subr.bf16.mxu0 0
  %172 = vmatpush1.bf16.msra.mxu0 0
  %173 = vmatprep.subr.bf16.mxu0 0
  %174 = vmatpush1.bf16.msra.mxu0 0
  %175 = vmatprep.subr.bf16.mxu0 0
  %176 = vmatpush1.bf16.msra.mxu0 0
  %177 = vmatprep.subr.bf16.mxu0 0
  %178 = vmatpush1.bf16.msra.mxu0 0
  %179 = vmatprep.subr.bf16.mxu0 0
  %180 = vmatpush1.bf16.msra.mxu0 0
  %181 = vmatprep.subr.bf16.mxu0 0
  %182 = vmatpush1.bf16.msra.mxu0 0
  %183 = vmatprep.subr.bf16.mxu0 0
  %184 = vmatpush1.bf16.msra.mxu0 0
  %185 = vmatprep.subr.bf16.mxu0 0
  %186 = vmatpush1.bf16.msra.mxu0 0
  %187 = vmatprep.subr.bf16.mxu0 0
  %188 = vmatpush1.bf16.msra.mxu0 0
  %189 = vmatprep.subr.bf16.mxu0 0
  %190 = vmatpush1.bf16.msra.mxu0 0
  %191 = vmatprep.subr.bf16.mxu0 0
  %192 = vmatpush1.bf16.msra.mxu0 0
  %193 = vmatprep.subr.bf16.mxu0 0
  %194 = vmatpush1.bf16.msra.mxu0 0
  %195 = vmatprep.subr.bf16.mxu0 0
  %196 = vmatpush1.bf16.msra.mxu0 0
  %197 = vmatprep.subr.bf16.mxu0 0
  %198 = vmatpush1.bf16.msra.mxu0 0
  %199 = vmatprep.mubr.bf16.mxu0 0
  %200 = vmatmul.mubr.bf16.gmra.mrb[0].mxu0 %v140
  %v201 = vpop.f32.mrb[0].mxu0
  %v202 = vadd.f32 0.0, %v201
  %v203 = vpop.f32.mrb[0].mxu0
  %v204 = vpop.f32.mrb[0].mxu0
  %v205 = vadd.f32 0.0, %v204
  %v206 = vpop.f32.mrb[0].mxu0
  %207 = vmatprep.mubr.bf16.mxu0 0
  %208 = vmatmul.mubr.bf16.gmra.mrb[0].mxu0 %v143
  %v209 = vpop.f32.mrb[0].mxu0
  %v210 = vadd.f32 0.0, %v209
  %v211 = vpop.f32.mrb[0].mxu0
  %v212 = vpop.f32.mrb[0].mxu0
  %v213 = vadd.f32 0.0, %v212
  %v214 = vpop.f32.mrb[0].mxu0
  %215 = vmatprep.mubr.bf16.mxu0 0
  %216 = vmatmul.mubr.bf16.gmra.mrb[0].mxu0 %v146
  %v217 = vpop.f32.mrb[0].mxu0
  %v218 = vadd.f32 0.0, %v217
  %v219 = vpop.f32.mrb[0].mxu0
  %v220 = vpop.f32.mrb[0].mxu0
  %v221 = vadd.f32 0.0, %v220
  %v222 = vpop.f32.mrb[0].mxu0
  %223 = vmatprep.mubr.bf16.mxu0 0
  %224 = vmatmul.mubr.bf16.gmra.mrb[0].mxu0 %v149
  %v225 = vpop.f32.mrb[0].mxu0
  %v226 = vadd.f32 0.0, %v225
  %v227 = vpop.f32.mrb[0].mxu0
  %v228 = vpop.f32.mrb[0].mxu0
  %v229 = vadd.f32 0.0, %v228
  %v230 = vpop.f32.mrb[0].mxu0
  %231 = vmatprep.mubr.bf16.mxu0 0
  %232 = vmatmul.mubr.bf16.gmra.mrb[0].mxu0 %v152
  %v233 = vpop.f32.mrb[0].mxu0
  %v234 = vadd.f32 0.0, %v233
  %v235 = vpop.f32.mrb[0].mxu0
  %v236 = vpop.f32.mrb[0].mxu0
  %v237 = vadd.f32 0.0, %v236
  %v238 = vpop.f32.mrb[0].mxu0
  %239 = vmatprep.mubr.bf16.mxu0 0
  %240 = vmatmul.mubr.bf16.gmra.mrb[0].mxu0 %v155
  %v241 = vpop.f32.mrb[0].mxu0
  %v242 = vadd.f32 0.0, %v241
  %v243 = vpop.f32.mrb[0].mxu0
  %v244 = vpop.f32.mrb[0].mxu0
  %v245 = vadd.f32 0.0, %v244
  %v246 = vpop.f32.mrb[0].mxu0
  %247 = vmatprep.mubr.bf16.mxu0 0
  %248 = vmatmul.mubr.bf16.gmra.mrb[0].mxu0 %v158
  %v249 = vpop.f32.mrb[0].mxu0
  %v250 = vadd.f32 0.0, %v249
  %v251 = vpop.f32.mrb[0].mxu0
  %v252 = vpop.f32.mrb[0].mxu0
  %v253 = vadd.f32 0.0, %v252
  %v254 = vpop.f32.mrb[0].mxu0
  %255 = vmatprep.mubr.bf16.mxu0 0
  %256 = vmatmul.mubr.bf16.gmra.mrb[0].mxu0 %v161
  %v257 = vpop.f32.mrb[0].mxu0
  %v258 = vadd.f32 0.0, %v257
  %v259 = vpop.f32.mrb[0].mxu0
  %v260 = vpop.f32.mrb[0].mxu0
  %v261 = vadd.f32 0.0, %v260
  %v262 = vpop.f32.mrb[0].mxu0
  %263 = vdwg.mxu0
  %v264 = vld [vmem:[%s4] sm:$0x1]
  %v266 = vlaneseq
  %v267 = vshrl.u32 %v266, 7
  %v268 = vsub.s32 0, %v267
  %v269 = vrot.slane %v264, %v268
  %v271 = vmul.f32 %v202, %v269
  %v272 = vmul.f32 %v205, %v269
  %v273 = vmul.f32 %v210, %v269
  %v274 = vmul.f32 %v213, %v269
  %v275 = vmul.f32 %v218, %v269
  %v276 = vmul.f32 %v221, %v269
  %v277 = vmul.f32 %v226, %v269
  %v278 = vmul.f32 %v229, %v269
  %v279 = vmul.f32 %v234, %v269
  %v280 = vmul.f32 %v237, %v269
  %v281 = vmul.f32 %v242, %v269
  %v282 = vmul.f32 %v245, %v269
  %v283 = vmul.f32 %v250, %v269
  %v284 = vmul.f32 %v253, %v269
  %v285 = vmul.f32 %v258, %v269
  %v286 = vmul.f32 %v261, %v269
  %v287 = vld [vmem:[%s5] sm:$0x1]
  %v289 = vlaneseq
  %v290 = vshrl.u32 %v289, 7
  %v291 = vsub.s32 0, %v290
  %v292 = vrot.slane %v287, %v291
  %v294 = vadd.f32 %v271, %v292
  %v295 = vadd.f32 %v272, %v292
  %v296 = vadd.f32 %v273, %v292
  %v297 = vadd.f32 %v274, %v292
  %v298 = vadd.f32 %v275, %v292
  %v299 = vadd.f32 %v276, %v292
  %v300 = vadd.f32 %v277, %v292
  %v301 = vadd.f32 %v278, %v292
  %v302 = vadd.f32 %v279, %v292
  %v303 = vadd.f32 %v280, %v292
  %v304 = vadd.f32 %v281, %v292
  %v305 = vadd.f32 %v282, %v292
  %v306 = vadd.f32 %v283, %v292
  %v307 = vadd.f32 %v284, %v292
  %v308 = vadd.f32 %v285, %v292
  %v309 = vadd.f32 %v286, %v292
  %v310 = vmax.f32 %v294, 0.0
  %v311 = vmax.f32 %v295, 0.0
  %v312 = vmax.f32 %v296, 0.0
  %v313 = vmax.f32 %v297, 0.0
  %v314 = vmax.f32 %v298, 0.0
  %v315 = vmax.f32 %v299, 0.0
  %v316 = vmax.f32 %v300, 0.0
  %v317 = vmax.f32 %v301, 0.0
  %v318 = vmax.f32 %v302, 0.0
  %v319 = vmax.f32 %v303, 0.0
  %v320 = vmax.f32 %v304, 0.0
  %v321 = vmax.f32 %v305, 0.0
  %v322 = vmax.f32 %v306, 0.0
  %v323 = vmax.f32 %v307, 0.0
  %v324 = vmax.f32 %v308, 0.0
  %v325 = vmax.f32 %v309, 0.0
  %v326 = vpack.c.bf16 %v311, %v310
  %v327 = vpack.c.bf16 %v313, %v312
  %v328 = vpack.c.bf16 %v315, %v314
  %v329 = vpack.c.bf16 %v317, %v316
  %v330 = vpack.c.bf16 %v319, %v318
  %v331 = vpack.c.bf16 %v321, %v320
  %v332 = vpack.c.bf16 %v323, %v322
  %v333 = vpack.c.bf16 %v325, %v324
  %v342 = vunpack.c.l.b16 %v326
  %v343 = vunpack.c.h.b16 %v326
  %v344 = vunpack.c.l.b16 %v327
  %v345 = vunpack.c.h.b16 %v327
  %v346 = vunpack.c.l.b16 %v328
  %v347 = vunpack.c.h.b16 %v328
  %v348 = vunpack.c.l.b16 %v329
  %v349 = vunpack.c.h.b16 %v329
  %v350 = vunpack.c.l.b16 %v330
  %v351 = vunpack.c.h.b16 %v330
  %v352 = vunpack.c.l.b16 %v331
  %v353 = vunpack.c.h.b16 %v331
  %v354 = vunpack.c.l.b16 %v332
  %v355 = vunpack.c.h.b16 %v332
  %v356 = vunpack.c.l.b16 %v333
  %v357 = vunpack.c.h.b16 %v333
  %v358 = vpack.c.b16 %v342, %v342
  %v359 = vpack.c.b16 %v343, %v343
  %v360 = vpack.c.b16 %v344, %v344
  %v361 = vpack.c.b16 %v345, %v345
  %v362 = vpack.c.b16 %v346, %v346
  %v363 = vpack.c.b16 %v347, %v347
  %v364 = vpack.c.b16 %v348, %v348
  %v365 = vpack.c.b16 %v349, %v349
  %v366 = vpack.c.b16 %v350, %v350
  %v367 = vpack.c.b16 %v351, %v351
  %v368 = vpack.c.b16 %v352, %v352
  %v369 = vpack.c.b16 %v353, %v353
  %v370 = vpack.c.b16 %v354, %v354
  %v371 = vpack.c.b16 %v355, %v355
  %v372 = vpack.c.b16 %v356, %v356
  %v373 = vpack.c.b16 %v357, %v357
  %vm390 = vcmask 257024
  %391 = vst.msk [vmem:[%s6] sm:$0xf] %vm390, %v358
  %392 = vst.msk [vmem:[%s6 + $0x4] sm:$0xf] %vm390, %v359
  %393 = vst.msk [vmem:[%s6 + $0x8] sm:$0xf] %vm390, %v360
  %394 = vst.msk [vmem:[%s6 + $0xc] sm:$0xf] %vm390, %v361
  %395 = vst.msk [vmem:[%s6 + $0x10] sm:$0xf] %vm390, %v362
  %396 = vst.msk [vmem:[%s6 + $0x14] sm:$0xf] %vm390, %v363
  %397 = vst.msk [vmem:[%s6 + $0x18] sm:$0xf] %vm390, %v364
  %398 = vst.msk [vmem:[%s6 + $0x1c] sm:$0xf] %vm390, %v365
  %399 = vst.msk [vmem:[%s6 + $0x20] sm:$0xf] %vm390, %v366
  %400 = vst.msk [vmem:[%s6 + $0x24] sm:$0xf] %vm390, %v367
  %401 = vst.msk [vmem:[%s6 + $0x28] sm:$0xf] %vm390, %v368
  %402 = vst.msk [vmem:[%s6 + $0x2c] sm:$0xf] %vm390, %v369
  %403 = vst.msk [vmem:[%s6 + $0x30] sm:$0xf] %vm390, %v370
  %404 = vst.msk [vmem:[%s6 + $0x34] sm:$0xf] %vm390, %v371
  %405 = vst.msk [vmem:[%s6 + $0x38] sm:$0xf] %vm390, %v372
  %406 = vst.msk [vmem:[%s6 + $0x3c] sm:$0xf] %vm390, %v373
  // Predicated region
  $region26: #{pneumonia_severity_net.17} parent=0 // pred_check
    _
  $region27: #{pneumonia_severity_net.17} parent=0 // pred_check_branch
    %408 = sbr.rel (0) target = $region29
  $region28: #{pneumonia_severity_net.17} parent=0 // pred_region
    _
  $region29: #{pneumonia_severity_net.17} parent=0 // pred_fallthru
    _
  // Predicated region
  $region30: #{pneumonia_severity_net.17} parent=0 // pred_check
    _
  $region31: #{pneumonia_severity_net.17} parent=0 // pred_check_branch
    %410 = sbr.rel (0) target = $region33
  $region32: #{pneumonia_severity_net.17} parent=0 // pred_region
    _
  $region33: #{pneumonia_severity_net.17} parent=0 // pred_fallthru
    _

// kernel: pneumonia_severity_net.16
$region0: #{pneumonia_severity_net.16}
  #allocation0 [shape = 'u32[]', space=smem, size = 0x4, offset = 0x4, fixed_abs, tag = 'smem constant byte address 0x4 - core index']
  #allocation1 [shape = 'u32[144,128]{1,0:T(1,128)}', space=vmem, size = 0x12000, scoped, tag = 'internal scratch']
  %s0 = inlined_call_operand.vmem [shape: bf16[128,288], index: 0, kind: input, shape index: {}]
  %s1 = inlined_call_operand.vmem [shape: bf16[288,8], index: 1, kind: input, shape index: {}]
  %s2 = inlined_call_operand.vmem [shape: bf16[128,8], index: 2, kind: output, shape index: {}]
  %s3 = sld [smem:[#allocation0]]
  $region18: #{pneumonia_severity_net.16} parent=0
    _
  %s5 = ssub.s32 1, %s3
  %s6 = scalar_select 0, %s5, %s3
  // Predicated region
  $region2: #{pneumonia_severity_net.16} parent=0 // pred_check
    _
  $region3: #{pneumonia_severity_net.16} parent=0 // pred_check_branch
    %8 = sbr.rel (0) target = $region5
  $region4: #{pneumonia_severity_net.16} parent=0 // pred_region
    _
  $region5: #{pneumonia_severity_net.16} parent=0 // pred_fallthru
    _
  // Predicated region
  $region6: #{pneumonia_severity_net.16} parent=0 // pred_check
    _
  $region7: #{pneumonia_severity_net.16} parent=0 // pred_check_branch
    %10 = sbr.rel (0) target = $region9
  $region8: #{pneumonia_severity_net.16} parent=0 // pred_region
    _
  $region9: #{pneumonia_severity_net.16} parent=0 // pred_fallthru
    _
  %v12 = vld [vmem:[%s0] sm:$0xff]
  %v13 = vld [vmem:[%s0 + $0x8] sm:$0xf]
  %v14 = vld [vmem:[%s0 + $0xc] sm:$0xff]
  %v15 = vld [vmem:[%s0 + $0x14] sm:$0xf]
  %v16 = vld [vmem:[%s0 + $0x18] sm:$0xff]
  %v17 = vld [vmem:[%s0 + $0x20] sm:$0xf]
  %v18 = vld [vmem:[%s0 + $0x24] sm:$0xff]
  %v19 = vld [vmem:[%s0 + $0x2c] sm:$0xf]
  %v20 = vld [vmem:[%s0 + $0x30] sm:$0xff]
  %v21 = vld [vmem:[%s0 + $0x38] sm:$0xf]
  %v22 = vld [vmem:[%s0 + $0x3c] sm:$0xff]
  %v23 = vld [vmem:[%s0 + $0x44] sm:$0xf]
  %v24 = vld [vmem:[%s0 + $0x48] sm:$0xff]
  %v25 = vld [vmem:[%s0 + $0x50] sm:$0xf]
  %v26 = vld [vmem:[%s0 + $0x54] sm:$0xff]
  %v27 = vld [vmem:[%s0 + $0x5c] sm:$0xf]
  %v28 = vld [vmem:[%s0 + $0x60] sm:$0xff]
  %v29 = vld [vmem:[%s0 + $0x68] sm:$0xf]
  %v30 = vld [vmem:[%s0 + $0x6c] sm:$0xff]
  %v31 = vld [vmem:[%s0 + $0x74] sm:$0xf]
  %v32 = vld [vmem:[%s0 + $0x78] sm:$0xff]
  %v33 = vld [vmem:[%s0 + $0x80] sm:$0xf]
  %v34 = vld [vmem:[%s0 + $0x84] sm:$0xff]
  %v35 = vld [vmem:[%s0 + $0x8c] sm:$0xf]
  %v36 = vld [vmem:[%s0 + $0x90] sm:$0xff]
  %v37 = vld [vmem:[%s0 + $0x98] sm:$0xf]
  %v38 = vld [vmem:[%s0 + $0x9c] sm:$0xff]
  %v39 = vld [vmem:[%s0 + $0xa4] sm:$0xf]
  %v40 = vld [vmem:[%s0 + $0xa8] sm:$0xff]
  %v41 = vld [vmem:[%s0 + $0xb0] sm:$0xf]
  %v42 = vld [vmem:[%s0 + $0xb4] sm:$0xff]
  %v43 = vld [vmem:[%s0 + $0xbc] sm:$0xf]
  %v44 = vld [vmem:[%s1] sm:$0xf]
  %v45 = vld [vmem:[%s1 + $0x4] sm:$0xf]
  %v46 = vld [vmem:[%s1 + $0x8] sm:$0xf]
  %v47 = vld [vmem:[%s1 + $0xc] sm:$0xf]
  %v48 = vld [vmem:[%s1 + $0x10] sm:$0xf]
  %v49 = vld [vmem:[%s1 + $0x14] sm:$0xf]
  %v50 = vld [vmem:[%s1 + $0x18] sm:$0xf]
  %v51 = vld [vmem:[%s1 + $0x1c] sm:$0xf]
  %v52 = vld [vmem:[%s1 + $0x20] sm:$0xf]
  %v53 = vld [vmem:[%s1 + $0x24] sm:$0xf]
  %v54 = vld [vmem:[%s1 + $0x28] sm:$0xf]
  %v55 = vld [vmem:[%s1 + $0x2c] sm:$0xf]
  %v56 = vld [vmem:[%s1 + $0x30] sm:$0xf]
  %v57 = vld [vmem:[%s1 + $0x34] sm:$0xf]
  %v58 = vld [vmem:[%s1 + $0x38] sm:$0xf]
  %v59 = vld [vmem:[%s1 + $0x3c] sm:$0xf]
  %v60 = vld [vmem:[%s1 + $0x40] sm:$0xf]
  %v61 = vld [vmem:[%s1 + $0x44] sm:$0xf]
  %v62 = vld [vmem:[%s1 + $0x48] sm:$0xf]
  %v63 = vld [vmem:[%s1 + $0x4c] sm:$0xf]
  %v64 = vld [vmem:[%s1 + $0x50] sm:$0xf]
  %v65 = vld [vmem:[%s1 + $0x54] sm:$0xf]
  %v66 = vld [vmem:[%s1 + $0x58] sm:$0xf]
  %v67 = vld [vmem:[%s1 + $0x5c] sm:$0xf]
  %v68 = vld [vmem:[%s1 + $0x60] sm:$0xf]
  %v69 = vld [vmem:[%s1 + $0x64] sm:$0xf]
  %v70 = vld [vmem:[%s1 + $0x68] sm:$0xf]
  %v71 = vld [vmem:[%s1 + $0x6c] sm:$0xf]
  %v72 = vld [vmem:[%s1 + $0x70] sm:$0xf]
  %v73 = vld [vmem:[%s1 + $0x74] sm:$0xf]
  %v74 = vld [vmem:[%s1 + $0x78] sm:$0xf]
  %v75 = vld [vmem:[%s1 + $0x7c] sm:$0xf]
  %v76 = vld [vmem:[%s1 + $0x80] sm:$0xf]
  %v77 = vld [vmem:[%s1 + $0x84] sm:$0xf]
  %v78 = vld [vmem:[%s1 + $0x88] sm:$0xf]
  %v79 = vld [vmem:[%s1 + $0x8c] sm:$0xf]
  %v112 = vunpack.c.l.b16 %v12
  %v113 = vunpack.c.h.b16 %v12
  %v114 = vunpack.c.l.b16 %v13
  %v115 = vunpack.c.l.b16 %v14
  %v116 = vunpack.c.h.b16 %v14
  %v117 = vunpack.c.l.b16 %v15
  %v118 = vunpack.c.l.b16 %v16
  %v119 = vunpack.c.h.b16 %v16
  %v120 = vunpack.c.l.b16 %v17
  %v121 = vunpack.c.l.b16 %v18
  %v122 = vunpack.c.h.b16 %v18
  %v123 = vunpack.c.l.b16 %v19
  %v124 = vunpack.c.l.b16 %v20
  %v125 = vunpack.c.h.b16 %v20
  %v126 = vunpack.c.l.b16 %v21
  %v127 = vunpack.c.l.b16 %v22
  %v128 = vunpack.c.h.b16 %v22
  %v129 = vunpack.c.l.b16 %v23
  %v130 = vunpack.c.l.b16 %v24
  %v131 = vunpack.c.h.b16 %v24
  %v132 = vunpack.c.l.b16 %v25
  %v133 = vunpack.c.l.b16 %v26
  %v134 = vunpack.c.h.b16 %v26
  %v135 = vunpack.c.l.b16 %v27
  %v136 = vunpack.c.l.b16 %v28
  %v137 = vunpack.c.h.b16 %v28
  %v138 = vunpack.c.l.b16 %v29
  %v139 = vunpack.c.l.b16 %v30
  %v140 = vunpack.c.h.b16 %v30
  %v141 = vunpack.c.l.b16 %v31
  %v142 = vunpack.c.l.b16 %v32
  %v143 = vunpack.c.h.b16 %v32
  %v144 = vunpack.c.l.b16 %v33
  %v145 = vunpack.c.l.b16 %v34
  %v146 = vunpack.c.h.b16 %v34
  %v147 = vunpack.c.l.b16 %v35
  %v148 = vunpack.c.l.b16 %v36
  %v149 = vunpack.c.h.b16 %v36
  %v150 = vunpack.c.l.b16 %v37
  %v151 = vunpack.c.l.b16 %v38
  %v152 = vunpack.c.h.b16 %v38
  %v153 = vunpack.c.l.b16 %v39
  %v154 = vunpack.c.l.b16 %v40
  %v155 = vunpack.c.h.b16 %v40
  %v156 = vunpack.c.l.b16 %v41
  %v157 = vunpack.c.l.b16 %v42
  %v158 = vunpack.c.h.b16 %v42
  %v159 = vunpack.c.l.b16 %v43
  %v160 = vpack.c.b16 %v115, %v112
  %v161 = vpack.c.b16 %v116, %v113
  %v162 = vpack.c.b16 %v117, %v114
  %v163 = vpack.c.b16 %v121, %v118
  %v164 = vpack.c.b16 %v122, %v119
  %v165 = vpack.c.b16 %v123, %v120
  %v166 = vpack.c.b16 %v127, %v124
  %v167 = vpack.c.b16 %v128, %v125
  %v168 = vpack.c.b16 %v129, %v126
  %v169 = vpack.c.b16 %v133, %v130
  %v170 = vpack.c.b16 %v134, %v131
  %v171 = vpack.c.b16 %v135, %v132
  %v172 = vpack.c.b16 %v139, %v136
  %v173 = vpack.c.b16 %v140, %v137
  %v174 = vpack.c.b16 %v141, %v138
  %v175 = vpack.c.b16 %v145, %v142
  %v176 = vpack.c.b16 %v146, %v143
  %v177 = vpack.c.b16 %v147, %v144
  %v178 = vpack.c.b16 %v151, %v148
  %v179 = vpack.c.b16 %v152, %v149
  %v180 = vpack.c.b16 %v153, %v150
  %v181 = vpack.c.b16 %v157, %v154
  %v182 = vpack.c.b16 %v158, %v155
  %v183 = vpack.c.b16 %v159, %v156
  %v236 = vunpack.c.l.b16 %v44
  %v237 = vunpack.c.l.b16 %v45
  %v238 = vunpack.c.l.b16 %v46
  %v239 = vunpack.c.l.b16 %v47
  %v240 = vunpack.c.l.b16 %v48
  %v241 = vunpack.c.l.b16 %v49
  %v242 = vunpack.c.l.b16 %v50
  %v243 = vunpack.c.l.b16 %v51
  %v244 = vunpack.c.l.b16 %v52
  %v245 = vunpack.c.l.b16 %v53
  %v246 = vunpack.c.l.b16 %v54
  %v247 = vunpack.c.l.b16 %v55
  %v248 = vunpack.c.l.b16 %v56
  %v249 = vunpack.c.l.b16 %v57
  %v250 = vunpack.c.l.b16 %v58
  %v251 = vunpack.c.l.b16 %v59
  %v252 = vunpack.c.l.b16 %v60
  %v253 = vunpack.c.l.b16 %v61
  %v254 = vunpack.c.l.b16 %v62
  %v255 = vunpack.c.l.b16 %v63
  %v256 = vunpack.c.l.b16 %v64
  %v257 = vunpack.c.l.b16 %v65
  %v258 = vunpack.c.l.b16 %v66
  %v259 = vunpack.c.l.b16 %v67
  %v260 = vunpack.c.l.b16 %v68
  %v261 = vunpack.c.l.b16 %v69
  %v262 = vunpack.c.l.b16 %v70
  %v263 = vunpack.c.l.b16 %v71
  %v264 = vunpack.c.l.b16 %v72
  %v265 = vunpack.c.l.b16 %v73
  %v266 = vunpack.c.l.b16 %v74
  %v267 = vunpack.c.l.b16 %v75
  %v268 = vunpack.c.l.b16 %v76
  %v269 = vunpack.c.l.b16 %v77
  %v270 = vunpack.c.l.b16 %v78
  %v271 = vunpack.c.l.b16 %v79
  %v272 = vpack.c.b16 %v237, %v236
  %v273 = vpack.c.b16 %v239, %v238
  %v274 = vpack.c.b16 %v241, %v240
  %v275 = vpack.c.b16 %v243, %v242
  %v276 = vpack.c.b16 %v245, %v244
  %v277 = vpack.c.b16 %v247, %v246
  %v278 = vpack.c.b16 %v249, %v248
  %v279 = vpack.c.b16 %v251, %v250
  %v280 = vpack.c.b16 %v253, %v252
  %v281 = vpack.c.b16 %v255, %v254
  %v282 = vpack.c.b16 %v257, %v256
  %v283 = vpack.c.b16 %v259, %v258
  %v284 = vpack.c.b16 %v261, %v260
  %v285 = vpack.c.b16 %v263, %v262
  %v286 = vpack.c.b16 %v265, %v264
  %v287 = vpack.c.b16 %v267, %v266
  %v288 = vpack.c.b16 %v269, %v268
  %v289 = vpack.c.b16 %v271, %v270
  %vm308 = vcmask 261120
  %v310 = vsel %vm308, %v162, 0
  %v313 = vsel %vm308, %v165, 0
  %v316 = vsel %vm308, %v168, 0
  %v319 = vsel %vm308, %v171, 0
  %v322 = vsel %vm308, %v174, 0
  %v325 = vsel %vm308, %v177, 0
  %v328 = vsel %vm308, %v180, 0
  %v331 = vsel %vm308, %v183, 0
  %333 = vmatprep.subr.bf16.mxu0 0
  %334 = vmatpush1.bf16.msra.mxu0 %v272
  %335 = vmatprep.subr.bf16.mxu0 0
  %336 = vmatpush1.bf16.msra.mxu0 %v273
  %337 = vmatprep.subr.bf16.mxu0 0
  %338 = vmatpush1.bf16.msra.mxu0 %v274
  %339 = vmatprep.subr.bf16.mxu0 0
  %340 = vmatpush1.bf16.msra.mxu0 %v275
  %341 = vmatprep.subr.bf16.mxu0 0
  %342 = vmatpush1.bf16.msra.mxu0 %v276
  %343 = vmatprep.subr.bf16.mxu0 0
  %344 = vmatpush1.bf16.msra.mxu0 %v277
  %345 = vmatprep.subr.bf16.mxu0 0
  %346 = vmatpush1.bf16.msra.mxu0 %v278
  %347 = vmatprep.subr.bf16.mxu0 0
  %348 = vmatpush1.bf16.msra.mxu0 %v279
  %349 = vmatprep.subr.bf16.mxu0 0
  %350 = vmatpush1.bf16.msra.mxu0 %v280
  %351 = vmatprep.subr.bf16.mxu0 0
  %352 = vmatpush1.bf16.msra.mxu0 %v281
  %353 = vmatprep.subr.bf16.mxu0 0
  %354 = vmatpush1.bf16.msra.mxu0 %v282
  %355 = vmatprep.subr.bf16.mxu0 0
  %356 = vmatpush1.bf16.msra.mxu0 %v283
  %357 = vmatprep.subr.bf16.mxu0 0
  %358 = vmatpush1.bf16.msra.mxu0 %v284
  %359 = vmatprep.subr.bf16.mxu0 0
  %360 = vmatpush1.bf16.msra.mxu0 %v285
  %361 = vmatprep.subr.bf16.mxu0 0
  %362 = vmatpush1.bf16.msra.mxu0 %v286
  %363 = vmatprep.subr.bf16.mxu0 0
  %364 = vmatpush1.bf16.msra.mxu0 %v287
  %365 = vmatprep.mubr.bf16.mxu0 %v161
  %366 = vmatmul.mubr.bf16.gmra.mrb[0].mxu0 %v160
  %v367 = vpop.f32.mrb[0].mxu0
  %v368 = vadd.f32 0.0, %v367
  %v369 = vpop.f32.mrb[0].mxu0
  %v370 = vpop.f32.mrb[0].mxu0
  %v371 = vadd.f32 0.0, %v370
  %v372 = vpop.f32.mrb[0].mxu0
  %373 = vmatprep.mubr.bf16.mxu0 %v164
  %374 = vmatmul.mubr.bf16.gmra.mrb[0].mxu0 %v163
  %v375 = vpop.f32.mrb[0].mxu0
  %v376 = vadd.f32 0.0, %v375
  %v377 = vpop.f32.mrb[0].mxu0
  %v378 = vpop.f32.mrb[0].mxu0
  %v379 = vadd.f32 0.0, %v378
  %v380 = vpop.f32.mrb[0].mxu0
  %381 = vmatprep.mubr.bf16.mxu0 %v167
  %382 = vmatmul.mubr.bf16.gmra.mrb[0].mxu0 %v166
  %v383 = vpop.f32.mrb[0].mxu0
  %v384 = vadd.f32 0.0, %v383
  %v385 = vpop.f32.mrb[0].mxu0
  %v386 = vpop.f32.mrb[0].mxu0
  %v387 = vadd.f32 0.0, %v386
  %v388 = vpop.f32.mrb[0].mxu0
  %389 = vmatprep.mubr.bf16.mxu0 %v170
  %390 = vmatmul.mubr.bf16.gmra.mrb[0].mxu0 %v169
  %v391 = vpop.f32.mrb[0].mxu0
  %v392 = vadd.f32 0.0, %v391
  %v393 = vpop.f32.mrb[0].mxu0
  %v394 = vpop.f32.mrb[0].mxu0
  %v395 = vadd.f32 0.0, %v394
  %v396 = vpop.f32.mrb[0].mxu0
  %397 = vmatprep.mubr.bf16.mxu0 %v173
  %398 = vmatmul.mubr.bf16.gmra.mrb[0].mxu0 %v172
  %v399 = vpop.f32.mrb[0].mxu0
  %v400 = vadd.f32 0.0, %v399
  %v401 = vpop.f32.mrb[0].mxu0
  %v402 = vpop.f32.mrb[0].mxu0
  %v403 = vadd.f32 0.0, %v402
  %v404 = vpop.f32.mrb[0].mxu0
  %405 = vmatprep.mubr.bf16.mxu0 %v176
  %406 = vmatmul.mubr.bf16.gmra.mrb[0].mxu0 %v175
  %v407 = vpop.f32.mrb[0].mxu0
  %v408 = vadd.f32 0.0, %v407
  %v409 = vpop.f32.mrb[0].mxu0
  %v410 = vpop.f32.mrb[0].mxu0
  %v411 = vadd.f32 0.0, %v410
  %v412 = vpop.f32.mrb[0].mxu0
  %413 = vmatprep.mubr.bf16.mxu0 %v179
  %414 = vmatmul.mubr.bf16.gmra.mrb[0].mxu0 %v178
  %v415 = vpop.f32.mrb[0].mxu0
  %v416 = vadd.f32 0.0, %v415
  %v417 = vpop.f32.mrb[0].mxu0
  %v418 = vpop.f32.mrb[0].mxu0
  %v419 = vadd.f32 0.0, %v418
  %v420 = vpop.f32.mrb[0].mxu0
  %421 = vmatprep.mubr.bf16.mxu0 %v182
  %422 = vmatmul.mubr.bf16.gmra.mrb[0].mxu0 %v181
  %v423 = vpop.f32.mrb[0].mxu0
  %v424 = vadd.f32 0.0, %v423
  %v425 = vpop.f32.mrb[0].mxu0
  %v426 = vpop.f32.mrb[0].mxu0
  %v427 = vadd.f32 0.0, %v426
  %v428 = vpop.f32.mrb[0].mxu0
  %429 = vdwg.mxu0
  %430 = vmatprep.subr.bf16.mxu0 0
  %431 = vmatpush1.bf16.msra.mxu0 %v288
  %432 = vmatprep.subr.bf16.mxu0 0
  %433 = vmatpush1.bf16.msra.mxu0 %v289
  %434 = vmatprep.subr.bf16.mxu0 0
  %435 = vmatpush1.bf16.msra.mxu0 0
  %436 = vmatprep.subr.bf16.mxu0 0
  %437 = vmatpush1.bf16.msra.mxu0 0
  %438 = vmatprep.subr.bf16.mxu0 0
  %439 = vmatpush1.bf16.msra.mxu0 0
  %440 = vmatprep.subr.bf16.mxu0 0
  %441 = vmatpush1.bf16.msra.mxu0 0
  %442 = vmatprep.subr.bf16.mxu0 0
  %443 = vmatpush1.bf16.msra.mxu0 0
  %444 = vmatprep.subr.bf16.mxu0 0
  %445 = vmatpush1.bf16.msra.mxu0 0
  %446 = vmatprep.subr.bf16.mxu0 0
  %447 = vmatpush1.bf16.msra.mxu0 0
  %448 = vmatprep.subr.bf16.mxu0 0
  %449 = vmatpush1.bf16.msra.mxu0 0
  %450 = vmatprep.subr.bf16.mxu0 0
  %451 = vmatpush1.bf16.msra.mxu0 0
  %452 = vmatprep.subr.bf16.mxu0 0
  %453 = vmatpush1.bf16.msra.mxu0 0
  %454 = vmatprep.subr.bf16.mxu0 0
  %455 = vmatpush1.bf16.msra.mxu0 0
  %456 = vmatprep.subr.bf16.mxu0 0
  %457 = vmatpush1.bf16.msra.mxu0 0
  %458 = vmatprep.subr.bf16.mxu0 0
  %459 = vmatpush1.bf16.msra.mxu0 0
  %460 = vmatprep.subr.bf16.mxu0 0
  %461 = vmatpush1.bf16.msra.mxu0 0
  %462 = vmatprep.mubr.bf16.mxu0 0
  %463 = vmatmul.mubr.bf16.gmra.mrb[0].mxu0 %v310
  %v464 = vpop.f32.mrb[0].mxu0
  %v465 = vadd.f32 %v368, %v464
  %v466 = vpop.f32.mrb[0].mxu0
  %v467 = vpop.f32.mrb[0].mxu0
  %v468 = vadd.f32 %v371, %v467
  %v469 = vpop.f32.mrb[0].mxu0
  %470 = vmatprep.mubr.bf16.mxu0 0
  %471 = vmatmul.mubr.bf16.gmra.mrb[0].mxu0 %v313
  %v472 = vpop.f32.mrb[0].mxu0
  %v473 = vadd.f32 %v376, %v472
  %v474 = vpop.f32.mrb[0].mxu0
  %v475 = vpop.f32.mrb[0].mxu0
  %v476 = vadd.f32 %v379, %v475
  %v477 = vpop.f32.mrb[0].mxu0
  %478 = vmatprep.mubr.bf16.mxu0 0
  %479 = vmatmul.mubr.bf16.gmra.mrb[0].mxu0 %v316
  %v480 = vpop.f32.mrb[0].mxu0
  %v481 = vadd.f32 %v384, %v480
  %v482 = vpop.f32.mrb[0].mxu0
  %v483 = vpop.f32.mrb[0].mxu0
  %v484 = vadd.f32 %v387, %v483
  %v485 = vpop.f32.mrb[0].mxu0
  %486 = vmatprep.mubr.bf16.mxu0 0
  %487 = vmatmul.mubr.bf16.gmra.mrb[0].mxu0 %v319
  %v488 = vpop.f32.mrb[0].mxu0
  %v489 = vadd.f32 %v392, %v488
  %v490 = vpop.f32.mrb[0].mxu0
  %v491 = vpop.f32.mrb[0].mxu0
  %v492 = vadd.f32 %v395, %v491
  %v493 = vpop.f32.mrb[0].mxu0
  %494 = vmatprep.mubr.bf16.mxu0 0
  %495 = vmatmul.mubr.bf16.gmra.mrb[0].mxu0 %v322
  %v496 = vpop.f32.mrb[0].mxu0
  %v497 = vadd.f32 %v400, %v496
  %v498 = vpop.f32.mrb[0].mxu0
  %v499 = vpop.f32.mrb[0].mxu0
  %v500 = vadd.f32 %v403, %v499
  %v501 = vpop.f32.mrb[0].mxu0
  %502 = vmatprep.mubr.bf16.mxu0 0
  %503 = vmatmul.mubr.bf16.gmra.mrb[0].mxu0 %v325
  %v504 = vpop.f32.mrb[0].mxu0
  %v505 = vadd.f32 %v408, %v504
  %v506 = vpop.f32.mrb[0].mxu0
  %v507 = vpop.f32.mrb[0].mxu0
  %v508 = vadd.f32 %v411, %v507
  %v509 = vpop.f32.mrb[0].mxu0
  %510 = vmatprep.mubr.bf16.mxu0 0
  %511 = vmatmul.mubr.bf16.gmra.mrb[0].mxu0 %v328
  %v512 = vpop.f32.mrb[0].mxu0
  %v513 = vadd.f32 %v416, %v512
  %v514 = vpop.f32.mrb[0].mxu0
  %v515 = vpop.f32.mrb[0].mxu0
  %v516 = vadd.f32 %v419, %v515
  %v517 = vpop.f32.mrb[0].mxu0
  %518 = vmatprep.mubr.bf16.mxu0 0
  %519 = vmatmul.mubr.bf16.gmra.mrb[0].mxu0 %v331
  %v520 = vpop.f32.mrb[0].mxu0
  %v521 = vadd.f32 %v424, %v520
  %v522 = vpop.f32.mrb[0].mxu0
  %v523 = vpop.f32.mrb[0].mxu0
  %v524 = vadd.f32 %v427, %v523
  %v525 = vpop.f32.mrb[0].mxu0
  %526 = vdwg.mxu0
  %v527 = vpack.c.bf16 %v468, %v465
  %v528 = vpack.c.bf16 %v476, %v473
  %v529 = vpack.c.bf16 %v484, %v481
  %v530 = vpack.c.bf16 %v492, %v489
  %v531 = vpack.c.bf16 %v500, %v497
  %v532 = vpack.c.bf16 %v508, %v505
  %v533 = vpack.c.bf16 %v516, %v513
  %v534 = vpack.c.bf16 %v524, %v521
  %v543 = vunpack.c.l.b16 %v527
  %v544 = vunpack.c.h.b16 %v527
  %v545 = vunpack.c.l.b16 %v528
  %v546 = vunpack.c.h.b16 %v528
  %v547 = vunpack.c.l.b16 %v529
  %v548 = vunpack.c.h.b16 %v529
  %v549 = vunpack.c.l.b16 %v530
  %v550 = vunpack.c.h.b16 %v530
  %v551 = vunpack.c.l.b16 %v531
  %v552 = vunpack.c.h.b16 %v531
  %v553 = vunpack.c.l.b16 %v532
  %v554 = vunpack.c.h.b16 %v532
  %v555 = vunpack.c.l.b16 %v533
  %v556 = vunpack.c.h.b16 %v533
  %v557 = vunpack.c.l.b16 %v534
  %v558 = vunpack.c.h.b16 %v534
  %v559 = vpack.c.b16 %v543, %v543
  %v560 = vpack.c.b16 %v544, %v544
  %v561 = vpack.c.b16 %v545, %v545
  %v562 = vpack.c.b16 %v546, %v546
  %v563 = vpack.c.b16 %v547, %v547
  %v564 = vpack.c.b16 %v548, %v548
  %v565 = vpack.c.b16 %v549, %v549
  %v566 = vpack.c.b16 %v550, %v550
  %v567 = vpack.c.b16 %v551, %v551
  %v568 = vpack.c.b16 %v552, %v552
  %v569 = vpack.c.b16 %v553, %v553
  %v570 = vpack.c.b16 %v554, %v554
  %v571 = vpack.c.b16 %v555, %v555
  %v572 = vpack.c.b16 %v556, %v556
  %v573 = vpack.c.b16 %v557, %v557
  %v574 = vpack.c.b16 %v558, %v558
  %vm591 = vcmask 60416
  %592 = vst.msk [vmem:[%s2] sm:$0xf] %vm591, %v559
  %593 = vst.msk [vmem:[%s2 + $0x4] sm:$0xf] %vm591, %v560
  %594 = vst.msk [vmem:[%s2 + $0x8] sm:$0xf] %vm591, %v561
  %595 = vst.msk [vmem:[%s2 + $0xc] sm:$0xf] %vm591, %v562
  %596 = vst.msk [vmem:[%s2 + $0x10] sm:$0xf] %vm591, %v563
  %597 = vst.msk [vmem:[%s2 + $0x14] sm:$0xf] %vm591, %v564
  %598 = vst.msk [vmem:[%s2 + $0x18] sm:$0xf] %vm591, %v565
  %599 = vst.msk [vmem:[%s2 + $0x1c] sm:$0xf] %vm591, %v566
  %600 = vst.msk [vmem:[%s2 + $0x20] sm:$0xf] %vm591, %v567
  %601 = vst.msk [vmem:[%s2 + $0x24] sm:$0xf] %vm591, %v568
  %602 = vst.msk [vmem:[%s2 + $0x28] sm:$0xf] %vm591, %v569
  %603 = vst.msk [vmem:[%s2 + $0x2c] sm:$0xf] %vm591, %v570
  %604 = vst.msk [vmem:[%s2 + $0x30] sm:$0xf] %vm591, %v571
  %605 = vst.msk [vmem:[%s2 + $0x34] sm:$0xf] %vm591, %v572
  %606 = vst.msk [vmem:[%s2 + $0x38] sm:$0xf] %vm591, %v573
  %607 = vst.msk [vmem:[%s2 + $0x3c] sm:$0xf] %vm591, %v574
  // Predicated region
  $region10: #{pneumonia_severity_net.16} parent=0 // pred_check
    _
  $region11: #{pneumonia_severity_net.16} parent=0 // pred_check_branch
    %609 = sbr.rel (0) target = $region13
  $region12: #{pneumonia_severity_net.16} parent=0 // pred_region
    _
  $region13: #{pneumonia_severity_net.16} parent=0 // pred_fallthru
    _
  // Predicated region
  $region14: #{pneumonia_severity_net.16} parent=0 // pred_check
    _
  $region15: #{pneumonia_severity_net.16} parent=0 // pred_check_branch
    %611 = sbr.rel (0) target = $region17
  $region16: #{pneumonia_severity_net.16} parent=0 // pred_region
    _
  $region17: #{pneumonia_severity_net.16} parent=0 // pred_fallthru
    _

// kernel: pneumonia_severity_net.19
$region0: #{pneumonia_severity_net.19}
  #allocation0 [shape = 'u32[]', space=smem, size = 0x4, offset = 0x4, fixed_abs, tag = 'smem constant byte address 0x4 - core index']
  #allocation1 [shape = 'u32[144,128]{1,0:T(1,128)}', space=vmem, size = 0x12000, scoped, tag = 'internal scratch']
  %s0 = inlined_call_operand.vmem [shape: bf16[128,32], index: 0, kind: input, shape index: {}]
  %s1 = inlined_call_operand.vmem [shape: bf16[32,16], index: 1, kind: input, shape index: {}]
  %s2 = inlined_call_operand.vmem [shape: f32[1,32], index: 2, kind: input, shape index: {}]
  %s3 = inlined_call_operand.vmem [shape: f32[1,32], index: 3, kind: input, shape index: {}]
  %s4 = inlined_call_operand.vmem [shape: bf16[128,16], index: 4, kind: output, shape index: {}]
  %s5 = sld [smem:[#allocation0]]
  $region26: #{pneumonia_severity_net.19} parent=0
    _
  %s7 = ssub.s32 1, %s5
  %s8 = scalar_select 0, %s7, %s5
  // Predicated region
  $region2: #{pneumonia_severity_net.19} parent=0 // pred_check
    _
  $region3: #{pneumonia_severity_net.19} parent=0 // pred_check_branch
    %10 = sbr.rel (0) target = $region5
  $region4: #{pneumonia_severity_net.19} parent=0 // pred_region
    _
  $region5: #{pneumonia_severity_net.19} parent=0 // pred_fallthru
    _
  // Predicated region
  $region6: #{pneumonia_severity_net.19} parent=0 // pred_check
    _
  $region7: #{pneumonia_severity_net.19} parent=0 // pred_check_branch
    %12 = sbr.rel (0) target = $region9
  $region8: #{pneumonia_severity_net.19} parent=0 // pred_region
    _
  $region9: #{pneumonia_severity_net.19} parent=0 // pred_fallthru
    _
  // Predicated region
  $region10: #{pneumonia_severity_net.19} parent=0 // pred_check
    _
  $region11: #{pneumonia_severity_net.19} parent=0 // pred_check_branch
    %14 = sbr.rel (0) target = $region13
  $region12: #{pneumonia_severity_net.19} parent=0 // pred_region
    _
  $region13: #{pneumonia_severity_net.19} parent=0 // pred_fallthru
    _
  // Predicated region
  $region14: #{pneumonia_severity_net.19} parent=0 // pred_check
    _
  $region15: #{pneumonia_severity_net.19} parent=0 // pred_check_branch
    %16 = sbr.rel (0) target = $region17
  $region16: #{pneumonia_severity_net.19} parent=0 // pred_region
    _
  $region17: #{pneumonia_severity_net.19} parent=0 // pred_fallthru
    _
  %v18 = vld [vmem:[%s2] sm:$0x1]
  %v19 = vld [vmem:[%s0] sm:$0xf]
  %v20 = vld [vmem:[%s0 + $0x4] sm:$0xf]
  %v21 = vld [vmem:[%s0 + $0x8] sm:$0xf]
  %v22 = vld [vmem:[%s0 + $0xc] sm:$0xf]
  %v23 = vld [vmem:[%s0 + $0x10] sm:$0xf]
  %v24 = vld [vmem:[%s0 + $0x14] sm:$0xf]
  %v25 = vld [vmem:[%s0 + $0x18] sm:$0xf]
  %v26 = vld [vmem:[%s0 + $0x1c] sm:$0xf]
  %v27 = vld [vmem:[%s0 + $0x20] sm:$0xf]
  %v28 = vld [vmem:[%s0 + $0x24] sm:$0xf]
  %v29 = vld [vmem:[%s0 + $0x28] sm:$0xf]
  %v30 = vld [vmem:[%s0 + $0x2c] sm:$0xf]
  %v31 = vld [vmem:[%s0 + $0x30] sm:$0xf]
  %v32 = vld [vmem:[%s0 + $0x34] sm:$0xf]
  %v33 = vld [vmem:[%s0 + $0x38] sm:$0xf]
  %v34 = vld [vmem:[%s0 + $0x3c] sm:$0xf]
  %v35 = vunpack.c.l.bf16 %v19
  %v36 = vunpack.c.l.bf16 %v20
  %v37 = vunpack.c.l.bf16 %v21
  %v38 = vunpack.c.l.bf16 %v22
  %v39 = vunpack.c.l.bf16 %v23
  %v40 = vunpack.c.l.bf16 %v24
  %v41 = vunpack.c.l.bf16 %v25
  %v42 = vunpack.c.l.bf16 %v26
  %v43 = vunpack.c.l.bf16 %v27
  %v44 = vunpack.c.l.bf16 %v28
  %v45 = vunpack.c.l.bf16 %v29
  %v46 = vunpack.c.l.bf16 %v30
  %v47 = vunpack.c.l.bf16 %v31
  %v48 = vunpack.c.l.bf16 %v32
  %v49 = vunpack.c.l.bf16 %v33
  %v50 = vunpack.c.l.bf16 %v34
  %v52 = vlaneseq
  %v53 = vshrl.u32 %v52, 7
  %v54 = vsub.s32 0, %v53
  %v55 = vrot.slane %v18, %v54
  %v57 = vmul.f32 %v55, %v35
  %v58 = vmul.f32 %v55, %v36
  %v59 = vmul.f32 %v55, %v37
  %v60 = vmul.f32 %v55, %v38
  %v61 = vmul.f32 %v55, %v39
  %v62 = vmul.f32 %v55, %v40
  %v63 = vmul.f32 %v55, %v41
  %v64 = vmul.f32 %v55, %v42
  %v65 = vmul.f32 %v55, %v43
  %v66 = vmul.f32 %v55, %v44
  %v67 = vmul.f32 %v55, %v45
  %v68 = vmul.f32 %v55, %v46
  %v69 = vmul.f32 %v55, %v47
  %v70 = vmul.f32 %v55, %v48
  %v71 = vmul.f32 %v55, %v49
  %v72 = vmul.f32 %v55, %v50
  %v73 = vld [vmem:[%s3] sm:$0x1]
  %v75 = vlaneseq
  %v76 = vshrl.u32 %v75, 7
  %v77 = vsub.s32 0, %v76
  %v78 = vrot.slane %v73, %v77
  %v80 = vadd.f32 %v57, %v78
  %v81 = vadd.f32 %v58, %v78
  %v82 = vadd.f32 %v59, %v78
  %v83 = vadd.f32 %v60, %v78
  %v84 = vadd.f32 %v61, %v78
  %v85 = vadd.f32 %v62, %v78
  %v86 = vadd.f32 %v63, %v78
  %v87 = vadd.f32 %v64, %v78
  %v88 = vadd.f32 %v65, %v78
  %v89 = vadd.f32 %v66, %v78
  %v90 = vadd.f32 %v67, %v78
  %v91 = vadd.f32 %v68, %v78
  %v92 = vadd.f32 %v69, %v78
  %v93 = vadd.f32 %v70, %v78
  %v94 = vadd.f32 %v71, %v78
  %v95 = vadd.f32 %v72, %v78
  %v96 = vmax.f32 %v80, 0.0
  %v97 = vmax.f32 %v81, 0.0
  %v98 = vmax.f32 %v82, 0.0
  %v99 = vmax.f32 %v83, 0.0
  %v100 = vmax.f32 %v84, 0.0
  %v101 = vmax.f32 %v85, 0.0
  %v102 = vmax.f32 %v86, 0.0
  %v103 = vmax.f32 %v87, 0.0
  %v104 = vmax.f32 %v88, 0.0
  %v105 = vmax.f32 %v89, 0.0
  %v106 = vmax.f32 %v90, 0.0
  %v107 = vmax.f32 %v91, 0.0
  %v108 = vmax.f32 %v92, 0.0
  %v109 = vmax.f32 %v93, 0.0
  %v110 = vmax.f32 %v94, 0.0
  %v111 = vmax.f32 %v95, 0.0
  %v112 = vpack.c.bf16 %v97, %v96
  %v113 = vpack.c.bf16 %v99, %v98
  %v114 = vpack.c.bf16 %v101, %v100
  %v115 = vpack.c.bf16 %v103, %v102
  %v116 = vpack.c.bf16 %v105, %v104
  %v117 = vpack.c.bf16 %v107, %v106
  %v118 = vpack.c.bf16 %v109, %v108
  %v119 = vpack.c.bf16 %v111, %v110
  %v120 = vld [vmem:[%s1] sm:$0xf]
  %v121 = vld [vmem:[%s1 + $0x4] sm:$0xf]
  %v122 = vld [vmem:[%s1 + $0x8] sm:$0xf]
  %v123 = vld [vmem:[%s1 + $0xc] sm:$0xf]
  %v128 = vunpack.c.l.b16 %v120
  %v129 = vunpack.c.l.b16 %v121
  %v130 = vunpack.c.l.b16 %v122
  %v131 = vunpack.c.l.b16 %v123
  %v132 = vpack.c.b16 %v129, %v128
  %v133 = vpack.c.b16 %v131, %v130
  %vm136 = vcmask 261120
  %v138 = vsel %vm136, %v112, 0
  %v141 = vsel %vm136, %v113, 0
  %v144 = vsel %vm136, %v114, 0
  %v147 = vsel %vm136, %v115, 0
  %v150 = vsel %vm136, %v116, 0
  %v153 = vsel %vm136, %v117, 0
  %v156 = vsel %vm136, %v118, 0
  %v159 = vsel %vm136, %v119, 0
  %161 = vmatprep.subr.bf16.mxu0 0
  %162 = vmatpush1.bf16.msra.mxu0 %v132
  %163 = vmatprep.subr.bf16.mxu0 0
  %164 = vmatpush1.bf16.msra.mxu0 %v133
  %165 = vmatprep.subr.bf16.mxu0 0
  %166 = vmatpush1.bf16.msra.mxu0 0
  %167 = vmatprep.subr.bf16.mxu0 0
  %168 = vmatpush1.bf16.msra.mxu0 0
  %169 = vmatprep.subr.bf16.mxu0 0
  %170 = vmatpush1.bf16.msra.mxu0 0
  %171 = vmatprep.subr.bf16.mxu0 0
  %172 = vmatpush1.bf16.msra.mxu0 0
  %173 = vmatprep.subr.bf16.mxu0 0
  %174 = vmatpush1.bf16.msra.mxu0 0
  %175 = vmatprep.subr.bf16.mxu0 0
  %176 = vmatpush1.bf16.msra.mxu0 0
  %177 = vmatprep.subr.bf16.mxu0 0
  %178 = vmatpush1.bf16.msra.mxu0 0
  %179 = vmatprep.subr.bf16.mxu0 0
  %180 = vmatpush1.bf16.msra.mxu0 0
  %181 = vmatprep.subr.bf16.mxu0 0
  %182 = vmatpush1.bf16.msra.mxu0 0
  %183 = vmatprep.subr.bf16.mxu0 0
  %184 = vmatpush1.bf16.msra.mxu0 0
  %185 = vmatprep.subr.bf16.mxu0 0
  %186 = vmatpush1.bf16.msra.mxu0 0
  %187 = vmatprep.subr.bf16.mxu0 0
  %188 = vmatpush1.bf16.msra.mxu0 0
  %189 = vmatprep.subr.bf16.mxu0 0
  %190 = vmatpush1.bf16.msra.mxu0 0
  %191 = vmatprep.subr.bf16.mxu0 0
  %192 = vmatpush1.bf16.msra.mxu0 0
  %193 = vmatprep.mubr.bf16.mxu0 0
  %194 = vmatmul.mubr.bf16.gmra.mrb[0].mxu0 %v138
  %v195 = vpop.f32.mrb[0].mxu0
  %v196 = vadd.f32 0.0, %v195
  %v197 = vpop.f32.mrb[0].mxu0
  %v198 = vpop.f32.mrb[0].mxu0
  %v199 = vadd.f32 0.0, %v198
  %v200 = vpop.f32.mrb[0].mxu0
  %201 = vmatprep.mubr.bf16.mxu0 0
  %202 = vmatmul.mubr.bf16.gmra.mrb[0].mxu0 %v141
  %v203 = vpop.f32.mrb[0].mxu0
  %v204 = vadd.f32 0.0, %v203
  %v205 = vpop.f32.mrb[0].mxu0
  %v206 = vpop.f32.mrb[0].mxu0
  %v207 = vadd.f32 0.0, %v206
  %v208 = vpop.f32.mrb[0].mxu0
  %209 = vmatprep.mubr.bf16.mxu0 0
  %210 = vmatmul.mubr.bf16.gmra.mrb[0].mxu0 %v144
  %v211 = vpop.f32.mrb[0].mxu0
  %v212 = vadd.f32 0.0, %v211
  %v213 = vpop.f32.mrb[0].mxu0
  %v214 = vpop.f32.mrb[0].mxu0
  %v215 = vadd.f32 0.0, %v214
  %v216 = vpop.f32.mrb[0].mxu0
  %217 = vmatprep.mubr.bf16.mxu0 0
  %218 = vmatmul.mubr.bf16.gmra.mrb[0].mxu0 %v147
  %v219 = vpop.f32.mrb[0].mxu0
  %v220 = vadd.f32 0.0, %v219
  %v221 = vpop.f32.mrb[0].mxu0
  %v222 = vpop.f32.mrb[0].mxu0
  %v223 = vadd.f32 0.0, %v222
  %v224 = vpop.f32.mrb[0].mxu0
  %225 = vmatprep.mubr.bf16.mxu0 0
  %226 = vmatmul.mubr.bf16.gmra.mrb[0].mxu0 %v150
  %v227 = vpop.f32.mrb[0].mxu0
  %v228 = vadd.f32 0.0, %v227
  %v229 = vpop.f32.mrb[0].mxu0
  %v230 = vpop.f32.mrb[0].mxu0
  %v231 = vadd.f32 0.0, %v230
  %v232 = vpop.f32.mrb[0].mxu0
  %233 = vmatprep.mubr.bf16.mxu0 0
  %234 = vmatmul.mubr.bf16.gmra.mrb[0].mxu0 %v153
  %v235 = vpop.f32.mrb[0].mxu0
  %v236 = vadd.f32 0.0, %v235
  %v237 = vpop.f32.mrb[0].mxu0
  %v238 = vpop.f32.mrb[0].mxu0
  %v239 = vadd.f32 0.0, %v238
  %v240 = vpop.f32.mrb[0].mxu0
  %241 = vmatprep.mubr.bf16.mxu0 0
  %242 = vmatmul.mubr.bf16.gmra.mrb[0].mxu0 %v156
  %v243 = vpop.f32.mrb[0].mxu0
  %v244 = vadd.f32 0.0, %v243
  %v245 = vpop.f32.mrb[0].mxu0
  %v246 = vpop.f32.mrb[0].mxu0
  %v247 = vadd.f32 0.0, %v246
  %v248 = vpop.f32.mrb[0].mxu0
  %249 = vmatprep.mubr.bf16.mxu0 0
  %250 = vmatmul.mubr.bf16.gmra.mrb[0].mxu0 %v159
  %v251 = vpop.f32.mrb[0].mxu0
  %v252 = vadd.f32 0.0, %v251
  %v253 = vpop.f32.mrb[0].mxu0
  %v254 = vpop.f32.mrb[0].mxu0
  %v255 = vadd.f32 0.0, %v254
  %v256 = vpop.f32.mrb[0].mxu0
  %257 = vdwg.mxu0
  %v258 = vpack.c.bf16 %v199, %v196
  %v259 = vpack.c.bf16 %v207, %v204
  %v260 = vpack.c.bf16 %v215, %v212
  %v261 = vpack.c.bf16 %v223, %v220
  %v262 = vpack.c.bf16 %v231, %v228
  %v263 = vpack.c.bf16 %v239, %v236
  %v264 = vpack.c.bf16 %v247, %v244
  %v265 = vpack.c.bf16 %v255, %v252
  %v274 = vunpack.c.l.b16 %v258
  %v275 = vunpack.c.h.b16 %v258
  %v276 = vunpack.c.l.b16 %v259
  %v277 = vunpack.c.h.b16 %v259
  %v278 = vunpack.c.l.b16 %v260
  %v279 = vunpack.c.h.b16 %v260
  %v280 = vunpack.c.l.b16 %v261
  %v281 = vunpack.c.h.b16 %v261
  %v282 = vunpack.c.l.b16 %v262
  %v283 = vunpack.c.h.b16 %v262
  %v284 = vunpack.c.l.b16 %v263
  %v285 = vunpack.c.h.b16 %v263
  %v286 = vunpack.c.l.b16 %v264
  %v287 = vunpack.c.h.b16 %v264
  %v288 = vunpack.c.l.b16 %v265
  %v289 = vunpack.c.h.b16 %v265
  %v290 = vpack.c.b16 %v274, %v274
  %v291 = vpack.c.b16 %v275, %v275
  %v292 = vpack.c.b16 %v276, %v276
  %v293 = vpack.c.b16 %v277, %v277
  %v294 = vpack.c.b16 %v278, %v278
  %v295 = vpack.c.b16 %v279, %v279
  %v296 = vpack.c.b16 %v280, %v280
  %v297 = vpack.c.b16 %v281, %v281
  %v298 = vpack.c.b16 %v282, %v282
  %v299 = vpack.c.b16 %v283, %v283
  %v300 = vpack.c.b16 %v284, %v284
  %v301 = vpack.c.b16 %v285, %v285
  %v302 = vpack.c.b16 %v286, %v286
  %v303 = vpack.c.b16 %v287, %v287
  %v304 = vpack.c.b16 %v288, %v288
  %v305 = vpack.c.b16 %v289, %v289
  %vm322 = vcmask 125952
  %323 = vst.msk [vmem:[%s4] sm:$0xf] %vm322, %v290
  %324 = vst.msk [vmem:[%s4 + $0x4] sm:$0xf] %vm322, %v291
  %325 = vst.msk [vmem:[%s4 + $0x8] sm:$0xf] %vm322, %v292
  %326 = vst.msk [vmem:[%s4 + $0xc] sm:$0xf] %vm322, %v293
  %327 = vst.msk [vmem:[%s4 + $0x10] sm:$0xf] %vm322, %v294
  %328 = vst.msk [vmem:[%s4 + $0x14] sm:$0xf] %vm322, %v295
  %329 = vst.msk [vmem:[%s4 + $0x18] sm:$0xf] %vm322, %v296
  %330 = vst.msk [vmem:[%s4 + $0x1c] sm:$0xf] %vm322, %v297
  %331 = vst.msk [vmem:[%s4 + $0x20] sm:$0xf] %vm322, %v298
  %332 = vst.msk [vmem:[%s4 + $0x24] sm:$0xf] %vm322, %v299
  %333 = vst.msk [vmem:[%s4 + $0x28] sm:$0xf] %vm322, %v300
  %334 = vst.msk [vmem:[%s4 + $0x2c] sm:$0xf] %vm322, %v301
  %335 = vst.msk [vmem:[%s4 + $0x30] sm:$0xf] %vm322, %v302
  %336 = vst.msk [vmem:[%s4 + $0x34] sm:$0xf] %vm322, %v303
  %337 = vst.msk [vmem:[%s4 + $0x38] sm:$0xf] %vm322, %v304
  %338 = vst.msk [vmem:[%s4 + $0x3c] sm:$0xf] %vm322, %v305
  // Predicated region
  $region18: #{pneumonia_severity_net.19} parent=0 // pred_check
    _
  $region19: #{pneumonia_severity_net.19} parent=0 // pred_check_branch
    %340 = sbr.rel (0) target = $region21
  $region20: #{pneumonia_severity_net.19} parent=0 // pred_region
    _
  $region21: #{pneumonia_severity_net.19} parent=0 // pred_fallthru
    _
  // Predicated region
  $region22: #{pneumonia_severity_net.19} parent=0 // pred_check
    _
  $region23: #{pneumonia_severity_net.19} parent=0 // pred_check_branch
    %342 = sbr.rel (0) target = $region25
  $region24: #{pneumonia_severity_net.19} parent=0 // pred_region
    _
  $region25: #{pneumonia_severity_net.19} parent=0 // pred_fallthru
    _

// kernel: pneumonia_severity_net.20
$region0: #{pneumonia_severity_net.20}
  #allocation0 [shape = 'u32[]', space=smem, size = 0x4, offset = 0x4, fixed_abs, tag = 'smem constant byte address 0x4 - core index']
  #allocation1 [shape = 'u32[144,128]{1,0:T(1,128)}', space=vmem, size = 0x12000, scoped, tag = 'internal scratch']
  %s0 = inlined_call_operand.vmem [shape: bf16[32,16], index: 0, kind: input, shape index: {}]
  %s1 = inlined_call_operand.vmem [shape: bf16[32,16], index: 1, kind: input, shape index: {}]
  %s2 = inlined_call_operand.vmem [shape: bf16[32,16], index: 2, kind: input, shape index: {}]
  %s3 = inlined_call_operand.vmem [shape: bf16[32,16], index: 3, kind: input, shape index: {}]
  %s4 = inlined_call_operand.vmem [shape: bf16[32,16], index: 4, kind: output, shape index: {}]
  %s5 = sld [smem:[#allocation0]]
  $region26: #{pneumonia_severity_net.20} parent=0
    _
  %s7 = ssub.s32 1, %s5
  %s8 = scalar_select 0, %s7, %s5
  // Predicated region
  $region2: #{pneumonia_severity_net.20} parent=0 // pred_check
    _
  $region3: #{pneumonia_severity_net.20} parent=0 // pred_check_branch
    %10 = sbr.rel (0) target = $region5
  $region4: #{pneumonia_severity_net.20} parent=0 // pred_region
    _
  $region5: #{pneumonia_severity_net.20} parent=0 // pred_fallthru
    _
  // Predicated region
  $region6: #{pneumonia_severity_net.20} parent=0 // pred_check
    _
  $region7: #{pneumonia_severity_net.20} parent=0 // pred_check_branch
    %12 = sbr.rel (0) target = $region9
  $region8: #{pneumonia_severity_net.20} parent=0 // pred_region
    _
  $region9: #{pneumonia_severity_net.20} parent=0 // pred_fallthru
    _
  // Predicated region
  $region10: #{pneumonia_severity_net.20} parent=0 // pred_check
    _
  $region11: #{pneumonia_severity_net.20} parent=0 // pred_check_branch
    %14 = sbr.rel (0) target = $region13
  $region12: #{pneumonia_severity_net.20} parent=0 // pred_region
    _
  $region13: #{pneumonia_severity_net.20} parent=0 // pred_fallthru
    _
  // Predicated region
  $region14: #{pneumonia_severity_net.20} parent=0 // pred_check
    _
  $region15: #{pneumonia_severity_net.20} parent=0 // pred_check_branch
    %16 = sbr.rel (0) target = $region17
  $region16: #{pneumonia_severity_net.20} parent=0 // pred_region
    _
  $region17: #{pneumonia_severity_net.20} parent=0 // pred_fallthru
    _
  %v17 = vld [vmem:[%s0] sm:$0xf]
  %v18 = vld [vmem:[%s0 + $0x4] sm:$0xf]
  %v19 = vld [vmem:[%s0 + $0x8] sm:$0xf]
  %v20 = vld [vmem:[%s0 + $0xc] sm:$0xf]
  %v21 = vunpack.c.l.bf16 %v17
  %v22 = vunpack.c.l.bf16 %v18
  %v23 = vunpack.c.l.bf16 %v19
  %v24 = vunpack.c.l.bf16 %v20
  %v25 = vld [vmem:[%s1] sm:$0xf]
  %v26 = vld [vmem:[%s1 + $0x4] sm:$0xf]
  %v27 = vld [vmem:[%s1 + $0x8] sm:$0xf]
  %v28 = vld [vmem:[%s1 + $0xc] sm:$0xf]
  %v29 = vunpack.c.l.bf16 %v25
  %v30 = vunpack.c.l.bf16 %v26
  %v31 = vunpack.c.l.bf16 %v27
  %v32 = vunpack.c.l.bf16 %v28
  %v33 = vadd.f32 %v21, %v29
  %v34 = vadd.f32 %v22, %v30
  %v35 = vadd.f32 %v23, %v31
  %v36 = vadd.f32 %v24, %v32
  %v37 = vld [vmem:[%s2] sm:$0xf]
  %v38 = vld [vmem:[%s2 + $0x4] sm:$0xf]
  %v39 = vld [vmem:[%s2 + $0x8] sm:$0xf]
  %v40 = vld [vmem:[%s2 + $0xc] sm:$0xf]
  %v41 = vunpack.c.l.bf16 %v37
  %v42 = vunpack.c.l.bf16 %v38
  %v43 = vunpack.c.l.bf16 %v39
  %v44 = vunpack.c.l.bf16 %v40
  %v45 = vadd.f32 %v33, %v41
  %v46 = vadd.f32 %v34, %v42
  %v47 = vadd.f32 %v35, %v43
  %v48 = vadd.f32 %v36, %v44
  %v49 = vld [vmem:[%s3] sm:$0xf]
  %v50 = vld [vmem:[%s3 + $0x4] sm:$0xf]
  %v51 = vld [vmem:[%s3 + $0x8] sm:$0xf]
  %v52 = vld [vmem:[%s3 + $0xc] sm:$0xf]
  %v53 = vunpack.c.l.bf16 %v49
  %v54 = vunpack.c.l.bf16 %v50
  %v55 = vunpack.c.l.bf16 %v51
  %v56 = vunpack.c.l.bf16 %v52
  %v57 = vadd.f32 %v45, %v53
  %v58 = vadd.f32 %v46, %v54
  %v59 = vadd.f32 %v47, %v55
  %v60 = vadd.f32 %v48, %v56
  %v61 = vmul.f32 %v57, 0.25
  %v62 = vmul.f32 %v58, 0.25
  %v63 = vmul.f32 %v59, 0.25
  %v64 = vmul.f32 %v60, 0.25
  %v65 = vpack.c.bf16 %v62, %v61
  %v66 = vpack.c.bf16 %v64, %v63
  %v69 = vunpack.c.l.b16 %v65
  %v70 = vunpack.c.h.b16 %v65
  %v71 = vunpack.c.l.b16 %v66
  %v72 = vunpack.c.h.b16 %v66
  %v73 = vpack.c.b16 %v69, %v69
  %v74 = vpack.c.b16 %v70, %v70
  %v75 = vpack.c.b16 %v71, %v71
  %v76 = vpack.c.b16 %v72, %v72
  %vm81 = vcmask 125952
  %82 = vst.msk [vmem:[%s4] sm:$0xf] %vm81, %v73
  %83 = vst.msk [vmem:[%s4 + $0x4] sm:$0xf] %vm81, %v74
  %84 = vst.msk [vmem:[%s4 + $0x8] sm:$0xf] %vm81, %v75
  %85 = vst.msk [vmem:[%s4 + $0xc] sm:$0xf] %vm81, %v76
  // Predicated region
  $region18: #{pneumonia_severity_net.20} parent=0 // pred_check
    _
  $region19: #{pneumonia_severity_net.20} parent=0 // pred_check_branch
    %87 = sbr.rel (0) target = $region21
  $region20: #{pneumonia_severity_net.20} parent=0 // pred_region
    _
  $region21: #{pneumonia_severity_net.20} parent=0 // pred_fallthru
    _
  // Predicated region
  $region22: #{pneumonia_severity_net.20} parent=0 // pred_check
    _
  $region23: #{pneumonia_severity_net.20} parent=0 // pred_check_branch
    %89 = sbr.rel (0) target = $region25
  $region24: #{pneumonia_severity_net.20} parent=0 // pred_region
    _
  $region25: #{pneumonia_severity_net.20} parent=0 // pred_fallthru
    _

// kernel: pneumonia_severity_net.21
$region0: #{pneumonia_severity_net.21}
  #allocation0 [shape = 'u32[]', space=smem, size = 0x4, offset = 0x4, fixed_abs, tag = 'smem constant byte address 0x4 - core index']
  #allocation1 [shape = 'u32[144,128]{1,0:T(1,128)}', space=vmem, size = 0x12000, scoped, tag = 'internal scratch']
  %s0 = inlined_call_operand.vmem [shape: bf16[32,16], index: 0, kind: input, shape index: {}]
  %s1 = inlined_call_operand.vmem [shape: bf16[16,32], index: 1, kind: input, shape index: {}]
  %s2 = inlined_call_operand.vmem [shape: f32[1,16], index: 2, kind: input, shape index: {}]
  %s3 = inlined_call_operand.vmem [shape: f32[1,16], index: 3, kind: input, shape index: {}]
  %s4 = inlined_call_operand.vmem [shape: f32[1,32], index: 4, kind: input, shape index: {}]
  %s5 = inlined_call_operand.vmem [shape: f32[1,32], index: 5, kind: input, shape index: {}]
  %s6 = inlined_call_operand.vmem [shape: bf16[32,32], index: 6, kind: output, shape index: {}]
  %s7 = sld [smem:[#allocation0]]
  $region34: #{pneumonia_severity_net.21} parent=0
    _
  %s9 = ssub.s32 1, %s7
  %s10 = scalar_select 0, %s9, %s7
  // Predicated region
  $region2: #{pneumonia_severity_net.21} parent=0 // pred_check
    _
  $region3: #{pneumonia_severity_net.21} parent=0 // pred_check_branch
    %12 = sbr.rel (0) target = $region5
  $region4: #{pneumonia_severity_net.21} parent=0 // pred_region
    _
  $region5: #{pneumonia_severity_net.21} parent=0 // pred_fallthru
    _
  // Predicated region
  $region6: #{pneumonia_severity_net.21} parent=0 // pred_check
    _
  $region7: #{pneumonia_severity_net.21} parent=0 // pred_check_branch
    %14 = sbr.rel (0) target = $region9
  $region8: #{pneumonia_severity_net.21} parent=0 // pred_region
    _
  $region9: #{pneumonia_severity_net.21} parent=0 // pred_fallthru
    _
  // Predicated region
  $region10: #{pneumonia_severity_net.21} parent=0 // pred_check
    _
  $region11: #{pneumonia_severity_net.21} parent=0 // pred_check_branch
    %16 = sbr.rel (0) target = $region13
  $region12: #{pneumonia_severity_net.21} parent=0 // pred_region
    _
  $region13: #{pneumonia_severity_net.21} parent=0 // pred_fallthru
    _
  // Predicated region
  $region14: #{pneumonia_severity_net.21} parent=0 // pred_check
    _
  $region15: #{pneumonia_severity_net.21} parent=0 // pred_check_branch
    %18 = sbr.rel (0) target = $region17
  $region16: #{pneumonia_severity_net.21} parent=0 // pred_region
    _
  $region17: #{pneumonia_severity_net.21} parent=0 // pred_fallthru
    _
  // Predicated region
  $region18: #{pneumonia_severity_net.21} parent=0 // pred_check
    _
  $region19: #{pneumonia_severity_net.21} parent=0 // pred_check_branch
    %20 = sbr.rel (0) target = $region21
  $region20: #{pneumonia_severity_net.21} parent=0 // pred_region
    _
  $region21: #{pneumonia_severity_net.21} parent=0 // pred_fallthru
    _
  // Predicated region
  $region22: #{pneumonia_severity_net.21} parent=0 // pred_check
    _
  $region23: #{pneumonia_severity_net.21} parent=0 // pred_check_branch
    %22 = sbr.rel (0) target = $region25
  $region24: #{pneumonia_severity_net.21} parent=0 // pred_region
    _
  $region25: #{pneumonia_severity_net.21} parent=0 // pred_fallthru
    _
  %v24 = vld [vmem:[%s2] sm:$0x1]
  %v25 = vld [vmem:[%s0] sm:$0xf]
  %v26 = vld [vmem:[%s0 + $0x4] sm:$0xf]
  %v27 = vld [vmem:[%s0 + $0x8] sm:$0xf]
  %v28 = vld [vmem:[%s0 + $0xc] sm:$0xf]
  %v29 = vunpack.c.l.bf16 %v25
  %v30 = vunpack.c.l.bf16 %v26
  %v31 = vunpack.c.l.bf16 %v27
  %v32 = vunpack.c.l.bf16 %v28
  %v34 = vlaneseq
  %v35 = vshrl.u32 %v34, 7
  %v36 = vsub.s32 0, %v35
  %v37 = vrot.slane %v24, %v36
  %v39 = vmul.f32 %v37, %v29
  %v40 = vmul.f32 %v37, %v30
  %v41 = vmul.f32 %v37, %v31
  %v42 = vmul.f32 %v37, %v32
  %v43 = vld [vmem:[%s3] sm:$0x1]
  %v45 = vlaneseq
  %v46 = vshrl.u32 %v45, 7
  %v47 = vsub.s32 0, %v46
  %v48 = vrot.slane %v43, %v47
  %v50 = vadd.f32 %v39, %v48
  %v51 = vadd.f32 %v40, %v48
  %v52 = vadd.f32 %v41, %v48
  %v53 = vadd.f32 %v42, %v48
  %v54 = vmax.f32 %v50, 0.0
  %v55 = vmax.f32 %v51, 0.0
  %v56 = vmax.f32 %v52, 0.0
  %v57 = vmax.f32 %v53, 0.0
  %v58 = vpack.c.bf16 %v55, %v54
  %v59 = vpack.c.bf16 %v57, %v56
  %v60 = vld [vmem:[%s1] sm:$0xf]
  %v61 = vld [vmem:[%s1 + $0x4] sm:$0xf]
  %v64 = vunpack.c.l.b16 %v60
  %v65 = vunpack.c.l.b16 %v61
  %v66 = vpack.c.b16 %v65, %v64
  %vm68 = vcmask 130048
  %v70 = vsel %vm68, %v58, 0
  %v73 = vsel %vm68, %v59, 0
  %75 = vmatprep.subr.bf16.mxu0 0
  %76 = vmatpush1.bf16.msra.mxu0 %v66
  %77 = vmatprep.subr.bf16.mxu0 0
  %78 = vmatpush1.bf16.msra.mxu0 0
  %79 = vmatprep.subr.bf16.mxu0 0
  %80 = vmatpush1.bf16.msra.mxu0 0
  %81 = vmatprep.subr.bf16.mxu0 0
  %82 = vmatpush1.bf16.msra.mxu0 0
  %83 = vmatprep.subr.bf16.mxu0 0
  %84 = vmatpush1.bf16.msra.mxu0 0
  %85 = vmatprep.subr.bf16.mxu0 0
  %86 = vmatpush1.bf16.msra.mxu0 0
  %87 = vmatprep.subr.bf16.mxu0 0
  %88 = vmatpush1.bf16.msra.mxu0 0
  %89 = vmatprep.subr.bf16.mxu0 0
  %90 = vmatpush1.bf16.msra.mxu0 0
  %91 = vmatprep.subr.bf16.mxu0 0
  %92 = vmatpush1.bf16.msra.mxu0 0
  %93 = vmatprep.subr.bf16.mxu0 0
  %94 = vmatpush1.bf16.msra.mxu0 0
  %95 = vmatprep.subr.bf16.mxu0 0
  %96 = vmatpush1.bf16.msra.mxu0 0
  %97 = vmatprep.subr.bf16.mxu0 0
  %98 = vmatpush1.bf16.msra.mxu0 0
  %99 = vmatprep.subr.bf16.mxu0 0
  %100 = vmatpush1.bf16.msra.mxu0 0
  %101 = vmatprep.subr.bf16.mxu0 0
  %102 = vmatpush1.bf16.msra.mxu0 0
  %103 = vmatprep.subr.bf16.mxu0 0
  %104 = vmatpush1.bf16.msra.mxu0 0
  %105 = vmatprep.subr.bf16.mxu0 0
  %106 = vmatpush1.bf16.msra.mxu0 0
  %107 = vmatprep.mubr.bf16.mxu0 0
  %108 = vmatmul.mubr.bf16.gmra.mrb[0].mxu0 %v70
  %v109 = vpop.f32.mrb[0].mxu0
  %v110 = vadd.f32 0.0, %v109
  %v111 = vpop.f32.mrb[0].mxu0
  %v112 = vpop.f32.mrb[0].mxu0
  %v113 = vadd.f32 0.0, %v112
  %v114 = vpop.f32.mrb[0].mxu0
  %115 = vmatprep.mubr.bf16.mxu0 0
  %116 = vmatmul.mubr.bf16.gmra.mrb[0].mxu0 %v73
  %v117 = vpop.f32.mrb[0].mxu0
  %v118 = vadd.f32 0.0, %v117
  %v119 = vpop.f32.mrb[0].mxu0
  %v120 = vpop.f32.mrb[0].mxu0
  %v121 = vadd.f32 0.0, %v120
  %v122 = vpop.f32.mrb[0].mxu0
  %123 = vdwg.mxu0
  %v124 = vld [vmem:[%s4] sm:$0x1]
  %v126 = vlaneseq
  %v127 = vshrl.u32 %v126, 7
  %v128 = vsub.s32 0, %v127
  %v129 = vrot.slane %v124, %v128
  %v131 = vmul.f32 %v110, %v129
  %v132 = vmul.f32 %v113, %v129
  %v133 = vmul.f32 %v118, %v129
  %v134 = vmul.f32 %v121, %v129
  %v135 = vld [vmem:[%s5] sm:$0x1]
  %v137 = vlaneseq
  %v138 = vshrl.u32 %v137, 7
  %v139 = vsub.s32 0, %v138
  %v140 = vrot.slane %v135, %v139
  %v142 = vadd.f32 %v131, %v140
  %v143 = vadd.f32 %v132, %v140
  %v144 = vadd.f32 %v133, %v140
  %v145 = vadd.f32 %v134, %v140
  %v146 = vmax.f32 %v142, 0.0
  %v147 = vmax.f32 %v143, 0.0
  %v148 = vmax.f32 %v144, 0.0
  %v149 = vmax.f32 %v145, 0.0
  %v150 = vpack.c.bf16 %v147, %v146
  %v151 = vpack.c.bf16 %v149, %v148
  %v154 = vunpack.c.l.b16 %v150
  %v155 = vunpack.c.h.b16 %v150
  %v156 = vunpack.c.l.b16 %v151
  %v157 = vunpack.c.h.b16 %v151
  %v158 = vpack.c.b16 %v154, %v154
  %v159 = vpack.c.b16 %v155, %v155
  %v160 = vpack.c.b16 %v156, %v156
  %v161 = vpack.c.b16 %v157, %v157
  %vm166 = vcmask 257024
  %167 = vst.msk [vmem:[%s6] sm:$0xf] %vm166, %v158
  %168 = vst.msk [vmem:[%s6 + $0x4] sm:$0xf] %vm166, %v159
  %169 = vst.msk [vmem:[%s6 + $0x8] sm:$0xf] %vm166, %v160
  %170 = vst.msk [vmem:[%s6 + $0xc] sm:$0xf] %vm166, %v161
  // Predicated region
  $region26: #{pneumonia_severity_net.21} parent=0 // pred_check
    _
  $region27: #{pneumonia_severity_net.21} parent=0 // pred_check_branch
    %172 = sbr.rel (0) target = $region29
  $region28: #{pneumonia_severity_net.21} parent=0 // pred_region
    _
  $region29: #{pneumonia_severity_net.21} parent=0 // pred_fallthru
    _
  // Predicated region
  $region30: #{pneumonia_severity_net.21} parent=0 // pred_check
    _
  $region31: #{pneumonia_severity_net.21} parent=0 // pred_check_branch
    %174 = sbr.rel (0) target = $region33
  $region32: #{pneumonia_severity_net.21} parent=0 // pred_region
    _
  $region33: #{pneumonia_severity_net.21} parent=0 // pred_fallthru
    _

// kernel: pneumonia_severity_net.23
$region0: #{pneumonia_severity_net.23}
  #allocation0 [shape = 'u32[]', space=smem, size = 0x4, offset = 0x4, fixed_abs, tag = 'smem constant byte address 0x4 - core index']
  #allocation1 [shape = 'u32[144,128]{1,0:T(1,128)}', space=vmem, size = 0x12000, scoped, tag = 'internal scratch']
  %s0 = inlined_call_operand.vmem [shape: bf16[32,24], index: 0, kind: input, shape index: {}]
  %s1 = inlined_call_operand.vmem [shape: bf16[24,32], index: 1, kind: input, shape index: {}]
  %s2 = inlined_call_operand.vmem [shape: f32[1,24], index: 2, kind: input, shape index: {}]
  %s3 = inlined_call_operand.vmem [shape: f32[1,24], index: 3, kind: input, shape index: {}]
  %s4 = inlined_call_operand.vmem [shape: f32[1,32], index: 4, kind: input, shape index: {}]
  %s5 = inlined_call_operand.vmem [shape: f32[1,32], index: 5, kind: input, shape index: {}]
  %s6 = inlined_call_operand.vmem [shape: bf16[32,32], index: 6, kind: output, shape index: {}]
  %s7 = sld [smem:[#allocation0]]
  $region34: #{pneumonia_severity_net.23} parent=0
    _
  %s9 = ssub.s32 1, %s7
  %s10 = scalar_select 0, %s9, %s7
  // Predicated region
  $region2: #{pneumonia_severity_net.23} parent=0 // pred_check
    _
  $region3: #{pneumonia_severity_net.23} parent=0 // pred_check_branch
    %12 = sbr.rel (0) target = $region5
  $region4: #{pneumonia_severity_net.23} parent=0 // pred_region
    _
  $region5: #{pneumonia_severity_net.23} parent=0 // pred_fallthru
    _
  // Predicated region
  $region6: #{pneumonia_severity_net.23} parent=0 // pred_check
    _
  $region7: #{pneumonia_severity_net.23} parent=0 // pred_check_branch
    %14 = sbr.rel (0) target = $region9
  $region8: #{pneumonia_severity_net.23} parent=0 // pred_region
    _
  $region9: #{pneumonia_severity_net.23} parent=0 // pred_fallthru
    _
  // Predicated region
  $region10: #{pneumonia_severity_net.23} parent=0 // pred_check
    _
  $region11: #{pneumonia_severity_net.23} parent=0 // pred_check_branch
    %16 = sbr.rel (0) target = $region13
  $region12: #{pneumonia_severity_net.23} parent=0 // pred_region
    _
  $region13: #{pneumonia_severity_net.23} parent=0 // pred_fallthru
    _
  // Predicated region
  $region14: #{pneumonia_severity_net.23} parent=0 // pred_check
    _
  $region15: #{pneumonia_severity_net.23} parent=0 // pred_check_branch
    %18 = sbr.rel (0) target = $region17
  $region16: #{pneumonia_severity_net.23} parent=0 // pred_region
    _
  $region17: #{pneumonia_severity_net.23} parent=0 // pred_fallthru
    _
  // Predicated region
  $region18: #{pneumonia_severity_net.23} parent=0 // pred_check
    _
  $region19: #{pneumonia_severity_net.23} parent=0 // pred_check_branch
    %20 = sbr.rel (0) target = $region21
  $region20: #{pneumonia_severity_net.23} parent=0 // pred_region
    _
  $region21: #{pneumonia_severity_net.23} parent=0 // pred_fallthru
    _
  // Predicated region
  $region22: #{pneumonia_severity_net.23} parent=0 // pred_check
    _
  $region23: #{pneumonia_severity_net.23} parent=0 // pred_check_branch
    %22 = sbr.rel (0) target = $region25
  $region24: #{pneumonia_severity_net.23} parent=0 // pred_region
    _
  $region25: #{pneumonia_severity_net.23} parent=0 // pred_fallthru
    _
  %v24 = vld [vmem:[%s2] sm:$0x1]
  %v25 = vld [vmem:[%s0] sm:$0xf]
  %v26 = vld [vmem:[%s0 + $0x4] sm:$0xf]
  %v27 = vld [vmem:[%s0 + $0x8] sm:$0xf]
  %v28 = vld [vmem:[%s0 + $0xc] sm:$0xf]
  %v29 = vunpack.c.l.bf16 %v25
  %v30 = vunpack.c.l.bf16 %v26
  %v31 = vunpack.c.l.bf16 %v27
  %v32 = vunpack.c.l.bf16 %v28
  %v34 = vlaneseq
  %v35 = vshrl.u32 %v34, 7
  %v36 = vsub.s32 0, %v35
  %v37 = vrot.slane %v24, %v36
  %v39 = vmul.f32 %v37, %v29
  %v40 = vmul.f32 %v37, %v30
  %v41 = vmul.f32 %v37, %v31
  %v42 = vmul.f32 %v37, %v32
  %v43 = vld [vmem:[%s3] sm:$0x1]
  %v45 = vlaneseq
  %v46 = vshrl.u32 %v45, 7
  %v47 = vsub.s32 0, %v46
  %v48 = vrot.slane %v43, %v47
  %v50 = vadd.f32 %v39, %v48
  %v51 = vadd.f32 %v40, %v48
  %v52 = vadd.f32 %v41, %v48
  %v53 = vadd.f32 %v42, %v48
  %v54 = vmax.f32 %v50, 0.0
  %v55 = vmax.f32 %v51, 0.0
  %v56 = vmax.f32 %v52, 0.0
  %v57 = vmax.f32 %v53, 0.0
  %v58 = vpack.c.bf16 %v55, %v54
  %v59 = vpack.c.bf16 %v57, %v56
  %v60 = vld [vmem:[%s1] sm:$0xf]
  %v61 = vld [vmem:[%s1 + $0x4] sm:$0xf]
  %v62 = vld [vmem:[%s1 + $0x8] sm:$0xf]
  %v66 = vunpack.c.l.b16 %v60
  %v67 = vunpack.c.l.b16 %v61
  %v68 = vunpack.c.l.b16 %v62
  %v69 = vpack.c.b16 %v67, %v66
  %v70 = vpack.c.b16 %v68, %v68
  %vm72 = vcmask 195584
  %v74 = vsel %vm72, %v58, 0
  %v77 = vsel %vm72, %v59, 0
  %vm79 = vcmask 1043456
  %v81 = vsel %vm79, %v70, 0
  %83 = vmatprep.subr.bf16.mxu0 0
  %84 = vmatpush1.bf16.msra.mxu0 %v69
  %85 = vmatprep.subr.bf16.mxu0 0
  %86 = vmatpush1.bf16.msra.mxu0 %v81
  %87 = vmatprep.subr.bf16.mxu0 0
  %88 = vmatpush1.bf16.msra.mxu0 0
  %89 = vmatprep.subr.bf16.mxu0 0
  %90 = vmatpush1.bf16.msra.mxu0 0
  %91 = vmatprep.subr.bf16.mxu0 0
  %92 = vmatpush1.bf16.msra.mxu0 0
  %93 = vmatprep.subr.bf16.mxu0 0
  %94 = vmatpush1.bf16.msra.mxu0 0
  %95 = vmatprep.subr.bf16.mxu0 0
  %96 = vmatpush1.bf16.msra.mxu0 0
  %97 = vmatprep.subr.bf16.mxu0 0
  %98 = vmatpush1.bf16.msra.mxu0 0
  %99 = vmatprep.subr.bf16.mxu0 0
  %100 = vmatpush1.bf16.msra.mxu0 0
  %101 = vmatprep.subr.bf16.mxu0 0
  %102 = vmatpush1.bf16.msra.mxu0 0
  %103 = vmatprep.subr.bf16.mxu0 0
  %104 = vmatpush1.bf16.msra.mxu0 0
  %105 = vmatprep.subr.bf16.mxu0 0
  %106 = vmatpush1.bf16.msra.mxu0 0
  %107 = vmatprep.subr.bf16.mxu0 0
  %108 = vmatpush1.bf16.msra.mxu0 0
  %109 = vmatprep.subr.bf16.mxu0 0
  %110 = vmatpush1.bf16.msra.mxu0 0
  %111 = vmatprep.subr.bf16.mxu0 0
  %112 = vmatpush1.bf16.msra.mxu0 0
  %113 = vmatprep.subr.bf16.mxu0 0
  %114 = vmatpush1.bf16.msra.mxu0 0
  %115 = vmatprep.mubr.bf16.mxu0 0
  %116 = vmatmul.mubr.bf16.gmra.mrb[0].mxu0 %v74
  %v117 = vpop.f32.mrb[0].mxu0
  %v118 = vadd.f32 0.0, %v117
  %v119 = vpop.f32.mrb[0].mxu0
  %v120 = vpop.f32.mrb[0].mxu0
  %v121 = vadd.f32 0.0, %v120
  %v122 = vpop.f32.mrb[0].mxu0
  %123 = vmatprep.mubr.bf16.mxu0 0
  %124 = vmatmul.mubr.bf16.gmra.mrb[0].mxu0 %v77
  %v125 = vpop.f32.mrb[0].mxu0
  %v126 = vadd.f32 0.0, %v125
  %v127 = vpop.f32.mrb[0].mxu0
  %v128 = vpop.f32.mrb[0].mxu0
  %v129 = vadd.f32 0.0, %v128
  %v130 = vpop.f32.mrb[0].mxu0
  %131 = vdwg.mxu0
  %v132 = vld [vmem:[%s4] sm:$0x1]
  %v134 = vlaneseq
  %v135 = vshrl.u32 %v134, 7
  %v136 = vsub.s32 0, %v135
  %v137 = vrot.slane %v132, %v136
  %v139 = vmul.f32 %v118, %v137
  %v140 = vmul.f32 %v121, %v137
  %v141 = vmul.f32 %v126, %v137
  %v142 = vmul.f32 %v129, %v137
  %v143 = vld [vmem:[%s5] sm:$0x1]
  %v145 = vlaneseq
  %v146 = vshrl.u32 %v145, 7
  %v147 = vsub.s32 0, %v146
  %v148 = vrot.slane %v143, %v147
  %v150 = vadd.f32 %v139, %v148
  %v151 = vadd.f32 %v140, %v148
  %v152 = vadd.f32 %v141, %v148
  %v153 = vadd.f32 %v142, %v148
  %v154 = vmax.f32 %v150, 0.0
  %v155 = vmax.f32 %v151, 0.0
  %v156 = vmax.f32 %v152, 0.0
  %v157 = vmax.f32 %v153, 0.0
  %v158 = vpack.c.bf16 %v155, %v154
  %v159 = vpack.c.bf16 %v157, %v156
  %v162 = vunpack.c.l.b16 %v158
  %v163 = vunpack.c.h.b16 %v158
  %v164 = vunpack.c.l.b16 %v159
  %v165 = vunpack.c.h.b16 %v159
  %v166 = vpack.c.b16 %v162, %v162
  %v167 = vpack.c.b16 %v163, %v163
  %v168 = vpack.c.b16 %v164, %v164
  %v169 = vpack.c.b16 %v165, %v165
  %vm174 = vcmask 257024
  %175 = vst.msk [vmem:[%s6] sm:$0xf] %vm174, %v166
  %176 = vst.msk [vmem:[%s6 + $0x4] sm:$0xf] %vm174, %v167
  %177 = vst.msk [vmem:[%s6 + $0x8] sm:$0xf] %vm174, %v168
  %178 = vst.msk [vmem:[%s6 + $0xc] sm:$0xf] %vm174, %v169
  // Predicated region
  $region26: #{pneumonia_severity_net.23} parent=0 // pred_check
    _
  $region27: #{pneumonia_severity_net.23} parent=0 // pred_check_branch
    %180 = sbr.rel (0) target = $region29
  $region28: #{pneumonia_severity_net.23} parent=0 // pred_region
    _
  $region29: #{pneumonia_severity_net.23} parent=0 // pred_fallthru
    _
  // Predicated region
  $region30: #{pneumonia_severity_net.23} parent=0 // pred_check
    _
  $region31: #{pneumonia_severity_net.23} parent=0 // pred_check_branch
    %182 = sbr.rel (0) target = $region33
  $region32: #{pneumonia_severity_net.23} parent=0 // pred_region
    _
  $region33: #{pneumonia_severity_net.23} parent=0 // pred_fallthru
    _

// kernel: pneumonia_severity_net.22
$region0: #{pneumonia_severity_net.22}
  #allocation0 [shape = 'u32[]', space=smem, size = 0x4, offset = 0x4, fixed_abs, tag = 'smem constant byte address 0x4 - core index']
  #allocation1 [shape = 'u32[144,128]{1,0:T(1,128)}', space=vmem, size = 0x12000, scoped, tag = 'internal scratch']
  %s0 = inlined_call_operand.vmem [shape: bf16[32,288], index: 0, kind: input, shape index: {}]
  %s1 = inlined_call_operand.vmem [shape: bf16[288,8], index: 1, kind: input, shape index: {}]
  %s2 = inlined_call_operand.vmem [shape: bf16[32,8], index: 2, kind: output, shape index: {}]
  %s3 = sld [smem:[#allocation0]]
  $region18: #{pneumonia_severity_net.22} parent=0
    _
  %s5 = ssub.s32 1, %s3
  %s6 = scalar_select 0, %s5, %s3
  // Predicated region
  $region2: #{pneumonia_severity_net.22} parent=0 // pred_check
    _
  $region3: #{pneumonia_severity_net.22} parent=0 // pred_check_branch
    %8 = sbr.rel (0) target = $region5
  $region4: #{pneumonia_severity_net.22} parent=0 // pred_region
    _
  $region5: #{pneumonia_severity_net.22} parent=0 // pred_fallthru
    _
  // Predicated region
  $region6: #{pneumonia_severity_net.22} parent=0 // pred_check
    _
  $region7: #{pneumonia_severity_net.22} parent=0 // pred_check_branch
    %10 = sbr.rel (0) target = $region9
  $region8: #{pneumonia_severity_net.22} parent=0 // pred_region
    _
  $region9: #{pneumonia_severity_net.22} parent=0 // pred_fallthru
    _
  %v12 = vld [vmem:[%s0] sm:$0xff]
  %v13 = vld [vmem:[%s0 + $0x8] sm:$0xf]
  %v14 = vld [vmem:[%s0 + $0xc] sm:$0xff]
  %v15 = vld [vmem:[%s0 + $0x14] sm:$0xf]
  %v16 = vld [vmem:[%s0 + $0x18] sm:$0xff]
  %v17 = vld [vmem:[%s0 + $0x20] sm:$0xf]
  %v18 = vld [vmem:[%s0 + $0x24] sm:$0xff]
  %v19 = vld [vmem:[%s0 + $0x2c] sm:$0xf]
  %v20 = vld [vmem:[%s1] sm:$0xf]
  %v21 = vld [vmem:[%s1 + $0x4] sm:$0xf]
  %v22 = vld [vmem:[%s1 + $0x8] sm:$0xf]
  %v23 = vld [vmem:[%s1 + $0xc] sm:$0xf]
  %v24 = vld [vmem:[%s1 + $0x10] sm:$0xf]
  %v25 = vld [vmem:[%s1 + $0x14] sm:$0xf]
  %v26 = vld [vmem:[%s1 + $0x18] sm:$0xf]
  %v27 = vld [vmem:[%s1 + $0x1c] sm:$0xf]
  %v28 = vld [vmem:[%s1 + $0x20] sm:$0xf]
  %v29 = vld [vmem:[%s1 + $0x24] sm:$0xf]
  %v30 = vld [vmem:[%s1 + $0x28] sm:$0xf]
  %v31 = vld [vmem:[%s1 + $0x2c] sm:$0xf]
  %v32 = vld [vmem:[%s1 + $0x30] sm:$0xf]
  %v33 = vld [vmem:[%s1 + $0x34] sm:$0xf]
  %v34 = vld [vmem:[%s1 + $0x38] sm:$0xf]
  %v35 = vld [vmem:[%s1 + $0x3c] sm:$0xf]
  %v36 = vld [vmem:[%s1 + $0x40] sm:$0xf]
  %v37 = vld [vmem:[%s1 + $0x44] sm:$0xf]
  %v38 = vld [vmem:[%s1 + $0x48] sm:$0xf]
  %v39 = vld [vmem:[%s1 + $0x4c] sm:$0xf]
  %v40 = vld [vmem:[%s1 + $0x50] sm:$0xf]
  %v41 = vld [vmem:[%s1 + $0x54] sm:$0xf]
  %v42 = vld [vmem:[%s1 + $0x58] sm:$0xf]
  %v43 = vld [vmem:[%s1 + $0x5c] sm:$0xf]
  %v44 = vld [vmem:[%s1 + $0x60] sm:$0xf]
  %v45 = vld [vmem:[%s1 + $0x64] sm:$0xf]
  %v46 = vld [vmem:[%s1 + $0x68] sm:$0xf]
  %v47 = vld [vmem:[%s1 + $0x6c] sm:$0xf]
  %v48 = vld [vmem:[%s1 + $0x70] sm:$0xf]
  %v49 = vld [vmem:[%s1 + $0x74] sm:$0xf]
  %v50 = vld [vmem:[%s1 + $0x78] sm:$0xf]
  %v51 = vld [vmem:[%s1 + $0x7c] sm:$0xf]
  %v52 = vld [vmem:[%s1 + $0x80] sm:$0xf]
  %v53 = vld [vmem:[%s1 + $0x84] sm:$0xf]
  %v54 = vld [vmem:[%s1 + $0x88] sm:$0xf]
  %v55 = vld [vmem:[%s1 + $0x8c] sm:$0xf]
  %v64 = vunpack.c.l.b16 %v12
  %v65 = vunpack.c.h.b16 %v12
  %v66 = vunpack.c.l.b16 %v13
  %v67 = vunpack.c.l.b16 %v14
  %v68 = vunpack.c.h.b16 %v14
  %v69 = vunpack.c.l.b16 %v15
  %v70 = vunpack.c.l.b16 %v16
  %v71 = vunpack.c.h.b16 %v16
  %v72 = vunpack.c.l.b16 %v17
  %v73 = vunpack.c.l.b16 %v18
  %v74 = vunpack.c.h.b16 %v18
  %v75 = vunpack.c.l.b16 %v19
  %v76 = vpack.c.b16 %v67, %v64
  %v77 = vpack.c.b16 %v68, %v65
  %v78 = vpack.c.b16 %v69, %v66
  %v79 = vpack.c.b16 %v73, %v70
  %v80 = vpack.c.b16 %v74, %v71
  %v81 = vpack.c.b16 %v75, %v72
  %v122 = vunpack.c.l.b16 %v20
  %v123 = vunpack.c.l.b16 %v21
  %v124 = vunpack.c.l.b16 %v22
  %v125 = vunpack.c.l.b16 %v23
  %v126 = vunpack.c.l.b16 %v24
  %v127 = vunpack.c.l.b16 %v25
  %v128 = vunpack.c.l.b16 %v26
  %v129 = vunpack.c.l.b16 %v27
  %v130 = vunpack.c.l.b16 %v28
  %v131 = vunpack.c.l.b16 %v29
  %v132 = vunpack.c.l.b16 %v30
  %v133 = vunpack.c.l.b16 %v31
  %v134 = vunpack.c.l.b16 %v32
  %v135 = vunpack.c.l.b16 %v33
  %v136 = vunpack.c.l.b16 %v34
  %v137 = vunpack.c.l.b16 %v35
  %v138 = vunpack.c.l.b16 %v36
  %v139 = vunpack.c.l.b16 %v37
  %v140 = vunpack.c.l.b16 %v38
  %v141 = vunpack.c.l.b16 %v39
  %v142 = vunpack.c.l.b16 %v40
  %v143 = vunpack.c.l.b16 %v41
  %v144 = vunpack.c.l.b16 %v42
  %v145 = vunpack.c.l.b16 %v43
  %v146 = vunpack.c.l.b16 %v44
  %v147 = vunpack.c.l.b16 %v45
  %v148 = vunpack.c.l.b16 %v46
  %v149 = vunpack.c.l.b16 %v47
  %v150 = vunpack.c.l.b16 %v48
  %v151 = vunpack.c.l.b16 %v49
  %v152 = vunpack.c.l.b16 %v50
  %v153 = vunpack.c.l.b16 %v51
  %v154 = vunpack.c.l.b16 %v52
  %v155 = vunpack.c.l.b16 %v53
  %v156 = vunpack.c.l.b16 %v54
  %v157 = vunpack.c.l.b16 %v55
  %v158 = vpack.c.b16 %v123, %v122
  %v159 = vpack.c.b16 %v125, %v124
  %v160 = vpack.c.b16 %v127, %v126
  %v161 = vpack.c.b16 %v129, %v128
  %v162 = vpack.c.b16 %v131, %v130
  %v163 = vpack.c.b16 %v133, %v132
  %v164 = vpack.c.b16 %v135, %v134
  %v165 = vpack.c.b16 %v137, %v136
  %v166 = vpack.c.b16 %v139, %v138
  %v167 = vpack.c.b16 %v141, %v140
  %v168 = vpack.c.b16 %v143, %v142
  %v169 = vpack.c.b16 %v145, %v144
  %v170 = vpack.c.b16 %v147, %v146
  %v171 = vpack.c.b16 %v149, %v148
  %v172 = vpack.c.b16 %v151, %v150
  %v173 = vpack.c.b16 %v153, %v152
  %v174 = vpack.c.b16 %v155, %v154
  %v175 = vpack.c.b16 %v157, %v156
  %vm194 = vcmask 261120
  %v196 = vsel %vm194, %v78, 0
  %v199 = vsel %vm194, %v81, 0
  %201 = vmatprep.subr.bf16.mxu0 0
  %202 = vmatpush1.bf16.msra.mxu0 %v158
  %203 = vmatprep.subr.bf16.mxu0 0
  %204 = vmatpush1.bf16.msra.mxu0 %v159
  %205 = vmatprep.subr.bf16.mxu0 0
  %206 = vmatpush1.bf16.msra.mxu0 %v160
  %207 = vmatprep.subr.bf16.mxu0 0
  %208 = vmatpush1.bf16.msra.mxu0 %v161
  %209 = vmatprep.subr.bf16.mxu0 0
  %210 = vmatpush1.bf16.msra.mxu0 %v162
  %211 = vmatprep.subr.bf16.mxu0 0
  %212 = vmatpush1.bf16.msra.mxu0 %v163
  %213 = vmatprep.subr.bf16.mxu0 0
  %214 = vmatpush1.bf16.msra.mxu0 %v164
  %215 = vmatprep.subr.bf16.mxu0 0
  %216 = vmatpush1.bf16.msra.mxu0 %v165
  %217 = vmatprep.subr.bf16.mxu0 0
  %218 = vmatpush1.bf16.msra.mxu0 %v166
  %219 = vmatprep.subr.bf16.mxu0 0
  %220 = vmatpush1.bf16.msra.mxu0 %v167
  %221 = vmatprep.subr.bf16.mxu0 0
  %222 = vmatpush1.bf16.msra.mxu0 %v168
  %223 = vmatprep.subr.bf16.mxu0 0
  %224 = vmatpush1.bf16.msra.mxu0 %v169
  %225 = vmatprep.subr.bf16.mxu0 0
  %226 = vmatpush1.bf16.msra.mxu0 %v170
  %227 = vmatprep.subr.bf16.mxu0 0
  %228 = vmatpush1.bf16.msra.mxu0 %v171
  %229 = vmatprep.subr.bf16.mxu0 0
  %230 = vmatpush1.bf16.msra.mxu0 %v172
  %231 = vmatprep.subr.bf16.mxu0 0
  %232 = vmatpush1.bf16.msra.mxu0 %v173
  %233 = vmatprep.mubr.bf16.mxu0 %v77
  %234 = vmatmul.mubr.bf16.gmra.mrb[0].mxu0 %v76
  %v235 = vpop.f32.mrb[0].mxu0
  %v236 = vadd.f32 0.0, %v235
  %v237 = vpop.f32.mrb[0].mxu0
  %v238 = vpop.f32.mrb[0].mxu0
  %v239 = vadd.f32 0.0, %v238
  %v240 = vpop.f32.mrb[0].mxu0
  %241 = vmatprep.mubr.bf16.mxu0 %v80
  %242 = vmatmul.mubr.bf16.gmra.mrb[0].mxu0 %v79
  %v243 = vpop.f32.mrb[0].mxu0
  %v244 = vadd.f32 0.0, %v243
  %v245 = vpop.f32.mrb[0].mxu0
  %v246 = vpop.f32.mrb[0].mxu0
  %v247 = vadd.f32 0.0, %v246
  %v248 = vpop.f32.mrb[0].mxu0
  %249 = vdwg.mxu0
  %250 = vmatprep.subr.bf16.mxu0 0
  %251 = vmatpush1.bf16.msra.mxu0 %v174
  %252 = vmatprep.subr.bf16.mxu0 0
  %253 = vmatpush1.bf16.msra.mxu0 %v175
  %254 = vmatprep.subr.bf16.mxu0 0
  %255 = vmatpush1.bf16.msra.mxu0 0
  %256 = vmatprep.subr.bf16.mxu0 0
  %257 = vmatpush1.bf16.msra.mxu0 0
  %258 = vmatprep.subr.bf16.mxu0 0
  %259 = vmatpush1.bf16.msra.mxu0 0
  %260 = vmatprep.subr.bf16.mxu0 0
  %261 = vmatpush1.bf16.msra.mxu0 0
  %262 = vmatprep.subr.bf16.mxu0 0
  %263 = vmatpush1.bf16.msra.mxu0 0
  %264 = vmatprep.subr.bf16.mxu0 0
  %265 = vmatpush1.bf16.msra.mxu0 0
  %266 = vmatprep.subr.bf16.mxu0 0
  %267 = vmatpush1.bf16.msra.mxu0 0
  %268 = vmatprep.subr.bf16.mxu0 0
  %269 = vmatpush1.bf16.msra.mxu0 0
  %270 = vmatprep.subr.bf16.mxu0 0
  %271 = vmatpush1.bf16.msra.mxu0 0
  %272 = vmatprep.subr.bf16.mxu0 0
  %273 = vmatpush1.bf16.msra.mxu0 0
  %274 = vmatprep.subr.bf16.mxu0 0
  %275 = vmatpush1.bf16.msra.mxu0 0
  %276 = vmatprep.subr.bf16.mxu0 0
  %277 = vmatpush1.bf16.msra.mxu0 0
  %278 = vmatprep.subr.bf16.mxu0 0
  %279 = vmatpush1.bf16.msra.mxu0 0
  %280 = vmatprep.subr.bf16.mxu0 0
  %281 = vmatpush1.bf16.msra.mxu0 0
  %282 = vmatprep.mubr.bf16.mxu0 0
  %283 = vmatmul.mubr.bf16.gmra.mrb[0].mxu0 %v196
  %v284 = vpop.f32.mrb[0].mxu0
  %v285 = vadd.f32 %v236, %v284
  %v286 = vpop.f32.mrb[0].mxu0
  %v287 = vpop.f32.mrb[0].mxu0
  %v288 = vadd.f32 %v239, %v287
  %v289 = vpop.f32.mrb[0].mxu0
  %290 = vmatprep.mubr.bf16.mxu0 0
  %291 = vmatmul.mubr.bf16.gmra.mrb[0].mxu0 %v199
  %v292 = vpop.f32.mrb[0].mxu0
  %v293 = vadd.f32 %v244, %v292
  %v294 = vpop.f32.mrb[0].mxu0
  %v295 = vpop.f32.mrb[0].mxu0
  %v296 = vadd.f32 %v247, %v295
  %v297 = vpop.f32.mrb[0].mxu0
  %298 = vdwg.mxu0
  %v299 = vpack.c.bf16 %v288, %v285
  %v300 = vpack.c.bf16 %v296, %v293
  %v303 = vunpack.c.l.b16 %v299
  %v304 = vunpack.c.h.b16 %v299
  %v305 = vunpack.c.l.b16 %v300
  %v306 = vunpack.c.h.b16 %v300
  %v307 = vpack.c.b16 %v303, %v303
  %v308 = vpack.c.b16 %v304, %v304
  %v309 = vpack.c.b16 %v305, %v305
  %v310 = vpack.c.b16 %v306, %v306
  %vm315 = vcmask 60416
  %316 = vst.msk [vmem:[%s2] sm:$0xf] %vm315, %v307
  %317 = vst.msk [vmem:[%s2 + $0x4] sm:$0xf] %vm315, %v308
  %318 = vst.msk [vmem:[%s2 + $0x8] sm:$0xf] %vm315, %v309
  %319 = vst.msk [vmem:[%s2 + $0xc] sm:$0xf] %vm315, %v310
  // Predicated region
  $region10: #{pneumonia_severity_net.22} parent=0 // pred_check
    _
  $region11: #{pneumonia_severity_net.22} parent=0 // pred_check_branch
    %321 = sbr.rel (0) target = $region13
  $region12: #{pneumonia_severity_net.22} parent=0 // pred_region
    _
  $region13: #{pneumonia_severity_net.22} parent=0 // pred_fallthru
    _
  // Predicated region
  $region14: #{pneumonia_severity_net.22} parent=0 // pred_check
    _
  $region15: #{pneumonia_severity_net.22} parent=0 // pred_check_branch
    %323 = sbr.rel (0) target = $region17
  $region16: #{pneumonia_severity_net.22} parent=0 // pred_region
    _
  $region17: #{pneumonia_severity_net.22} parent=0 // pred_fallthru
    _

// kernel: pneumonia_severity_net.25
$region0: #{pneumonia_severity_net.25}
  #allocation0 [shape = 'u32[]', space=smem, size = 0x4, offset = 0x4, fixed_abs, tag = 'smem constant byte address 0x4 - core index']
  #allocation1 [shape = 'u32[144,128]{1,0:T(1,128)}', space=vmem, size = 0x12000, scoped, tag = 'internal scratch']
  %s0 = inlined_call_operand.vmem [shape: bf16[2,16,32], index: 0, kind: input, shape index: {}]
  %s1 = inlined_call_operand.vmem [shape: f32[1,32], index: 1, kind: input, shape index: {}]
  %s2 = inlined_call_operand.vmem [shape: f32[1,32], index: 2, kind: input, shape index: {}]
  %s3 = inlined_call_operand.vmem [shape: f32[32,18], index: 3, kind: input, shape index: {}]
  %s4 = inlined_call_operand.vmem [shape: f32[1,18], index: 4, kind: input, shape index: {}]
  %s5 = inlined_call_operand.hbm [shape: f32[2,18], index: 5, kind: output, shape index: {0}]
  %s6 = inlined_call_operand.vmem [shape: f32[1,2], index: 6, kind: output, shape index: {1}]
  %7 = xla_tuple %s5, %s6
  %s8 = sld [smem:[#allocation0]]
  $region38: #{pneumonia_severity_net.25} parent=0
    _
  %s10 = ssub.s32 1, %s8
  %s11 = scalar_select 0, %s10, %s8
  $region1: #{pneumonia_severity_net.25} parent=0
    #allocation2 [shape = 'u8[1024]{0}', space=vmem, size = 0x400, scoped, tag = 'output window, operand 0, single buffered']
    #allocation3 [shape = 's32[1]{0}', space=sflag, size = 0x4, scoped, tag = 'scoped memory for pneumonia_severity_net.25']
    %12 = vsyncpa [#allocation3], 0
    // Predicated region
    $region2: #{pneumonia_severity_net.25} parent=1 // pred_check
      _
    $region3: #{pneumonia_severity_net.25} parent=1 // pred_check_branch
      %14 = sbr.rel (0) target = $region5
    $region4: #{pneumonia_severity_net.25} parent=1 // pred_region
      _
    $region5: #{pneumonia_severity_net.25} parent=1 // pred_fallthru
      _
    // Predicated region
    $region6: #{pneumonia_severity_net.25} parent=1 // pred_check
      _
    $region7: #{pneumonia_severity_net.25} parent=1 // pred_check_branch
      %16 = sbr.rel (0) target = $region9
    $region8: #{pneumonia_severity_net.25} parent=1 // pred_region
      _
    $region9: #{pneumonia_severity_net.25} parent=1 // pred_fallthru
      _
    // Predicated region
    $region10: #{pneumonia_severity_net.25} parent=1 // pred_check
      _
    $region11: #{pneumonia_severity_net.25} parent=1 // pred_check_branch
      %18 = sbr.rel (0) target = $region13
    $region12: #{pneumonia_severity_net.25} parent=1 // pred_region
      _
    $region13: #{pneumonia_severity_net.25} parent=1 // pred_fallthru
      _
    // Predicated region
    $region14: #{pneumonia_severity_net.25} parent=1 // pred_check
      _
    $region15: #{pneumonia_severity_net.25} parent=1 // pred_check_branch
      %20 = sbr.rel (0) target = $region17
    $region16: #{pneumonia_severity_net.25} parent=1 // pred_region
      _
    $region17: #{pneumonia_severity_net.25} parent=1 // pred_fallthru
      _
    // Predicated region
    $region18: #{pneumonia_severity_net.25} parent=1 // pred_check
      _
    $region19: #{pneumonia_severity_net.25} parent=1 // pred_check_branch
      %22 = sbr.rel (0) target = $region21
    $region20: #{pneumonia_severity_net.25} parent=1 // pred_region
      _
    $region21: #{pneumonia_severity_net.25} parent=1 // pred_fallthru
      _
    %v23 = vld [vmem:[%s0] sm:$0xf]
    %v24 = vld [vmem:[%s0 + $0x4] sm:$0xf]
    %v25 = vld [vmem:[%s0 + $0x8] sm:$0xf]
    %v26 = vld [vmem:[%s0 + $0xc] sm:$0xf]
    %v27 = vunpack.c.l.bf16 %v23
    %v28 = vunpack.c.l.bf16 %v24
    %v29 = vunpack.c.l.bf16 %v25
    %v30 = vunpack.c.l.bf16 %v26
    %v31 = vld [vmem:[%s1] sm:$0x1]
    %v33 = vlaneseq
    %v34 = vshrl.u32 %v33, 7
    %v35 = vsub.s32 0, %v34
    %v36 = vrot.slane %v31, %v35
    %v38 = vmul.f32 %v27, %v36
    %v39 = vmul.f32 %v28, %v36
    %v40 = vmul.f32 %v29, %v36
    %v41 = vmul.f32 %v30, %v36
    %v42 = vld [vmem:[%s2] sm:$0x1]
    %v44 = vlaneseq
    %v45 = vshrl.u32 %v44, 7
    %v46 = vsub.s32 0, %v45
    %v47 = vrot.slane %v42, %v46
    %v49 = vadd.f32 %v38, %v47
    %v50 = vadd.f32 %v39, %v47
    %v51 = vadd.f32 %v40, %v47
    %v52 = vadd.f32 %v41, %v47
    %v53 = vmax.f32 %v49, 0.0
    %v54 = vmax.f32 %v50, 0.0
    %v55 = vmax.f32 %v51, 0.0
    %v56 = vmax.f32 %v52, 0.0
    %vm57 = vcmask 261120
    %v58 = vsel %vm57, %v53, 0.0
    %v59 = vsel %vm57, %v54, 0.0
    %v60 = vadd.f32 %v58, %v59
    %v61 = vrot.slane %v60, 4
    %v62 = vadd.f32 %v60, %v61
    %v63 = vrot.slane %v62, 2
    %v64 = vadd.f32 %v62, %v63
    %v65 = vrot.slane %v64, 1
    %v66 = vadd.f32 %v64, %v65
    %v67 = vsel %vm57, %v55, 0.0
    %v68 = vsel %vm57, %v56, 0.0
    %v69 = vadd.f32 %v67, %v68
    %v70 = vrot.slane %v69, 4
    %v71 = vadd.f32 %v69, %v70
    %v72 = vrot.slane %v71, 2
    %v73 = vadd.f32 %v71, %v72
    %v74 = vrot.slane %v73, 1
    %v75 = vadd.f32 %v73, %v74
    %v76 = vrcp.pop 16.0
    %v77 = vmul.f32 %v66, %v76
    %v78 = vmul.f32 %v75, %v76
    %v79 = vld [vmem:[%s3] sm:$0xff]
    %v80 = vld [vmem:[%s3 + $0x8] sm:$0xff]
    %v81 = vld [vmem:[%s3 + $0x10] sm:$0xff]
    %v82 = vld [vmem:[%s3 + $0x18] sm:$0xff]
    %v83 = vld [vmem:[%s4] sm:$0x1]
    %v85 = vlaneseq
    %v86 = vshrl.u32 %v85, 7
    %v87 = vsub.s32 0, %v86
    %v88 = vrot.slane %v83, %v87
    %vm92 = vcmask 1041409
    %v93 = vsel %vm92, %v78, %v77
    %v94 = vsel %vm57, %v93, 0
    %96 = vmatprep.subr.mxu0 0.0
    %97 = vmatpush1.msra.mxu0 %v79
    %98 = vmatprep.subr.mxu0 0.0
    %99 = vmatpush1.msra.mxu0 %v80
    %100 = vmatprep.subr.mxu0 0.0
    %101 = vmatpush1.msra.mxu0 %v81
    %102 = vmatprep.subr.mxu0 0.0
    %103 = vmatpush1.msra.mxu0 %v82
    %104 = vmatprep.subr.mxu0 0.0
    %105 = vmatpush1.msra.mxu0 0.0
    %106 = vmatprep.subr.mxu0 0.0
    %107 = vmatpush1.msra.mxu0 0.0
    %108 = vmatprep.subr.mxu0 0.0
    %109 = vmatpush1.msra.mxu0 0.0
    %110 = vmatprep.subr.mxu0 0.0
    %111 = vmatpush1.msra.mxu0 0.0
    %112 = vmatprep.subr.mxu0 0.0
    %113 = vmatpush1.msra.mxu0 0.0
    %114 = vmatprep.subr.mxu0 0.0
    %115 = vmatpush1.msra.mxu0 0.0
    %116 = vmatprep.subr.mxu0 0.0
    %117 = vmatpush1.msra.mxu0 0.0
    %118 = vmatprep.subr.mxu0 0.0
    %119 = vmatpush1.msra.mxu0 0.0
    %120 = vmatprep.subr.mxu0 0.0
    %121 = vmatpush1.msra.mxu0 0.0
    %122 = vmatprep.subr.mxu0 0.0
    %123 = vmatpush1.msra.mxu0 0.0
    %124 = vmatprep.subr.mxu0 0.0
    %125 = vmatpush1.msra.mxu0 0.0
    %126 = vmatprep.subr.mxu0 0.0
    %127 = vmatpush1.msra.mxu0 0.0
    %128 = vmatprep.subr.mxu0 0.0
    %129 = vmatpush1.msra.mxu0 0.0
    %130 = vmatprep.subr.mxu0 0.0
    %131 = vmatpush1.msra.mxu0 0.0
    %132 = vmatprep.subr.mxu0 0.0
    %133 = vmatpush1.msra.mxu0 0.0
    %134 = vmatprep.subr.mxu0 0.0
    %135 = vmatpush1.msra.mxu0 0.0
    %136 = vmatprep.subr.mxu0 0.0
    %137 = vmatpush1.msra.mxu0 0.0
    %138 = vmatprep.subr.mxu0 0.0
    %139 = vmatpush1.msra.mxu0 0.0
    %140 = vmatprep.subr.mxu0 0.0
    %141 = vmatpush1.msra.mxu0 0.0
    %142 = vmatprep.subr.mxu0 0.0
    %143 = vmatpush1.msra.mxu0 0.0
    %144 = vmatprep.subr.mxu0 0.0
    %145 = vmatpush1.msra.mxu0 0.0
    %146 = vmatprep.subr.mxu0 0.0
    %147 = vmatpush1.msra.mxu0 0.0
    %148 = vmatprep.subr.mxu0 0.0
    %149 = vmatpush1.msra.mxu0 0.0
    %150 = vmatprep.subr.mxu0 0.0
    %151 = vmatpush1.msra.mxu0 0.0
    %152 = vmatprep.subr.mxu0 0.0
    %153 = vmatpush1.msra.mxu0 0.0
    %154 = vmatprep.subr.mxu0 0.0
    %155 = vmatpush1.msra.mxu0 0.0
    %156 = vmatprep.subr.mxu0 0.0
    %157 = vmatpush1.msra.mxu0 0.0
    %158 = vmatprep.subr.mxu0 0.0
    %159 = vmatpush1.msra.mxu0 0.0
    %160 = vmatprep.mubr.f32.mxu0 0.0
    %161 = vmatmul.mubr.f32.gmra.mrb[0].mxu0 %v94
    %v162 = vpop.f32.mrb[0].mxu0
    %v163 = vadd.f32 %v88, %v162
    %v164 = vpop.f32.mrb[0].mxu0
    %165 = vdwg.mxu0
    %vm166 = vcmask 140288
    %167 = vst.msk [vmem:[#allocation2] sm:$0x3] %vm166, %v163
    %v168 = vlaneseq
    %v169 = vand.u32 %v168, 127
    %vm170 = vcmp.eq.s32.totalorder %v169, 16
    %v171 = vsel %vm170, %v163, 0.0
    %vm172 = vcmask 139264
    %v173 = vsel %vm172, %v171, 0.0
    %174 = vadd.xlane.f32.xlu0 %v173
    %v175 = vpop.xlane.xlu0 %174
    %v176 = vmul.f32 %v175, 0.8705248
    %v177 = vadd.f32 %v176, 3.4137437
    %v178 = vmax.f32 %v177, 0.0
    %v179 = vmin.f32 %v178, 8.0
    %v180 = vmul.f32 %v175, 0.5484423
    %v181 = vadd.f32 %v180, 2.5535977
    %v182 = vmax.f32 %v181, 0.0
    %v183 = vmin.f32 %v182, 6.0
    %vm184 = vcmask 7168
    %v185 = vsel %vm184, %v179, %v183
    %vm186 = vcmask 8192
    %187 = vst.msk [vmem:[%s6] sm:$0x1] %vm186, %v185
    // Predicated region
    $region22: #{pneumonia_severity_net.25} parent=1 // pred_check
      _
    $region23: #{pneumonia_severity_net.25} parent=1 // pred_check_branch
      %189 = sbr.rel (0) target = $region25
    $region24: #{pneumonia_severity_net.25} parent=1 // pred_region
      %s191 = ssub.s32 32, 32
      %192 = vsyncadd [#allocation3], %s191
      %s194 = sshll.u32 [#allocation2], 4
      %s195 = int_to_ptr.vmem [resolvable:$true] %s194
      %197 = dma.vmem_to_hbm [thread:$0]  %s195, 32, %s5, [#allocation3]
    $region25: #{pneumonia_severity_net.25} parent=1 // pred_fallthru
      _
    // Predicated region
    $region26: #{pneumonia_severity_net.25} parent=1 // pred_check
      _
    $region27: #{pneumonia_severity_net.25} parent=1 // pred_check_branch
      %199 = sbr.rel (0) target = $region29
    $region28: #{pneumonia_severity_net.25} parent=1 // pred_region
      _
    $region29: #{pneumonia_severity_net.25} parent=1 // pred_fallthru
      _
    // Predicated region
    $region30: #{pneumonia_severity_net.25} parent=1 // pred_check
      _
    $region31: #{pneumonia_severity_net.25} parent=1 // pred_check_branch
      %201 = sbr.rel (0) target = $region33
    $region32: #{pneumonia_severity_net.25} parent=1 // pred_region
      %202 = dma.done [#allocation3], 32
    $region33: #{pneumonia_severity_net.25} parent=1 // pred_fallthru
      _
    // Predicated region
    $region34: #{pneumonia_severity_net.25} parent=1 // pred_check
      _
    $region35: #{pneumonia_severity_net.25} parent=1 // pred_check_branch
      %204 = sbr.rel (0) target = $region37
    $region36: #{pneumonia_severity_net.25} parent=1 // pred_region
      _
    $region37: #{pneumonia_severity_net.25} parent=1 // pred_fallthru
      _
    %205 = vsyncpa [#allocation3], 1

</llo_original>
